<compile_context>
chip_gen: v7x
topology: tpu7x:2x2x1
jax: 0.10.0
libtpu: 0.0.40
codegen_flags: <defaults>
</compile_context>

<pallas_src>
import functools

import jax
import jax.numpy as jnp
from jax.experimental import pallas as pl
from jax.experimental.pallas import tpu as pltpu

EPS = 1e-5


def _round_up(x, m):
    return ((x + m - 1) // m) * m


def _default_vmem_limit():
    """Generation-aware scoped-VMEM budget (v5e/v6e: 128 MiB, v7x: 64 MiB)."""
    cap = 64 * 1024 * 1024
    try:
        info = pltpu.get_tpu_info()
        cap = int(getattr(info, "vmem_capacity_bytes", cap) or cap)
    except Exception:
        pass
    return min((cap * 3) // 4, 100 * 1024 * 1024)


_VMEM_LIMIT = _default_vmem_limit()


def _compiler_params(n_parallel):
    return pltpu.CompilerParams(
        dimension_semantics=("parallel",) * n_parallel,
        vmem_limit_bytes=_VMEM_LIMIT)


def _row_tile(M):
    for t in (512, 256, 128, 64, 32, 16, 8):
        if t <= M and M % t == 0:
            return t
    return min(M, 256)  # non-divisible M: Pallas masks the tail block


def _rowf32(b):
    return b.reshape(1, -1).astype(jnp.float32)


# ---------------------------------------------------------------------------
# Kernels
# ---------------------------------------------------------------------------
def _bottleneck_s1_kernel(x_ref, m0_ref, m2_ref, w1_ref, b1_ref, w2_ref,
                          b2_ref, w3_ref, b3_ref, *rest, proj, H, W, Wm):
    """Whole Bottleneck block (stride 1) for one image, fully fused.

    conv2 is computed as 9 shifted-window matmuls over a flat VMEM slab that
    holds y1 between two Wm-row zero margins; the left/right zero padding is
    emulated by the margins plus two per-row masks (m0 zeroes w==0 rows for
    dx==0 taps, m2 zeroes w==W-1 rows for dx==2 taps).  No padded copy of y1
    ever touches HBM; y1 and y2 stay in VMEM.
    """
    if proj:
        ws_ref, o_ref, slab_ref = rest
    else:
        o_ref, slab_ref = rest
    HW = H * W

    # conv1 (1x1) + folded BN + ReLU  (bf16 MXU operands, f32 accumulation).
    x = x_ref[...]
    y1 = jnp.dot(x, w1_ref[...], preferred_element_type=jnp.float32)
    y1 = jnp.maximum(y1 + b1_ref[...], 0.0).astype(jnp.bfloat16)

    # y1 into a zero-margined flat slab (VMEM scratch only).
    slab_ref[...] = jnp.zeros(slab_ref.shape, slab_ref.dtype)
    slab_ref[Wm:Wm + HW, :] = y1

    # conv2 (3x3, stride 1, pad 1) + folded BN + ReLU.
    m0 = m0_ref[...]
    m2 = m2_ref[...]
    acc = jnp.zeros((HW, w2_ref.shape[-1]), jnp.float32)
    for dy in range(3):
        for dx in range(3):
            off = Wm + (dy - 1) * W + (dx - 1)
            lhs = slab_ref[off:off + HW, :]
            if dx == 0:
                lhs = lhs * m0
            elif dx == 2:
                lhs = lhs * m2
            acc = acc + jnp.dot(lhs, w2_ref[dy * 3 + dx],
                                preferred_element_type=jnp.float32)
    y2 = jnp.maximum(acc + b2_ref[...], 0.0).astype(jnp.bfloat16)

    # conv3 (1x1) + folded BN + shortcut + ReLU, lane-dense bf16 store.
    out = jnp.dot(y2, w3_ref[...], preferred_element_type=jnp.float32)
    out = out + b3_ref[...]
    if proj:
        out = out + jnp.dot(x, ws_ref[...], preferred_element_type=jnp.float32)
    else:
        out = out + x.astype(jnp.float32)
    o_ref[...] = jnp.maximum(out, 0.0).astype(o_ref.dtype)


def _conv2_conv3_proj_kernel(*args, nphase, taps, Lw):
    """Fused conv2(3x3, stride>1)+BN+ReLU -> conv3(1x1)+BN + projection
    shortcut + add + ReLU, over polyphase slabs of the zero-padded y1.

    Works in the 'wide' row domain (PW columns per output row); the PW-Wo junk
    columns are dropped by the caller, so y2 never round-trips through HBM.
    """
    phase_refs = args[:nphase]
    w2_ref, b2_ref, w3_ref, b3_ref, xs_ref, ws_ref, o_ref = args[nphase:]
    acc = jnp.zeros((Lw, w2_ref.shape[-1]), jnp.float32)
    for t, (pi, off) in enumerate(taps):
        acc = acc + jnp.dot(phase_refs[pi][off:off + Lw, :], w2_ref[t],
                            preferred_element_type=jnp.float32)
    y2 = jnp.maximum(acc + b2_ref[...], 0.0).astype(jnp.bfloat16)
    out = jnp.dot(y2, w3_ref[...], preferred_element_type=jnp.float32)
    out = out + b3_ref[...]
    out = out + jnp.dot(xs_ref[...], ws_ref[...],
                        preferred_element_type=jnp.float32)
    o_ref[...] = jnp.maximum(out, 0.0).astype(o_ref.dtype)


def _mm_bias_relu_kernel(x_ref, w_ref, b_ref, o_ref):
    acc = jnp.dot(x_ref[...], w_ref[...], preferred_element_type=jnp.float32)
    o_ref[...] = jnp.maximum(acc + b_ref[...], 0.0).astype(o_ref.dtype)


# ---------------------------------------------------------------------------
# pallas_call wrappers
# ---------------------------------------------------------------------------
def _bottleneck_fused_s1(x, w1, b1, w2, b2, w3, b3t, ws):
    """Stride-1 bottleneck: one fused kernel per image (grid parallel)."""
    N, H, W, Cin = x.shape
    planes = w1.shape[1]
    Ce = w3.shape[1]
    HW = H * W
    Wm = _round_up(W + 2, 8)          # zero-margin rows of the flat y1 slab
    proj = ws is not None

    # Edge-column masks (tiny, computed once in XLA, resident in the kernel).
    wcol = jnp.arange(HW, dtype=jnp.int32) % W
    m0 = (wcol != 0).astype(jnp.bfloat16).reshape(HW, 1)
    m2 = (wcol != W - 1).astype(jnp.bfloat16).reshape(HW, 1)

    args = [x.reshape(N, HW, Cin), m0, m2, w1, _rowf32(b1), w2, _rowf32(b2),
            w3, _rowf32(b3t)]
    in_specs = [
        pl.BlockSpec((None, HW, Cin), lambda n: (n, 0, 0)),
        pl.BlockSpec((HW, 1), lambda n: (0, 0)),
        pl.BlockSpec((HW, 1), lambda n: (0, 0)),
        pl.BlockSpec(w1.shape, lambda n: (0, 0)),
        pl.BlockSpec((1, planes), lambda n: (0, 0)),
        pl.BlockSpec(w2.shape, lambda n: (0, 0, 0)),
        pl.BlockSpec((1, planes), lambda n: (0, 0)),
        pl.BlockSpec(w3.shape, lambda n: (0, 0)),
        pl.BlockSpec((1, Ce), lambda n: (0, 0)),
    ]
    if proj:
        args.append(ws)
        in_specs.append(pl.BlockSpec(ws.shape, lambda n: (0, 0)))

    kernel = functools.partial(_bottleneck_s1_kernel, proj=proj, H=H, W=W,
                               Wm=Wm)
    return pl.pallas_call(
        kernel,
        out_shape=jax.ShapeDtypeStruct((N, HW, Ce), jnp.bfloat16),
        grid_spec=pltpu.PrefetchScalarGridSpec(
            num_scalar_prefetch=0,
            grid=(N,),
            in_specs=in_specs,
            out_specs=pl.BlockSpec((None, HW, Ce), lambda n: (n, 0, 0)),
            scratch_shapes=[pltpu.VMEM((HW + 2 * Wm, planes), jnp.bfloat16)],
        ),
        compiler_params=_compiler_params(1),
    )(*args)


def matmul_bias_relu(x, w, b):
    """Row-tiled 1x1-conv kernel (conv1 of the strided path)."""
    M, K = x.shape
    Nc = w.shape[1]
    tm = _row_tile(M)
    return pl.pallas_call(
        _mm_bias_relu_kernel,
        out_shape=jax.ShapeDtypeStruct((M, Nc), jnp.bfloat16),
        grid_spec=pltpu.PrefetchScalarGridSpec(
            num_scalar_prefetch=0,
            grid=(pl.cdiv(M, tm),),
            in_specs=[pl.BlockSpec((tm, K), lambda i: (i, 0)),
                      pl.BlockSpec((K, Nc), lambda i: (0, 0)),
                      pl.BlockSpec((1, Nc), lambda i: (0, 0))],
            out_specs=pl.BlockSpec((tm, Nc), lambda i: (i, 0)),
        ),
        compiler_params=_compiler_params(1),
    )(x, w, _rowf32(b))


def _bottleneck_strided(x, w1, b1, w2, b2, w3, b3t, ws, stride):
    """Stride>1 bottleneck: conv1 kernel + fused conv2/conv3/shortcut kernel."""
    assert ws is not None, "stride != 1 always has a projection shortcut"
    N, H, W, Cin = x.shape
    planes = w1.shape[1]
    Ce = w3.shape[1]
    s = stride
    Ho = (H + 2 - 3) // s + 1
    Wo = (W + 2 - 3) // s + 1
    E = 2 // s
    PH = Ho + E
    PWr = Wo + E
    PW = _round_up(PWr, 8)

    # conv1 (1x1) + bn1 + relu.
    y1 = matmul_bias_relu(x.reshape(-1, Cin), w1, b1).reshape(N, H, W, planes)

    # Polyphase split of the zero-padded y1 (see TODO at top of file).
    y1p = jnp.pad(y1, ((0, 0), (1, 1), (1, 1), (0, 0)))
    phases = []
    for pa in range(s):
        for pb in range(s):
            ph = y1p[:, pa::s, pb::s, :][:, :PH, :PWr, :]
            ph = jnp.pad(ph, ((0, 0), (0, PH + 1 - ph.shape[1]),
                              (0, PW - ph.shape[2]), (0, 0)))
            phases.append(ph.reshape(N, (PH + 1) * PW, planes))
    taps = tuple(((dy % s) * s + (dx % s), (dy // s) * PW + (dx // s))
                 for dy in range(3) for dx in range(3))

    # Strided shortcut input, widened to the conv2 wide domain (zero junk cols).
    xs = x[:, ::s, ::s, :][:, :Ho, :Wo, :]
    xs = jnp.pad(xs, ((0, 0), (0, 0), (0, PW - Wo), (0, 0)))
    xs = xs.reshape(N, Ho * PW, Cin)

    Lw = Ho * PW
    Lp = (PH + 1) * PW
    nphase = len(phases)
    in_specs = [pl.BlockSpec((None, Lp, planes), lambda n: (n, 0, 0))
                for _ in range(nphase)]
    in_specs += [
        pl.BlockSpec(w2.shape, lambda n: (0, 0, 0)),
        pl.BlockSpec((1, planes), lambda n: (0, 0)),
        pl.BlockSpec(w3.shape, lambda n: (0, 0)),
        pl.BlockSpec((1, Ce), lambda n: (0, 0)),
        pl.BlockSpec((None, Lw, Cin), lambda n: (n, 0, 0)),
        pl.BlockSpec(ws.shape, lambda n: (0, 0)),
    ]
    out_wide = pl.pallas_call(
        functools.partial(_conv2_conv3_proj_kernel, nphase=nphase, taps=taps,
                          Lw=Lw),
        out_shape=jax.ShapeDtypeStruct((N, Lw, Ce), jnp.bfloat16),
        grid_spec=pltpu.PrefetchScalarGridSpec(
            num_scalar_prefetch=0,
            grid=(N,),
            in_specs=in_specs,
            out_specs=pl.BlockSpec((None, Lw, Ce), lambda n: (n, 0, 0)),
        ),
        compiler_params=_compiler_params(1),
    )(*phases, w2, _rowf32(b2), w3, _rowf32(b3t), xs, ws)

    # Drop the PW-Wo junk columns of the wide domain.
    return out_wide.reshape(N, Ho, PW, Ce)[:, :, :Wo, :]


# ---------------------------------------------------------------------------
# Parameter setup (deterministic, synthetic) + BN folding
# ---------------------------------------------------------------------------
def _bn_params(key, c):
    k1, k2, k3, k4 = jax.random.split(key, 4)
    gamma = jax.random.uniform(k1, (c,), jnp.float32, 0.5, 1.5)
    beta = 0.1 * jax.random.normal(k2, (c,), jnp.float32)
    mean = 0.1 * jax.random.normal(k3, (c,), jnp.float32)
    var = jax.random.uniform(k4, (c,), jnp.float32, 0.5, 1.5)
    return (gamma, beta, mean, var)


def fold_bn(gamma, beta, mean, var):
    scale = gamma / jnp.sqrt(var + EPS)
    bias = beta - mean * scale
    return scale, bias


def init_params(key, in_planes, planes, stride, expansion=4):
    ce = expansion * planes
    ks = jax.random.split(key, 8)
    p = {
        "w1": 0.1 * jax.random.normal(ks[0], (planes, in_planes, 1, 1), jnp.float32),
        "bn1": _bn_params(ks[1], planes),
        "w2": 0.1 * jax.random.normal(ks[2], (planes, planes, 3, 3), jnp.float32),
        "bn2": _bn_params(ks[3], planes),
        "w3": 0.1 * jax.random.normal(ks[4], (ce, planes, 1, 1), jnp.float32),
        "bn3": _bn_params(ks[5], ce),
    }
    if stride != 1 or in_planes != ce:
        p["ws"] = 0.1 * jax.random.normal(ks[6], (ce, in_planes, 1, 1), jnp.float32)
        p["bns"] = _bn_params(ks[7], ce)
    return p


# ---------------------------------------------------------------------------
# Bottleneck forward (Pallas hot path; XLA only for layout plumbing)
# ---------------------------------------------------------------------------
def bottleneck_forward(x_nchw, p, stride):
    N, Cin, H, W = x_nchw.shape
    planes = p["w1"].shape[0]
    Ce = p["w3"].shape[0]

    # Layout boundary (hoisted once per network in practice), fused bf16 cast.
    x = jnp.transpose(x_nchw, (0, 2, 3, 1)).astype(jnp.bfloat16)   # NHWC bf16

    s1v, b1 = fold_bn(*p["bn1"])
    s2v, b2 = fold_bn(*p["bn2"])
    s3v, b3 = fold_bn(*p["bn3"])
    w1 = (p["w1"].reshape(planes, Cin).T * s1v[None, :]).astype(jnp.bfloat16)
    w2 = (jnp.transpose(p["w2"], (2, 3, 1, 0)).reshape(9, planes, planes)
          * s2v[None, None, :]).astype(jnp.bfloat16)
    w3 = (p["w3"].reshape(Ce, planes).T * s3v[None, :]).astype(jnp.bfloat16)

    if "ws" in p:
        ssv, bs = fold_bn(*p["bns"])
        ws = (p["ws"].reshape(Ce, Cin).T * ssv[None, :]).astype(jnp.bfloat16)
        b3t = b3 + bs
    else:
        ws = None
        b3t = b3

    if stride == 1:
        out = _bottleneck_fused_s1(x, w1, b1, w2, b2, w3, b3t, ws)
        out = out.reshape(N, H, W, Ce)
    else:
        out = _bottleneck_strided(x, w1, b1, w2, b2, w3, b3t, ws, stride)

    return jnp.transpose(out, (0, 3, 1, 2))             # back to NCHW


# ---------------------------------------------------------------------------
# Pure-JAX reference (NCHW, lax conv, f32) for correctness checking
# ---------------------------------------------------------------------------
def ref_forward(x, p, stride):
    def conv(x, w, st=1, pad=0):
        return jax.lax.conv_general_dilated(
            x, w, (st, st), [(pad, pad), (pad, pad)],
            dimension_numbers=("NCHW", "OIHW", "NCHW"))

    def bn(x, g, b, m, v):
        g, b, m, v = (t[None, :, None, None] for t in (g, b, m, v))
        return (x - m) / jnp.sqrt(v + EPS) * g + b

    out = jax.nn.relu(bn(conv(x, p["w1"]), *p["bn1"]))
    out = jax.nn.relu(bn(conv(out, p["w2"], stride, 1), *p["bn2"]))
    out = bn(conv(out, p["w3"]), *p["bn3"])
    if "ws" in p:
        sc = bn(conv(x, p["ws"], stride), *p["bns"])
    else:
        sc = x
    return jax.nn.relu(out + sc)


if __name__ == "__main__":
    key = jax.random.PRNGKey(0)
    N, H, W = 2, 16, 16
    # (in_planes, planes, stride): projection shortcut at stride 2, identity
    # shortcut at stride 1, projection shortcut at stride 1.
    configs = [(64, 32, 2), (128, 32, 1), (32, 32, 1)]

    fwd = jax.jit(bottleneck_forward, static_argnums=2)

    for idx, (cin, planes, stride) in enumerate(configs):
        kp = jax.random.fold_in(key, idx)
        params = init_params(kp, cin, planes, stride)
        x = jax.random.normal(jax.random.fold_in(kp, 123), (N, cin, H, W),
                              jnp.float32)

        out = jax.block_until_ready(fwd(x, params, stride))
        ref = ref_forward(x, params, stride)
        assert out.shape == ref.shape, (out.shape, ref.shape)
        # bf16 MXU operands / bf16 outputs -> relaxed tolerance vs f32 ref.
        err = float(jnp.max(jnp.abs(out - ref)))
        assert jnp.allclose(out, ref, atol=5e-2, rtol=5e-2), err

    print("KERNEL_OK")
</pallas_src>

<mosaic_0001>
module attributes {stable_mosaic.version = 11 : i64} {
  func.func @_mm_bias_relu_kernel(%arg0: i32, %arg1: memref<512x64xbf16, #tpu.memory_space<vmem>>, %arg2: memref<64x32xbf16, #tpu.memory_space<vmem>>, %arg3: memref<1x32xf32, #tpu.memory_space<vmem>>, %arg4: memref<512x32xbf16, #tpu.memory_space<vmem>>) attributes {dimension_semantics = [#tpu.dimension_semantics<parallel>], iteration_bounds = array<i64: 1>, scalar_prefetch = 0 : i64, scratch_operands = 0 : i64, tpu.core_type = #tpu.core_type<tc>, window_params = [{transform_indices = @transform_0, window_bounds = array<i64: 512, 64>}, {pipeline_mode = #tpu.pipeline_mode<synchronous>, transform_indices = @transform_1, window_bounds = array<i64: 64, 32>}, {pipeline_mode = #tpu.pipeline_mode<synchronous>, transform_indices = @transform_2, window_bounds = array<i64: 1, 32>}, {transform_indices = @transform_3, window_bounds = array<i64: 512, 32>}]} {
    %c0 = arith.constant 0 : index
    %c0_0 = arith.constant 0 : index
    %0 = vector.load %arg1[%c0, %c0_0] : memref<512x64xbf16, #tpu.memory_space<vmem>>, vector<512x64xbf16>
    %c0_1 = arith.constant 0 : index
    %c0_2 = arith.constant 0 : index
    %1 = vector.load %arg2[%c0_1, %c0_2] : memref<64x32xbf16, #tpu.memory_space<vmem>>, vector<64x32xbf16>
    %cst = arith.constant dense<0.000000e+00> : vector<512x32xf32>
    %2 = tpu.matmul %0, %1, %cst {dimension_numbers = #tpu.dot_dimension_numbers<[1], [0], [0], [1], [0, 0, 1, 1], [], []>} : vector<512x64xbf16>, vector<64x32xbf16>, vector<512x32xf32> -> vector<512x32xf32>
    %c0_3 = arith.constant 0 : index
    %c0_4 = arith.constant 0 : index
    %3 = vector.load %arg3[%c0_3, %c0_4] : memref<1x32xf32, #tpu.memory_space<vmem>>, vector<1x32xf32>
    %4 = vector.broadcast %3 : vector<1x32xf32> to vector<512x32xf32>
    %5 = arith.addf %2, %4 : vector<512x32xf32>
    %cst_5 = arith.constant 0.000000e+00 : f32
    %6 = vector.broadcast %cst_5 : f32 to vector<512x32xf32>
    %7 = arith.maximumf %5, %6 : vector<512x32xf32>
    %8 = arith.truncf %7 : vector<512x32xf32> to vector<512x32xbf16>
    %c0_6 = arith.constant 0 : index
    %c0_7 = arith.constant 0 : index
    %9 = vector.load %arg4[%c0_6, %c0_7] : memref<512x32xbf16, #tpu.memory_space<vmem>>, vector<512x32xbf16>
    tpu.vector_store %arg4[%c0_6, %c0_7], %8 {strides = array<i32>} : memref<512x32xbf16, #tpu.memory_space<vmem>>, vector<512x32xbf16>,
    return
  }
  func.func @transform_0(%arg0: i32) -> (i32, i32) {
    %c0_i32 = arith.constant 0 : i32
    %c0_i32_0 = arith.constant 0 : i32
    return %arg0, %c0_i32 : i32, i32
  }
  func.func @transform_1(%arg0: i32) -> (i32, i32) {
    %c0_i32 = arith.constant 0 : i32
    %c0_i32_0 = arith.constant 0 : i32
    %c0_i32_1 = arith.constant 0 : i32
    return %c0_i32, %c0_i32_0 : i32, i32
  }
  func.func @transform_2(%arg0: i32) -> (i32, i32) {
    %c0_i32 = arith.constant 0 : i32
    %c0_i32_0 = arith.constant 0 : i32
    %c0_i32_1 = arith.constant 0 : i32
    return %c0_i32, %c0_i32_0 : i32, i32
  }
  func.func @transform_3(%arg0: i32) -> (i32, i32) {
    %c0_i32 = arith.constant 0 : i32
    %c0_i32_0 = arith.constant 0 : i32
    return %arg0, %c0_i32 : i32, i32
  }
}

module attributes {stable_mosaic.version = 11 : i64} {
  func.func @_conv2_conv3_proj_kernel(%arg0: i32, %arg1: memref<1x160x32xbf16, #tpu.memory_space<vmem>>, %arg2: memref<1x160x32xbf16, #tpu.memory_space<vmem>>, %arg3: memref<1x160x32xbf16, #tpu.memory_space<vmem>>, %arg4: memref<1x160x32xbf16, #tpu.memory_space<vmem>>, %arg5: memref<9x32x32xbf16, #tpu.memory_space<vmem>>, %arg6: memref<1x32xf32, #tpu.memory_space<vmem>>, %arg7: memref<32x128xbf16, #tpu.memory_space<vmem>>, %arg8: memref<1x128xf32, #tpu.memory_space<vmem>>, %arg9: memref<1x128x64xbf16, #tpu.memory_space<vmem>>, %arg10: memref<64x128xbf16, #tpu.memory_space<vmem>>, %arg11: memref<1x128x128xbf16, #tpu.memory_space<vmem>>) attributes {dimension_semantics = [#tpu.dimension_semantics<parallel>], iteration_bounds = array<i64: 2>, scalar_prefetch = 0 : i64, scratch_operands = 0 : i64, tpu.core_type = #tpu.core_type<tc>, window_params = [{transform_indices = @transform_0, window_bounds = array<i64: 1, 160, 32>}, {transform_indices = @transform_1, window_bounds = array<i64: 1, 160, 32>}, {transform_indices = @transform_2, window_bounds = array<i64: 1, 160, 32>}, {transform_indices = @transform_3, window_bounds = array<i64: 1, 160, 32>}, {pipeline_mode = #tpu.pipeline_mode<synchronous>, transform_indices = @transform_4, window_bounds = array<i64: 9, 32, 32>}, {pipeline_mode = #tpu.pipeline_mode<synchronous>, transform_indices = @transform_5, window_bounds = array<i64: 1, 32>}, {pipeline_mode = #tpu.pipeline_mode<synchronous>, transform_indices = @transform_6, window_bounds = array<i64: 32, 128>}, {pipeline_mode = #tpu.pipeline_mode<synchronous>, transform_indices = @transform_7, window_bounds = array<i64: 1, 128>}, {transform_indices = @transform_8, window_bounds = array<i64: 1, 128, 64>}, {pipeline_mode = #tpu.pipeline_mode<synchronous>, transform_indices = @transform_9, window_bounds = array<i64: 64, 128>}, {transform_indices = @transform_10, window_bounds = array<i64: 1, 128, 128>}]} {
    %cst = arith.constant 0.000000e+00 : f32
    %0 = vector.broadcast %cst : f32 to vector<128x32xf32>
    %c0 = arith.constant 0 : index
    %c0_0 = arith.constant 0 : index
    %c0_1 = arith.constant 0 : index
    %1 = vector.load %arg1[%c0, %c0_0, %c0_1] : memref<1x160x32xbf16, #tpu.memory_space<vmem>>, vector<1x128x32xbf16>
    %2 = vector.shape_cast %1 : vector<1x128x32xbf16> to vector<128x32xbf16>
    %c0_2 = arith.constant 0 : index
    %c0_3 = arith.constant 0 : index
    %c0_4 = arith.constant 0 : index
    %3 = vector.load %arg5[%c0_2, %c0_3, %c0_4] : memref<9x32x32xbf16, #tpu.memory_space<vmem>>, vector<1x32x32xbf16>
    %4 = vector.shape_cast %3 : vector<1x32x32xbf16> to vector<32x32xbf16>
    %cst_5 = arith.constant dense<0.000000e+00> : vector<128x32xf32>
    %5 = tpu.matmul %2, %4, %cst_5 {dimension_numbers = #tpu.dot_dimension_numbers<[1], [0], [0], [1], [0, 0, 1, 1], [], []>} : vector<128x32xbf16>, vector<32x32xbf16>, vector<128x32xf32> -> vector<128x32xf32>
    %6 = arith.addf %0, %5 : vector<128x32xf32>
    %c0_6 = arith.constant 0 : index
    %c0_7 = arith.constant 0 : index
    %c0_8 = arith.constant 0 : index
    %7 = vector.load %arg2[%c0_6, %c0_7, %c0_8] : memref<1x160x32xbf16, #tpu.memory_space<vmem>>, vector<1x128x32xbf16>
    %8 = vector.shape_cast %7 : vector<1x128x32xbf16> to vector<128x32xbf16>
    %c1 = arith.constant 1 : index
    %c0_9 = arith.constant 0 : index
    %c0_10 = arith.constant 0 : index
    %9 = vector.load %arg5[%c1, %c0_9, %c0_10] : memref<9x32x32xbf16, #tpu.memory_space<vmem>>, vector<1x32x32xbf16>
    %10 = vector.shape_cast %9 : vector<1x32x32xbf16> to vector<32x32xbf16>
    %cst_11 = arith.constant dense<0.000000e+00> : vector<128x32xf32>
    %11 = tpu.matmul %8, %10, %cst_11 {dimension_numbers = #tpu.dot_dimension_numbers<[1], [0], [0], [1], [0, 0, 1, 1], [], []>} : vector<128x32xbf16>, vector<32x32xbf16>, vector<128x32xf32> -> vector<128x32xf32>
    %12 = arith.addf %6, %11 : vector<128x32xf32>
    %c0_12 = arith.constant 0 : index
    %c1_13 = arith.constant 1 : index
    %c0_14 = arith.constant 0 : index
    %13 = vector.load %arg1[%c0_12, %c1_13, %c0_14] : memref<1x160x32xbf16, #tpu.memory_space<vmem>>, vector<1x128x32xbf16>
    %14 = vector.shape_cast %13 : vector<1x128x32xbf16> to vector<128x32xbf16>
    %c2 = arith.constant 2 : index
    %c0_15 = arith.constant 0 : index
    %c0_16 = arith.constant 0 : index
    %15 = vector.load %arg5[%c2, %c0_15, %c0_16] : memref<9x32x32xbf16, #tpu.memory_space<vmem>>, vector<1x32x32xbf16>
    %16 = vector.shape_cast %15 : vector<1x32x32xbf16> to vector<32x32xbf16>
    %cst_17 = arith.constant dense<0.000000e+00> : vector<128x32xf32>
    %17 = tpu.matmul %14, %16, %cst_17 {dimension_numbers = #tpu.dot_dimension_numbers<[1], [0], [0], [1], [0, 0, 1, 1], [], []>} : vector<128x32xbf16>, vector<32x32xbf16>, vector<128x32xf32> -> vector<128x32xf32>
    %18 = arith.addf %12, %17 : vector<128x32xf32>
    %c0_18 = arith.constant 0 : index
    %c0_19 = arith.constant 0 : index
    %c0_20 = arith.constant 0 : index
    %19 = vector.load %arg3[%c0_18, %c0_19, %c0_20] : memref<1x160x32xbf16, #tpu.memory_space<vmem>>, vector<1x128x32xbf16>
    %20 = vector.shape_cast %19 : vector<1x128x32xbf16> to vector<128x32xbf16>
    %c3 = arith.constant 3 : index
    %c0_21 = arith.constant 0 : index
    %c0_22 = arith.constant 0 : index
    %21 = vector.load %arg5[%c3, %c0_21, %c0_22] : memref<9x32x32xbf16, #tpu.memory_space<vmem>>, vector<1x32x32xbf16>
    %22 = vector.shape_cast %21 : vector<1x32x32xbf16> to vector<32x32xbf16>
    %cst_23 = arith.constant dense<0.000000e+00> : vector<128x32xf32>
    %23 = tpu.matmul %20, %22, %cst_23 {dimension_numbers = #tpu.dot_dimension_numbers<[1], [0], [0], [1], [0, 0, 1, 1], [], []>} : vector<128x32xbf16>, vector<32x32xbf16>, vector<128x32xf32> -> vector<128x32xf32>
    %24 = arith.addf %18, %23 : vector<128x32xf32>
    %c0_24 = arith.constant 0 : index
    %c0_25 = arith.constant 0 : index
    %c0_26 = arith.constant 0 : index
    %25 = vector.load %arg4[%c0_24, %c0_25, %c0_26] : memref<1x160x32xbf16, #tpu.memory_space<vmem>>, vector<1x128x32xbf16>
    %26 = vector.shape_cast %25 : vector<1x128x32xbf16> to vector<128x32xbf16>
    %c4 = arith.constant 4 : index
    %c0_27 = arith.constant 0 : index
    %c0_28 = arith.constant 0 : index
    %27 = vector.load %arg5[%c4, %c0_27, %c0_28] : memref<9x32x32xbf16, #tpu.memory_space<vmem>>, vector<1x32x32xbf16>
    %28 = vector.shape_cast %27 : vector<1x32x32xbf16> to vector<32x32xbf16>
    %cst_29 = arith.constant dense<0.000000e+00> : vector<128x32xf32>
    %29 = tpu.matmul %26, %28, %cst_29 {dimension_numbers = #tpu.dot_dimension_numbers<[1], [0], [0], [1], [0, 0, 1, 1], [], []>} : vector<128x32xbf16>, vector<32x32xbf16>, vector<128x32xf32> -> vector<128x32xf32>
    %30 = arith.addf %24, %29 : vector<128x32xf32>
    %c0_30 = arith.constant 0 : index
    %c1_31 = arith.constant 1 : index
    %c0_32 = arith.constant 0 : index
    %31 = vector.load %arg3[%c0_30, %c1_31, %c0_32] : memref<1x160x32xbf16, #tpu.memory_space<vmem>>, vector<1x128x32xbf16>
    %32 = vector.shape_cast %31 : vector<1x128x32xbf16> to vector<128x32xbf16>
    %c5 = arith.constant 5 : index
    %c0_33 = arith.constant 0 : index
    %c0_34 = arith.constant 0 : index
    %33 = vector.load %arg5[%c5, %c0_33, %c0_34] : memref<9x32x32xbf16, #tpu.memory_space<vmem>>, vector<1x32x32xbf16>
    %34 = vector.shape_cast %33 : vector<1x32x32xbf16> to vector<32x32xbf16>
    %cst_35 = arith.constant dense<0.000000e+00> : vector<128x32xf32>
    %35 = tpu.matmul %32, %34, %cst_35 {dimension_numbers = #tpu.dot_dimension_numbers<[1], [0], [0], [1], [0, 0, 1, 1], [], []>} : vector<128x32xbf16>, vector<32x32xbf16>, vector<128x32xf32> -> vector<128x32xf32>
    %36 = arith.addf %30, %35 : vector<128x32xf32>
    %c0_36 = arith.constant 0 : index
    %c16 = arith.constant 16 : index
    %c0_37 = arith.constant 0 : index
    %37 = vector.load %arg1[%c0_36, %c16, %c0_37] : memref<1x160x32xbf16, #tpu.memory_space<vmem>>, vector<1x128x32xbf16>
    %38 = vector.shape_cast %37 : vector<1x128x32xbf16> to vector<128x32xbf16>
    %c6 = arith.constant 6 : index
    %c0_38 = arith.constant 0 : index
    %c0_39 = arith.constant 0 : index
    %39 = vector.load %arg5[%c6, %c0_38, %c0_39] : memref<9x32x32xbf16, #tpu.memory_space<vmem>>, vector<1x32x32xbf16>
    %40 = vector.shape_cast %39 : vector<1x32x32xbf16> to vector<32x32xbf16>
    %cst_40 = arith.constant dense<0.000000e+00> : vector<128x32xf32>
    %41 = tpu.matmul %38, %40, %cst_40 {dimension_numbers = #tpu.dot_dimension_numbers<[1], [0], [0], [1], [0, 0, 1, 1], [], []>} : vector<128x32xbf16>, vector<32x32xbf16>, vector<128x32xf32> -> vector<128x32xf32>
    %42 = arith.addf %36, %41 : vector<128x32xf32>
    %c0_41 = arith.constant 0 : index
    %c16_42 = arith.constant 16 : index
    %c0_43 = arith.constant 0 : index
    %43 = vector.load %arg2[%c0_41, %c16_42, %c0_43] : memref<1x160x32xbf16, #tpu.memory_space<vmem>>, vector<1x128x32xbf16>
    %44 = vector.shape_cast %43 : vector<1x128x32xbf16> to vector<128x32xbf16>
    %c7 = arith.constant 7 : index
    %c0_44 = arith.constant 0 : index
    %c0_45 = arith.constant 0 : index
    %45 = vector.load %arg5[%c7, %c0_44, %c0_45] : memref<9x32x32xbf16, #tpu.memory_space<vmem>>, vector<1x32x32xbf16>
    %46 = vector.shape_cast %45 : vector<1x32x32xbf16> to vector<32x32xbf16>
    %cst_46 = arith.constant dense<0.000000e+00> : vector<128x32xf32>
    %47 = tpu.matmul %44, %46, %cst_46 {dimension_numbers = #tpu.dot_dimension_numbers<[1], [0], [0], [1], [0, 0, 1, 1], [], []>} : vector<128x32xbf16>, vector<32x32xbf16>, vector<128x32xf32> -> vector<128x32xf32>
    %48 = arith.addf %42, %47 : vector<128x32xf32>
    %c0_47 = arith.constant 0 : index
    %c17 = arith.constant 17 : index
    %c0_48 = arith.constant 0 : index
    %49 = vector.load %arg1[%c0_47, %c17, %c0_48] : memref<1x160x32xbf16, #tpu.memory_space<vmem>>, vector<1x128x32xbf16>
    %50 = vector.shape_cast %49 : vector<1x128x32xbf16> to vector<128x32xbf16>
    %c8 = arith.constant 8 : index
    %c0_49 = arith.constant 0 : index
    %c0_50 = arith.constant 0 : index
    %51 = vector.load %arg5[%c8, %c0_49, %c0_50] : memref<9x32x32xbf16, #tpu.memory_space<vmem>>, vector<1x32x32xbf16>
    %52 = vector.shape_cast %51 : vector<1x32x32xbf16> to vector<32x32xbf16>
    %cst_51 = arith.constant dense<0.000000e+00> : vector<128x32xf32>
    %53 = tpu.matmul %50, %52, %cst_51 {dimension_numbers = #tpu.dot_dimension_numbers<[1], [0], [0], [1], [0, 0, 1, 1], [], []>} : vector<128x32xbf16>, vector<32x32xbf16>, vector<128x32xf32> -> vector<128x32xf32>
    %54 = arith.addf %48, %53 : vector<128x32xf32>
    %c0_52 = arith.constant 0 : index
    %c0_53 = arith.constant 0 : index
    %55 = vector.load %arg6[%c0_52, %c0_53] : memref<1x32xf32, #tpu.memory_space<vmem>>, vector<1x32xf32>
    %56 = vector.broadcast %55 : vector<1x32xf32> to vector<128x32xf32>
    %57 = arith.addf %54, %56 : vector<128x32xf32>
    %cst_54 = arith.constant 0.000000e+00 : f32
    %58 = vector.broadcast %cst_54 : f32 to vector<128x32xf32>
    %59 = arith.maximumf %57, %58 : vector<128x32xf32>
    %60 = arith.truncf %59 : vector<128x32xf32> to vector<128x32xbf16>
    %c0_55 = arith.constant 0 : index
    %c0_56 = arith.constant 0 : index
    %61 = vector.load %arg7[%c0_55, %c0_56] : memref<32x128xbf16, #tpu.memory_space<vmem>>, vector<32x128xbf16>
    %cst_57 = arith.constant dense<0.000000e+00> : vector<128x128xf32>
    %62 = tpu.matmul %60, %61, %cst_57 {dimension_numbers = #tpu.dot_dimension_numbers<[1], [0], [0], [1], [0, 0, 1, 1], [], []>} : vector<128x32xbf16>, vector<32x128xbf16>, vector<128x128xf32> -> vector<128x128xf32>
    %c0_58 = arith.constant 0 : index
    %c0_59 = arith.constant 0 : index
    %63 = vector.load %arg8[%c0_58, %c0_59] : memref<1x128xf32, #tpu.memory_space<vmem>>, vector<1x128xf32>
    %64 = vector.broadcast %63 : vector<1x128xf32> to vector<128x128xf32>
    %65 = arith.addf %62, %64 : vector<128x128xf32>
    %c0_60 = arith.constant 0 : index
    %c0_61 = arith.constant 0 : index
    %c0_62 = arith.constant 0 : index
    %66 = vector.load %arg9[%c0_60, %c0_61, %c0_62] : memref<1x128x64xbf16, #tpu.memory_space<vmem>>, vector<1x128x64xbf16>
    %67 = vector.shape_cast %66 : vector<1x128x64xbf16> to vector<128x64xbf16>
    %c0_63 = arith.constant 0 : index
    %c0_64 = arith.constant 0 : index
    %68 = vector.load %arg10[%c0_63, %c0_64] : memref<64x128xbf16, #tpu.memory_space<vmem>>, vector<64x128xbf16>
    %cst_65 = arith.constant dense<0.000000e+00> : vector<128x128xf32>
    %69 = tpu.matmul %67, %68, %cst_65 {dimension_numbers = #tpu.dot_dimension_numbers<[1], [0], [0], [1], [0, 0, 1, 1], [], []>} : vector<128x64xbf16>, vector<64x128xbf16>, vector<128x128xf32> -> vector<128x128xf32>
    %70 = arith.addf %65, %69 : vector<128x128xf32>
    %cst_66 = arith.constant 0.000000e+00 : f32
    %71 = vector.broadcast %cst_66 : f32 to vector<128x128xf32>
    %72 = arith.maximumf %70, %71 : vector<128x128xf32>
    %73 = arith.truncf %72 : vector<128x128xf32> to vector<128x128xbf16>
    %c0_67 = arith.constant 0 : index
    %c0_68 = arith.constant 0 : index
    %c0_69 = arith.constant 0 : index
    %74 = vector.load %arg11[%c0_67, %c0_68, %c0_69] : memref<1x128x128xbf16, #tpu.memory_space<vmem>>, vector<1x128x128xbf16>
    %75 = vector.shape_cast %74 : vector<1x128x128xbf16> to vector<128x128xbf16>
    %76 = vector.shape_cast %73 : vector<128x128xbf16> to vector<1x128x128xbf16>
    tpu.vector_store %arg11[%c0_67, %c0_68, %c0_69], %76 {strides = array<i32>} : memref<1x128x128xbf16, #tpu.memory_space<vmem>>, vector<1x128x128xbf16>,
    return
  }
  func.func @transform_0(%arg0: i32) -> (i32, i32, i32) {
    %c0_i32 = arith.constant 0 : i32
    %c0_i32_0 = arith.constant 0 : i32
    %c0_i32_1 = arith.constant 0 : i32
    return %arg0, %c0_i32, %c0_i32_0 : i32, i32, i32
  }
  func.func @transform_1(%arg0: i32) -> (i32, i32, i32) {
    %c0_i32 = arith.constant 0 : i32
    %c0_i32_0 = arith.constant 0 : i32
    %c0_i32_1 = arith.constant 0 : i32
    return %arg0, %c0_i32, %c0_i32_0 : i32, i32, i32
  }
  func.func @transform_2(%arg0: i32) -> (i32, i32, i32) {
    %c0_i32 = arith.constant 0 : i32
    %c0_i32_0 = arith.constant 0 : i32
    %c0_i32_1 = arith.constant 0 : i32
    return %arg0, %c0_i32, %c0_i32_0 : i32, i32, i32
  }
  func.func @transform_3(%arg0: i32) -> (i32, i32, i32) {
    %c0_i32 = arith.constant 0 : i32
    %c0_i32_0 = arith.constant 0 : i32
    %c0_i32_1 = arith.constant 0 : i32
    return %arg0, %c0_i32, %c0_i32_0 : i32, i32, i32
  }
  func.func @transform_4(%arg0: i32) -> (i32, i32, i32) {
    %c0_i32 = arith.constant 0 : i32
    %c0_i32_0 = arith.constant 0 : i32
    %c0_i32_1 = arith.constant 0 : i32
    %c0_i32_2 = arith.constant 0 : i32
    return %c0_i32, %c0_i32_0, %c0_i32_1 : i32, i32, i32
  }
  func.func @transform_5(%arg0: i32) -> (i32, i32) {
    %c0_i32 = arith.constant 0 : i32
    %c0_i32_0 = arith.constant 0 : i32
    %c0_i32_1 = arith.constant 0 : i32
    return %c0_i32, %c0_i32_0 : i32, i32
  }
  func.func @transform_6(%arg0: i32) -> (i32, i32) {
    %c0_i32 = arith.constant 0 : i32
    %c0_i32_0 = arith.constant 0 : i32
    %c0_i32_1 = arith.constant 0 : i32
    return %c0_i32, %c0_i32_0 : i32, i32
  }
  func.func @transform_7(%arg0: i32) -> (i32, i32) {
    %c0_i32 = arith.constant 0 : i32
    %c0_i32_0 = arith.constant 0 : i32
    %c0_i32_1 = arith.constant 0 : i32
    return %c0_i32, %c0_i32_0 : i32, i32
  }
  func.func @transform_8(%arg0: i32) -> (i32, i32, i32) {
    %c0_i32 = arith.constant 0 : i32
    %c0_i32_0 = arith.constant 0 : i32
    %c0_i32_1 = arith.constant 0 : i32
    return %arg0, %c0_i32, %c0_i32_0 : i32, i32, i32
  }
  func.func @transform_9(%arg0: i32) -> (i32, i32) {
    %c0_i32 = arith.constant 0 : i32
    %c0_i32_0 = arith.constant 0 : i32
    %c0_i32_1 = arith.constant 0 : i32
    return %c0_i32, %c0_i32_0 : i32, i32
  }
  func.func @transform_10(%arg0: i32) -> (i32, i32, i32) {
    %c0_i32 = arith.constant 0 : i32
    %c0_i32_0 = arith.constant 0 : i32
    %c0_i32_1 = arith.constant 0 : i32
    return %arg0, %c0_i32, %c0_i32_0 : i32, i32, i32
  }
}

</mosaic_0001>

<llo_original>
// kernel: bottleneck_forward.2
$region0: #{bottleneck_forward.2}
  #allocation0 [shape = 'u32[]', space=smem, size = 0x4, offset = 0x4, fixed_abs, tag = 'smem constant byte address 0x4 - core index']
  #allocation1 [shape = 'u32[144,128]{1,0:T(1,128)}', space=vmem, size = 0x12000, scoped, tag = 'internal scratch']
  %s0 = inlined_call_operand.vmem [shape: bf16[512,64], index: 0, kind: input, shape index: {}]
  %s1 = inlined_call_operand.vmem [shape: bf16[64,32], index: 1, kind: input, shape index: {}]
  %s2 = inlined_call_operand.vmem [shape: f32[1,32], index: 2, kind: input, shape index: {}]
  %s3 = inlined_call_operand.vmem [shape: bf16[512,32], index: 3, kind: output, shape index: {}]
  %s4 = sld [smem:[#allocation0]]
  $region22: #{bottleneck_forward.2} parent=0
    _
  %s6 = ssub.s32 1, %s4
  %s7 = scalar_select 0, %s6, %s4
  // Predicated region
  $region2: #{bottleneck_forward.2} parent=0 // pred_check
    _
  $region3: #{bottleneck_forward.2} parent=0 // pred_check_branch
    %9 = sbr.rel (0) target = $region5
  $region4: #{bottleneck_forward.2} parent=0 // pred_region
    _
  $region5: #{bottleneck_forward.2} parent=0 // pred_fallthru
    _
  // Predicated region
  $region6: #{bottleneck_forward.2} parent=0 // pred_check
    _
  $region7: #{bottleneck_forward.2} parent=0 // pred_check_branch
    %11 = sbr.rel (0) target = $region9
  $region8: #{bottleneck_forward.2} parent=0 // pred_region
    _
  $region9: #{bottleneck_forward.2} parent=0 // pred_fallthru
    _
  // Predicated region
  $region10: #{bottleneck_forward.2} parent=0 // pred_check
    _
  $region11: #{bottleneck_forward.2} parent=0 // pred_check_branch
    %13 = sbr.rel (0) target = $region13
  $region12: #{bottleneck_forward.2} parent=0 // pred_region
    _
  $region13: #{bottleneck_forward.2} parent=0 // pred_fallthru
    _
  %v15 = vld [vmem:[%s0] sm:$0xf]
  %v16 = vld [vmem:[%s0 + $0x4] sm:$0xf]
  %v17 = vld [vmem:[%s0 + $0x8] sm:$0xf]
  %v18 = vld [vmem:[%s0 + $0xc] sm:$0xf]
  %v19 = vld [vmem:[%s0 + $0x10] sm:$0xf]
  %v20 = vld [vmem:[%s0 + $0x14] sm:$0xf]
  %v21 = vld [vmem:[%s0 + $0x18] sm:$0xf]
  %v22 = vld [vmem:[%s0 + $0x1c] sm:$0xf]
  %v23 = vld [vmem:[%s0 + $0x20] sm:$0xf]
  %v24 = vld [vmem:[%s0 + $0x24] sm:$0xf]
  %v25 = vld [vmem:[%s0 + $0x28] sm:$0xf]
  %v26 = vld [vmem:[%s0 + $0x2c] sm:$0xf]
  %v27 = vld [vmem:[%s0 + $0x30] sm:$0xf]
  %v28 = vld [vmem:[%s0 + $0x34] sm:$0xf]
  %v29 = vld [vmem:[%s0 + $0x38] sm:$0xf]
  %v30 = vld [vmem:[%s0 + $0x3c] sm:$0xf]
  %v31 = vld [vmem:[%s0 + $0x40] sm:$0xf]
  %v32 = vld [vmem:[%s0 + $0x44] sm:$0xf]
  %v33 = vld [vmem:[%s0 + $0x48] sm:$0xf]
  %v34 = vld [vmem:[%s0 + $0x4c] sm:$0xf]
  %v35 = vld [vmem:[%s0 + $0x50] sm:$0xf]
  %v36 = vld [vmem:[%s0 + $0x54] sm:$0xf]
  %v37 = vld [vmem:[%s0 + $0x58] sm:$0xf]
  %v38 = vld [vmem:[%s0 + $0x5c] sm:$0xf]
  %v39 = vld [vmem:[%s0 + $0x60] sm:$0xf]
  %v40 = vld [vmem:[%s0 + $0x64] sm:$0xf]
  %v41 = vld [vmem:[%s0 + $0x68] sm:$0xf]
  %v42 = vld [vmem:[%s0 + $0x6c] sm:$0xf]
  %v43 = vld [vmem:[%s0 + $0x70] sm:$0xf]
  %v44 = vld [vmem:[%s0 + $0x74] sm:$0xf]
  %v45 = vld [vmem:[%s0 + $0x78] sm:$0xf]
  %v46 = vld [vmem:[%s0 + $0x7c] sm:$0xf]
  %v47 = vld [vmem:[%s0 + $0x80] sm:$0xf]
  %v48 = vld [vmem:[%s0 + $0x84] sm:$0xf]
  %v49 = vld [vmem:[%s0 + $0x88] sm:$0xf]
  %v50 = vld [vmem:[%s0 + $0x8c] sm:$0xf]
  %v51 = vld [vmem:[%s0 + $0x90] sm:$0xf]
  %v52 = vld [vmem:[%s0 + $0x94] sm:$0xf]
  %v53 = vld [vmem:[%s0 + $0x98] sm:$0xf]
  %v54 = vld [vmem:[%s0 + $0x9c] sm:$0xf]
  %v55 = vld [vmem:[%s0 + $0xa0] sm:$0xf]
  %v56 = vld [vmem:[%s0 + $0xa4] sm:$0xf]
  %v57 = vld [vmem:[%s0 + $0xa8] sm:$0xf]
  %v58 = vld [vmem:[%s0 + $0xac] sm:$0xf]
  %v59 = vld [vmem:[%s0 + $0xb0] sm:$0xf]
  %v60 = vld [vmem:[%s0 + $0xb4] sm:$0xf]
  %v61 = vld [vmem:[%s0 + $0xb8] sm:$0xf]
  %v62 = vld [vmem:[%s0 + $0xbc] sm:$0xf]
  %v63 = vld [vmem:[%s0 + $0xc0] sm:$0xf]
  %v64 = vld [vmem:[%s0 + $0xc4] sm:$0xf]
  %v65 = vld [vmem:[%s0 + $0xc8] sm:$0xf]
  %v66 = vld [vmem:[%s0 + $0xcc] sm:$0xf]
  %v67 = vld [vmem:[%s0 + $0xd0] sm:$0xf]
  %v68 = vld [vmem:[%s0 + $0xd4] sm:$0xf]
  %v69 = vld [vmem:[%s0 + $0xd8] sm:$0xf]
  %v70 = vld [vmem:[%s0 + $0xdc] sm:$0xf]
  %v71 = vld [vmem:[%s0 + $0xe0] sm:$0xf]
  %v72 = vld [vmem:[%s0 + $0xe4] sm:$0xf]
  %v73 = vld [vmem:[%s0 + $0xe8] sm:$0xf]
  %v74 = vld [vmem:[%s0 + $0xec] sm:$0xf]
  %v75 = vld [vmem:[%s0 + $0xf0] sm:$0xf]
  %v76 = vld [vmem:[%s0 + $0xf4] sm:$0xf]
  %v77 = vld [vmem:[%s0 + $0xf8] sm:$0xf]
  %v78 = vld [vmem:[%s0 + $0xfc] sm:$0xf]
  %v79 = vld [vmem:[%s1] sm:$0xf]
  %v80 = vld [vmem:[%s1 + $0x4] sm:$0xf]
  %v81 = vld [vmem:[%s1 + $0x8] sm:$0xf]
  %v82 = vld [vmem:[%s1 + $0xc] sm:$0xf]
  %v83 = vld [vmem:[%s1 + $0x10] sm:$0xf]
  %v84 = vld [vmem:[%s1 + $0x14] sm:$0xf]
  %v85 = vld [vmem:[%s1 + $0x18] sm:$0xf]
  %v86 = vld [vmem:[%s1 + $0x1c] sm:$0xf]
  %v87 = vld [vmem:[%s2] sm:$0x1]
  %v89 = vlaneseq
  %v90 = vshrl.u32 %v89, 7
  %v91 = vsub.s32 0, %v90
  %v92 = vrot.slane %v87, %v91
  %v158 = vunpack.c.l.b16 %v15
  %v159 = vunpack.c.l.b16 %v16
  %v160 = vunpack.c.l.b16 %v17
  %v161 = vunpack.c.l.b16 %v18
  %v162 = vunpack.c.l.b16 %v19
  %v163 = vunpack.c.l.b16 %v20
  %v164 = vunpack.c.l.b16 %v21
  %v165 = vunpack.c.l.b16 %v22
  %v166 = vunpack.c.l.b16 %v23
  %v167 = vunpack.c.l.b16 %v24
  %v168 = vunpack.c.l.b16 %v25
  %v169 = vunpack.c.l.b16 %v26
  %v170 = vunpack.c.l.b16 %v27
  %v171 = vunpack.c.l.b16 %v28
  %v172 = vunpack.c.l.b16 %v29
  %v173 = vunpack.c.l.b16 %v30
  %v174 = vunpack.c.l.b16 %v31
  %v175 = vunpack.c.l.b16 %v32
  %v176 = vunpack.c.l.b16 %v33
  %v177 = vunpack.c.l.b16 %v34
  %v178 = vunpack.c.l.b16 %v35
  %v179 = vunpack.c.l.b16 %v36
  %v180 = vunpack.c.l.b16 %v37
  %v181 = vunpack.c.l.b16 %v38
  %v182 = vunpack.c.l.b16 %v39
  %v183 = vunpack.c.l.b16 %v40
  %v184 = vunpack.c.l.b16 %v41
  %v185 = vunpack.c.l.b16 %v42
  %v186 = vunpack.c.l.b16 %v43
  %v187 = vunpack.c.l.b16 %v44
  %v188 = vunpack.c.l.b16 %v45
  %v189 = vunpack.c.l.b16 %v46
  %v190 = vunpack.c.l.b16 %v47
  %v191 = vunpack.c.l.b16 %v48
  %v192 = vunpack.c.l.b16 %v49
  %v193 = vunpack.c.l.b16 %v50
  %v194 = vunpack.c.l.b16 %v51
  %v195 = vunpack.c.l.b16 %v52
  %v196 = vunpack.c.l.b16 %v53
  %v197 = vunpack.c.l.b16 %v54
  %v198 = vunpack.c.l.b16 %v55
  %v199 = vunpack.c.l.b16 %v56
  %v200 = vunpack.c.l.b16 %v57
  %v201 = vunpack.c.l.b16 %v58
  %v202 = vunpack.c.l.b16 %v59
  %v203 = vunpack.c.l.b16 %v60
  %v204 = vunpack.c.l.b16 %v61
  %v205 = vunpack.c.l.b16 %v62
  %v206 = vunpack.c.l.b16 %v63
  %v207 = vunpack.c.l.b16 %v64
  %v208 = vunpack.c.l.b16 %v65
  %v209 = vunpack.c.l.b16 %v66
  %v210 = vunpack.c.l.b16 %v67
  %v211 = vunpack.c.l.b16 %v68
  %v212 = vunpack.c.l.b16 %v69
  %v213 = vunpack.c.l.b16 %v70
  %v214 = vunpack.c.l.b16 %v71
  %v215 = vunpack.c.l.b16 %v72
  %v216 = vunpack.c.l.b16 %v73
  %v217 = vunpack.c.l.b16 %v74
  %v218 = vunpack.c.l.b16 %v75
  %v219 = vunpack.c.l.b16 %v76
  %v220 = vunpack.c.l.b16 %v77
  %v221 = vunpack.c.l.b16 %v78
  %v222 = vpack.c.b16 %v159, %v158
  %v223 = vpack.c.b16 %v161, %v160
  %v224 = vpack.c.b16 %v163, %v162
  %v225 = vpack.c.b16 %v165, %v164
  %v226 = vpack.c.b16 %v167, %v166
  %v227 = vpack.c.b16 %v169, %v168
  %v228 = vpack.c.b16 %v171, %v170
  %v229 = vpack.c.b16 %v173, %v172
  %v230 = vpack.c.b16 %v175, %v174
  %v231 = vpack.c.b16 %v177, %v176
  %v232 = vpack.c.b16 %v179, %v178
  %v233 = vpack.c.b16 %v181, %v180
  %v234 = vpack.c.b16 %v183, %v182
  %v235 = vpack.c.b16 %v185, %v184
  %v236 = vpack.c.b16 %v187, %v186
  %v237 = vpack.c.b16 %v189, %v188
  %v238 = vpack.c.b16 %v191, %v190
  %v239 = vpack.c.b16 %v193, %v192
  %v240 = vpack.c.b16 %v195, %v194
  %v241 = vpack.c.b16 %v197, %v196
  %v242 = vpack.c.b16 %v199, %v198
  %v243 = vpack.c.b16 %v201, %v200
  %v244 = vpack.c.b16 %v203, %v202
  %v245 = vpack.c.b16 %v205, %v204
  %v246 = vpack.c.b16 %v207, %v206
  %v247 = vpack.c.b16 %v209, %v208
  %v248 = vpack.c.b16 %v211, %v210
  %v249 = vpack.c.b16 %v213, %v212
  %v250 = vpack.c.b16 %v215, %v214
  %v251 = vpack.c.b16 %v217, %v216
  %v252 = vpack.c.b16 %v219, %v218
  %v253 = vpack.c.b16 %v221, %v220
  %v262 = vunpack.c.l.b16 %v79
  %v263 = vunpack.c.l.b16 %v80
  %v264 = vunpack.c.l.b16 %v81
  %v265 = vunpack.c.l.b16 %v82
  %v266 = vunpack.c.l.b16 %v83
  %v267 = vunpack.c.l.b16 %v84
  %v268 = vunpack.c.l.b16 %v85
  %v269 = vunpack.c.l.b16 %v86
  %v270 = vpack.c.b16 %v263, %v262
  %v271 = vpack.c.b16 %v265, %v264
  %v272 = vpack.c.b16 %v267, %v266
  %v273 = vpack.c.b16 %v269, %v268
  %vm278 = vcmask 523264
  %v280 = vsel %vm278, %v222, 0
  %v283 = vsel %vm278, %v223, 0
  %v286 = vsel %vm278, %v224, 0
  %v289 = vsel %vm278, %v225, 0
  %v292 = vsel %vm278, %v226, 0
  %v295 = vsel %vm278, %v227, 0
  %v298 = vsel %vm278, %v228, 0
  %v301 = vsel %vm278, %v229, 0
  %v304 = vsel %vm278, %v230, 0
  %v307 = vsel %vm278, %v231, 0
  %v310 = vsel %vm278, %v232, 0
  %v313 = vsel %vm278, %v233, 0
  %v316 = vsel %vm278, %v234, 0
  %v319 = vsel %vm278, %v235, 0
  %v322 = vsel %vm278, %v236, 0
  %v325 = vsel %vm278, %v237, 0
  %v328 = vsel %vm278, %v238, 0
  %v331 = vsel %vm278, %v239, 0
  %v334 = vsel %vm278, %v240, 0
  %v337 = vsel %vm278, %v241, 0
  %v340 = vsel %vm278, %v242, 0
  %v343 = vsel %vm278, %v243, 0
  %v346 = vsel %vm278, %v244, 0
  %v349 = vsel %vm278, %v245, 0
  %v352 = vsel %vm278, %v246, 0
  %v355 = vsel %vm278, %v247, 0
  %v358 = vsel %vm278, %v248, 0
  %v361 = vsel %vm278, %v249, 0
  %v364 = vsel %vm278, %v250, 0
  %v367 = vsel %vm278, %v251, 0
  %v370 = vsel %vm278, %v252, 0
  %v373 = vsel %vm278, %v253, 0
  %375 = vmatprep.subr.bf16.mxu0 0
  %376 = vmatpush1.bf16.msra.mxu0 %v270
  %377 = vmatprep.subr.bf16.mxu0 0
  %378 = vmatpush1.bf16.msra.mxu0 %v271
  %379 = vmatprep.subr.bf16.mxu0 0
  %380 = vmatpush1.bf16.msra.mxu0 %v272
  %381 = vmatprep.subr.bf16.mxu0 0
  %382 = vmatpush1.bf16.msra.mxu0 %v273
  %383 = vmatprep.subr.bf16.mxu0 0
  %384 = vmatpush1.bf16.msra.mxu0 0
  %385 = vmatprep.subr.bf16.mxu0 0
  %386 = vmatpush1.bf16.msra.mxu0 0
  %387 = vmatprep.subr.bf16.mxu0 0
  %388 = vmatpush1.bf16.msra.mxu0 0
  %389 = vmatprep.subr.bf16.mxu0 0
  %390 = vmatpush1.bf16.msra.mxu0 0
  %391 = vmatprep.subr.bf16.mxu0 0
  %392 = vmatpush1.bf16.msra.mxu0 0
  %393 = vmatprep.subr.bf16.mxu0 0
  %394 = vmatpush1.bf16.msra.mxu0 0
  %395 = vmatprep.subr.bf16.mxu0 0
  %396 = vmatpush1.bf16.msra.mxu0 0
  %397 = vmatprep.subr.bf16.mxu0 0
  %398 = vmatpush1.bf16.msra.mxu0 0
  %399 = vmatprep.subr.bf16.mxu0 0
  %400 = vmatpush1.bf16.msra.mxu0 0
  %401 = vmatprep.subr.bf16.mxu0 0
  %402 = vmatpush1.bf16.msra.mxu0 0
  %403 = vmatprep.subr.bf16.mxu0 0
  %404 = vmatpush1.bf16.msra.mxu0 0
  %405 = vmatprep.subr.bf16.mxu0 0
  %406 = vmatpush1.bf16.msra.mxu0 0
  %407 = vmatprep.mubr.bf16.mxu0 0
  %408 = vmatmul.mubr.bf16.gmra.mrb[0].mxu0 %v280
  %v409 = vpop.f32.mrb[0].mxu0
  %v410 = vadd.f32 %v92, %v409
  %v411 = vpop.f32.mrb[0].mxu0
  %v412 = vpop.f32.mrb[0].mxu0
  %v413 = vadd.f32 %v92, %v412
  %v414 = vpop.f32.mrb[0].mxu0
  %415 = vmatprep.mubr.bf16.mxu0 0
  %416 = vmatmul.mubr.bf16.gmra.mrb[0].mxu0 %v283
  %v417 = vpop.f32.mrb[0].mxu0
  %v418 = vadd.f32 %v92, %v417
  %v419 = vpop.f32.mrb[0].mxu0
  %v420 = vpop.f32.mrb[0].mxu0
  %v421 = vadd.f32 %v92, %v420
  %v422 = vpop.f32.mrb[0].mxu0
  %423 = vmatprep.mubr.bf16.mxu0 0
  %424 = vmatmul.mubr.bf16.gmra.mrb[0].mxu0 %v286
  %v425 = vpop.f32.mrb[0].mxu0
  %v426 = vadd.f32 %v92, %v425
  %v427 = vpop.f32.mrb[0].mxu0
  %v428 = vpop.f32.mrb[0].mxu0
  %v429 = vadd.f32 %v92, %v428
  %v430 = vpop.f32.mrb[0].mxu0
  %431 = vmatprep.mubr.bf16.mxu0 0
  %432 = vmatmul.mubr.bf16.gmra.mrb[0].mxu0 %v289
  %v433 = vpop.f32.mrb[0].mxu0
  %v434 = vadd.f32 %v92, %v433
  %v435 = vpop.f32.mrb[0].mxu0
  %v436 = vpop.f32.mrb[0].mxu0
  %v437 = vadd.f32 %v92, %v436
  %v438 = vpop.f32.mrb[0].mxu0
  %439 = vmatprep.mubr.bf16.mxu0 0
  %440 = vmatmul.mubr.bf16.gmra.mrb[0].mxu0 %v292
  %v441 = vpop.f32.mrb[0].mxu0
  %v442 = vadd.f32 %v92, %v441
  %v443 = vpop.f32.mrb[0].mxu0
  %v444 = vpop.f32.mrb[0].mxu0
  %v445 = vadd.f32 %v92, %v444
  %v446 = vpop.f32.mrb[0].mxu0
  %447 = vmatprep.mubr.bf16.mxu0 0
  %448 = vmatmul.mubr.bf16.gmra.mrb[0].mxu0 %v295
  %v449 = vpop.f32.mrb[0].mxu0
  %v450 = vadd.f32 %v92, %v449
  %v451 = vpop.f32.mrb[0].mxu0
  %v452 = vpop.f32.mrb[0].mxu0
  %v453 = vadd.f32 %v92, %v452
  %v454 = vpop.f32.mrb[0].mxu0
  %455 = vmatprep.mubr.bf16.mxu0 0
  %456 = vmatmul.mubr.bf16.gmra.mrb[0].mxu0 %v298
  %v457 = vpop.f32.mrb[0].mxu0
  %v458 = vadd.f32 %v92, %v457
  %v459 = vpop.f32.mrb[0].mxu0
  %v460 = vpop.f32.mrb[0].mxu0
  %v461 = vadd.f32 %v92, %v460
  %v462 = vpop.f32.mrb[0].mxu0
  %463 = vmatprep.mubr.bf16.mxu0 0
  %464 = vmatmul.mubr.bf16.gmra.mrb[0].mxu0 %v301
  %v465 = vpop.f32.mrb[0].mxu0
  %v466 = vadd.f32 %v92, %v465
  %v467 = vpop.f32.mrb[0].mxu0
  %v468 = vpop.f32.mrb[0].mxu0
  %v469 = vadd.f32 %v92, %v468
  %v470 = vpop.f32.mrb[0].mxu0
  %471 = vmatprep.mubr.bf16.mxu0 0
  %472 = vmatmul.mubr.bf16.gmra.mrb[0].mxu0 %v304
  %v473 = vpop.f32.mrb[0].mxu0
  %v474 = vadd.f32 %v92, %v473
  %v475 = vpop.f32.mrb[0].mxu0
  %v476 = vpop.f32.mrb[0].mxu0
  %v477 = vadd.f32 %v92, %v476
  %v478 = vpop.f32.mrb[0].mxu0
  %479 = vmatprep.mubr.bf16.mxu0 0
  %480 = vmatmul.mubr.bf16.gmra.mrb[0].mxu0 %v307
  %v481 = vpop.f32.mrb[0].mxu0
  %v482 = vadd.f32 %v92, %v481
  %v483 = vpop.f32.mrb[0].mxu0
  %v484 = vpop.f32.mrb[0].mxu0
  %v485 = vadd.f32 %v92, %v484
  %v486 = vpop.f32.mrb[0].mxu0
  %487 = vmatprep.mubr.bf16.mxu0 0
  %488 = vmatmul.mubr.bf16.gmra.mrb[0].mxu0 %v310
  %v489 = vpop.f32.mrb[0].mxu0
  %v490 = vadd.f32 %v92, %v489
  %v491 = vpop.f32.mrb[0].mxu0
  %v492 = vpop.f32.mrb[0].mxu0
  %v493 = vadd.f32 %v92, %v492
  %v494 = vpop.f32.mrb[0].mxu0
  %495 = vmatprep.mubr.bf16.mxu0 0
  %496 = vmatmul.mubr.bf16.gmra.mrb[0].mxu0 %v313
  %v497 = vpop.f32.mrb[0].mxu0
  %v498 = vadd.f32 %v92, %v497
  %v499 = vpop.f32.mrb[0].mxu0
  %v500 = vpop.f32.mrb[0].mxu0
  %v501 = vadd.f32 %v92, %v500
  %v502 = vpop.f32.mrb[0].mxu0
  %503 = vmatprep.mubr.bf16.mxu0 0
  %504 = vmatmul.mubr.bf16.gmra.mrb[0].mxu0 %v316
  %v505 = vpop.f32.mrb[0].mxu0
  %v506 = vadd.f32 %v92, %v505
  %v507 = vpop.f32.mrb[0].mxu0
  %v508 = vpop.f32.mrb[0].mxu0
  %v509 = vadd.f32 %v92, %v508
  %v510 = vpop.f32.mrb[0].mxu0
  %511 = vmatprep.mubr.bf16.mxu0 0
  %512 = vmatmul.mubr.bf16.gmra.mrb[0].mxu0 %v319
  %v513 = vpop.f32.mrb[0].mxu0
  %v514 = vadd.f32 %v92, %v513
  %v515 = vpop.f32.mrb[0].mxu0
  %v516 = vpop.f32.mrb[0].mxu0
  %v517 = vadd.f32 %v92, %v516
  %v518 = vpop.f32.mrb[0].mxu0
  %519 = vmatprep.mubr.bf16.mxu0 0
  %520 = vmatmul.mubr.bf16.gmra.mrb[0].mxu0 %v322
  %v521 = vpop.f32.mrb[0].mxu0
  %v522 = vadd.f32 %v92, %v521
  %v523 = vpop.f32.mrb[0].mxu0
  %v524 = vpop.f32.mrb[0].mxu0
  %v525 = vadd.f32 %v92, %v524
  %v526 = vpop.f32.mrb[0].mxu0
  %527 = vmatprep.mubr.bf16.mxu0 0
  %528 = vmatmul.mubr.bf16.gmra.mrb[0].mxu0 %v325
  %v529 = vpop.f32.mrb[0].mxu0
  %v530 = vadd.f32 %v92, %v529
  %v531 = vpop.f32.mrb[0].mxu0
  %v532 = vpop.f32.mrb[0].mxu0
  %v533 = vadd.f32 %v92, %v532
  %v534 = vpop.f32.mrb[0].mxu0
  %535 = vmatprep.mubr.bf16.mxu0 0
  %536 = vmatmul.mubr.bf16.gmra.mrb[0].mxu0 %v328
  %v537 = vpop.f32.mrb[0].mxu0
  %v538 = vadd.f32 %v92, %v537
  %v539 = vpop.f32.mrb[0].mxu0
  %v540 = vpop.f32.mrb[0].mxu0
  %v541 = vadd.f32 %v92, %v540
  %v542 = vpop.f32.mrb[0].mxu0
  %543 = vmatprep.mubr.bf16.mxu0 0
  %544 = vmatmul.mubr.bf16.gmra.mrb[0].mxu0 %v331
  %v545 = vpop.f32.mrb[0].mxu0
  %v546 = vadd.f32 %v92, %v545
  %v547 = vpop.f32.mrb[0].mxu0
  %v548 = vpop.f32.mrb[0].mxu0
  %v549 = vadd.f32 %v92, %v548
  %v550 = vpop.f32.mrb[0].mxu0
  %551 = vmatprep.mubr.bf16.mxu0 0
  %552 = vmatmul.mubr.bf16.gmra.mrb[0].mxu0 %v334
  %v553 = vpop.f32.mrb[0].mxu0
  %v554 = vadd.f32 %v92, %v553
  %v555 = vpop.f32.mrb[0].mxu0
  %v556 = vpop.f32.mrb[0].mxu0
  %v557 = vadd.f32 %v92, %v556
  %v558 = vpop.f32.mrb[0].mxu0
  %559 = vmatprep.mubr.bf16.mxu0 0
  %560 = vmatmul.mubr.bf16.gmra.mrb[0].mxu0 %v337
  %v561 = vpop.f32.mrb[0].mxu0
  %v562 = vadd.f32 %v92, %v561
  %v563 = vpop.f32.mrb[0].mxu0
  %v564 = vpop.f32.mrb[0].mxu0
  %v565 = vadd.f32 %v92, %v564
  %v566 = vpop.f32.mrb[0].mxu0
  %567 = vmatprep.mubr.bf16.mxu0 0
  %568 = vmatmul.mubr.bf16.gmra.mrb[0].mxu0 %v340
  %v569 = vpop.f32.mrb[0].mxu0
  %v570 = vadd.f32 %v92, %v569
  %v571 = vpop.f32.mrb[0].mxu0
  %v572 = vpop.f32.mrb[0].mxu0
  %v573 = vadd.f32 %v92, %v572
  %v574 = vpop.f32.mrb[0].mxu0
  %575 = vmatprep.mubr.bf16.mxu0 0
  %576 = vmatmul.mubr.bf16.gmra.mrb[0].mxu0 %v343
  %v577 = vpop.f32.mrb[0].mxu0
  %v578 = vadd.f32 %v92, %v577
  %v579 = vpop.f32.mrb[0].mxu0
  %v580 = vpop.f32.mrb[0].mxu0
  %v581 = vadd.f32 %v92, %v580
  %v582 = vpop.f32.mrb[0].mxu0
  %583 = vmatprep.mubr.bf16.mxu0 0
  %584 = vmatmul.mubr.bf16.gmra.mrb[0].mxu0 %v346
  %v585 = vpop.f32.mrb[0].mxu0
  %v586 = vadd.f32 %v92, %v585
  %v587 = vpop.f32.mrb[0].mxu0
  %v588 = vpop.f32.mrb[0].mxu0
  %v589 = vadd.f32 %v92, %v588
  %v590 = vpop.f32.mrb[0].mxu0
  %591 = vmatprep.mubr.bf16.mxu0 0
  %592 = vmatmul.mubr.bf16.gmra.mrb[0].mxu0 %v349
  %v593 = vpop.f32.mrb[0].mxu0
  %v594 = vadd.f32 %v92, %v593
  %v595 = vpop.f32.mrb[0].mxu0
  %v596 = vpop.f32.mrb[0].mxu0
  %v597 = vadd.f32 %v92, %v596
  %v598 = vpop.f32.mrb[0].mxu0
  %599 = vmatprep.mubr.bf16.mxu0 0
  %600 = vmatmul.mubr.bf16.gmra.mrb[0].mxu0 %v352
  %v601 = vpop.f32.mrb[0].mxu0
  %v602 = vadd.f32 %v92, %v601
  %v603 = vpop.f32.mrb[0].mxu0
  %v604 = vpop.f32.mrb[0].mxu0
  %v605 = vadd.f32 %v92, %v604
  %v606 = vpop.f32.mrb[0].mxu0
  %607 = vmatprep.mubr.bf16.mxu0 0
  %608 = vmatmul.mubr.bf16.gmra.mrb[0].mxu0 %v355
  %v609 = vpop.f32.mrb[0].mxu0
  %v610 = vadd.f32 %v92, %v609
  %v611 = vpop.f32.mrb[0].mxu0
  %v612 = vpop.f32.mrb[0].mxu0
  %v613 = vadd.f32 %v92, %v612
  %v614 = vpop.f32.mrb[0].mxu0
  %615 = vmatprep.mubr.bf16.mxu0 0
  %616 = vmatmul.mubr.bf16.gmra.mrb[0].mxu0 %v358
  %v617 = vpop.f32.mrb[0].mxu0
  %v618 = vadd.f32 %v92, %v617
  %v619 = vpop.f32.mrb[0].mxu0
  %v620 = vpop.f32.mrb[0].mxu0
  %v621 = vadd.f32 %v92, %v620
  %v622 = vpop.f32.mrb[0].mxu0
  %623 = vmatprep.mubr.bf16.mxu0 0
  %624 = vmatmul.mubr.bf16.gmra.mrb[0].mxu0 %v361
  %v625 = vpop.f32.mrb[0].mxu0
  %v626 = vadd.f32 %v92, %v625
  %v627 = vpop.f32.mrb[0].mxu0
  %v628 = vpop.f32.mrb[0].mxu0
  %v629 = vadd.f32 %v92, %v628
  %v630 = vpop.f32.mrb[0].mxu0
  %631 = vmatprep.mubr.bf16.mxu0 0
  %632 = vmatmul.mubr.bf16.gmra.mrb[0].mxu0 %v364
  %v633 = vpop.f32.mrb[0].mxu0
  %v634 = vadd.f32 %v92, %v633
  %v635 = vpop.f32.mrb[0].mxu0
  %v636 = vpop.f32.mrb[0].mxu0
  %v637 = vadd.f32 %v92, %v636
  %v638 = vpop.f32.mrb[0].mxu0
  %639 = vmatprep.mubr.bf16.mxu0 0
  %640 = vmatmul.mubr.bf16.gmra.mrb[0].mxu0 %v367
  %v641 = vpop.f32.mrb[0].mxu0
  %v642 = vadd.f32 %v92, %v641
  %v643 = vpop.f32.mrb[0].mxu0
  %v644 = vpop.f32.mrb[0].mxu0
  %v645 = vadd.f32 %v92, %v644
  %v646 = vpop.f32.mrb[0].mxu0
  %647 = vmatprep.mubr.bf16.mxu0 0
  %648 = vmatmul.mubr.bf16.gmra.mrb[0].mxu0 %v370
  %v649 = vpop.f32.mrb[0].mxu0
  %v650 = vadd.f32 %v92, %v649
  %v651 = vpop.f32.mrb[0].mxu0
  %v652 = vpop.f32.mrb[0].mxu0
  %v653 = vadd.f32 %v92, %v652
  %v654 = vpop.f32.mrb[0].mxu0
  %655 = vmatprep.mubr.bf16.mxu0 0
  %656 = vmatmul.mubr.bf16.gmra.mrb[0].mxu0 %v373
  %v657 = vpop.f32.mrb[0].mxu0
  %v658 = vadd.f32 %v92, %v657
  %v659 = vpop.f32.mrb[0].mxu0
  %v660 = vpop.f32.mrb[0].mxu0
  %v661 = vadd.f32 %v92, %v660
  %v662 = vpop.f32.mrb[0].mxu0
  %663 = vdwg.mxu0
  %v664 = vmax.f32 %v410, 0.0
  %v665 = vmax.f32 %v413, 0.0
  %v666 = vmax.f32 %v418, 0.0
  %v667 = vmax.f32 %v421, 0.0
  %v668 = vmax.f32 %v426, 0.0
  %v669 = vmax.f32 %v429, 0.0
  %v670 = vmax.f32 %v434, 0.0
  %v671 = vmax.f32 %v437, 0.0
  %v672 = vmax.f32 %v442, 0.0
  %v673 = vmax.f32 %v445, 0.0
  %v674 = vmax.f32 %v450, 0.0
  %v675 = vmax.f32 %v453, 0.0
  %v676 = vmax.f32 %v458, 0.0
  %v677 = vmax.f32 %v461, 0.0
  %v678 = vmax.f32 %v466, 0.0
  %v679 = vmax.f32 %v469, 0.0
  %v680 = vmax.f32 %v474, 0.0
  %v681 = vmax.f32 %v477, 0.0
  %v682 = vmax.f32 %v482, 0.0
  %v683 = vmax.f32 %v485, 0.0
  %v684 = vmax.f32 %v490, 0.0
  %v685 = vmax.f32 %v493, 0.0
  %v686 = vmax.f32 %v498, 0.0
  %v687 = vmax.f32 %v501, 0.0
  %v688 = vmax.f32 %v506, 0.0
  %v689 = vmax.f32 %v509, 0.0
  %v690 = vmax.f32 %v514, 0.0
  %v691 = vmax.f32 %v517, 0.0
  %v692 = vmax.f32 %v522, 0.0
  %v693 = vmax.f32 %v525, 0.0
  %v694 = vmax.f32 %v530, 0.0
  %v695 = vmax.f32 %v533, 0.0
  %v696 = vmax.f32 %v538, 0.0
  %v697 = vmax.f32 %v541, 0.0
  %v698 = vmax.f32 %v546, 0.0
  %v699 = vmax.f32 %v549, 0.0
  %v700 = vmax.f32 %v554, 0.0
  %v701 = vmax.f32 %v557, 0.0
  %v702 = vmax.f32 %v562, 0.0
  %v703 = vmax.f32 %v565, 0.0
  %v704 = vmax.f32 %v570, 0.0
  %v705 = vmax.f32 %v573, 0.0
  %v706 = vmax.f32 %v578, 0.0
  %v707 = vmax.f32 %v581, 0.0
  %v708 = vmax.f32 %v586, 0.0
  %v709 = vmax.f32 %v589, 0.0
  %v710 = vmax.f32 %v594, 0.0
  %v711 = vmax.f32 %v597, 0.0
  %v712 = vmax.f32 %v602, 0.0
  %v713 = vmax.f32 %v605, 0.0
  %v714 = vmax.f32 %v610, 0.0
  %v715 = vmax.f32 %v613, 0.0
  %v716 = vmax.f32 %v618, 0.0
  %v717 = vmax.f32 %v621, 0.0
  %v718 = vmax.f32 %v626, 0.0
  %v719 = vmax.f32 %v629, 0.0
  %v720 = vmax.f32 %v634, 0.0
  %v721 = vmax.f32 %v637, 0.0
  %v722 = vmax.f32 %v642, 0.0
  %v723 = vmax.f32 %v645, 0.0
  %v724 = vmax.f32 %v650, 0.0
  %v725 = vmax.f32 %v653, 0.0
  %v726 = vmax.f32 %v658, 0.0
  %v727 = vmax.f32 %v661, 0.0
  %v728 = vpack.c.bf16 %v665, %v664
  %v729 = vpack.c.bf16 %v667, %v666
  %v730 = vpack.c.bf16 %v669, %v668
  %v731 = vpack.c.bf16 %v671, %v670
  %v732 = vpack.c.bf16 %v673, %v672
  %v733 = vpack.c.bf16 %v675, %v674
  %v734 = vpack.c.bf16 %v677, %v676
  %v735 = vpack.c.bf16 %v679, %v678
  %v736 = vpack.c.bf16 %v681, %v680
  %v737 = vpack.c.bf16 %v683, %v682
  %v738 = vpack.c.bf16 %v685, %v684
  %v739 = vpack.c.bf16 %v687, %v686
  %v740 = vpack.c.bf16 %v689, %v688
  %v741 = vpack.c.bf16 %v691, %v690
  %v742 = vpack.c.bf16 %v693, %v692
  %v743 = vpack.c.bf16 %v695, %v694
  %v744 = vpack.c.bf16 %v697, %v696
  %v745 = vpack.c.bf16 %v699, %v698
  %v746 = vpack.c.bf16 %v701, %v700
  %v747 = vpack.c.bf16 %v703, %v702
  %v748 = vpack.c.bf16 %v705, %v704
  %v749 = vpack.c.bf16 %v707, %v706
  %v750 = vpack.c.bf16 %v709, %v708
  %v751 = vpack.c.bf16 %v711, %v710
  %v752 = vpack.c.bf16 %v713, %v712
  %v753 = vpack.c.bf16 %v715, %v714
  %v754 = vpack.c.bf16 %v717, %v716
  %v755 = vpack.c.bf16 %v719, %v718
  %v756 = vpack.c.bf16 %v721, %v720
  %v757 = vpack.c.bf16 %v723, %v722
  %v758 = vpack.c.bf16 %v725, %v724
  %v759 = vpack.c.bf16 %v727, %v726
  %v792 = vunpack.c.l.b16 %v728
  %v793 = vunpack.c.h.b16 %v728
  %v794 = vunpack.c.l.b16 %v729
  %v795 = vunpack.c.h.b16 %v729
  %v796 = vunpack.c.l.b16 %v730
  %v797 = vunpack.c.h.b16 %v730
  %v798 = vunpack.c.l.b16 %v731
  %v799 = vunpack.c.h.b16 %v731
  %v800 = vunpack.c.l.b16 %v732
  %v801 = vunpack.c.h.b16 %v732
  %v802 = vunpack.c.l.b16 %v733
  %v803 = vunpack.c.h.b16 %v733
  %v804 = vunpack.c.l.b16 %v734
  %v805 = vunpack.c.h.b16 %v734
  %v806 = vunpack.c.l.b16 %v735
  %v807 = vunpack.c.h.b16 %v735
  %v808 = vunpack.c.l.b16 %v736
  %v809 = vunpack.c.h.b16 %v736
  %v810 = vunpack.c.l.b16 %v737
  %v811 = vunpack.c.h.b16 %v737
  %v812 = vunpack.c.l.b16 %v738
  %v813 = vunpack.c.h.b16 %v738
  %v814 = vunpack.c.l.b16 %v739
  %v815 = vunpack.c.h.b16 %v739
  %v816 = vunpack.c.l.b16 %v740
  %v817 = vunpack.c.h.b16 %v740
  %v818 = vunpack.c.l.b16 %v741
  %v819 = vunpack.c.h.b16 %v741
  %v820 = vunpack.c.l.b16 %v742
  %v821 = vunpack.c.h.b16 %v742
  %v822 = vunpack.c.l.b16 %v743
  %v823 = vunpack.c.h.b16 %v743
  %v824 = vunpack.c.l.b16 %v744
  %v825 = vunpack.c.h.b16 %v744
  %v826 = vunpack.c.l.b16 %v745
  %v827 = vunpack.c.h.b16 %v745
  %v828 = vunpack.c.l.b16 %v746
  %v829 = vunpack.c.h.b16 %v746
  %v830 = vunpack.c.l.b16 %v747
  %v831 = vunpack.c.h.b16 %v747
  %v832 = vunpack.c.l.b16 %v748
  %v833 = vunpack.c.h.b16 %v748
  %v834 = vunpack.c.l.b16 %v749
  %v835 = vunpack.c.h.b16 %v749
  %v836 = vunpack.c.l.b16 %v750
  %v837 = vunpack.c.h.b16 %v750
  %v838 = vunpack.c.l.b16 %v751
  %v839 = vunpack.c.h.b16 %v751
  %v840 = vunpack.c.l.b16 %v752
  %v841 = vunpack.c.h.b16 %v752
  %v842 = vunpack.c.l.b16 %v753
  %v843 = vunpack.c.h.b16 %v753
  %v844 = vunpack.c.l.b16 %v754
  %v845 = vunpack.c.h.b16 %v754
  %v846 = vunpack.c.l.b16 %v755
  %v847 = vunpack.c.h.b16 %v755
  %v848 = vunpack.c.l.b16 %v756
  %v849 = vunpack.c.h.b16 %v756
  %v850 = vunpack.c.l.b16 %v757
  %v851 = vunpack.c.h.b16 %v757
  %v852 = vunpack.c.l.b16 %v758
  %v853 = vunpack.c.h.b16 %v758
  %v854 = vunpack.c.l.b16 %v759
  %v855 = vunpack.c.h.b16 %v759
  %v856 = vpack.c.b16 %v792, %v792
  %v857 = vpack.c.b16 %v793, %v793
  %v858 = vpack.c.b16 %v794, %v794
  %v859 = vpack.c.b16 %v795, %v795
  %v860 = vpack.c.b16 %v796, %v796
  %v861 = vpack.c.b16 %v797, %v797
  %v862 = vpack.c.b16 %v798, %v798
  %v863 = vpack.c.b16 %v799, %v799
  %v864 = vpack.c.b16 %v800, %v800
  %v865 = vpack.c.b16 %v801, %v801
  %v866 = vpack.c.b16 %v802, %v802
  %v867 = vpack.c.b16 %v803, %v803
  %v868 = vpack.c.b16 %v804, %v804
  %v869 = vpack.c.b16 %v805, %v805
  %v870 = vpack.c.b16 %v806, %v806
  %v871 = vpack.c.b16 %v807, %v807
  %v872 = vpack.c.b16 %v808, %v808
  %v873 = vpack.c.b16 %v809, %v809
  %v874 = vpack.c.b16 %v810, %v810
  %v875 = vpack.c.b16 %v811, %v811
  %v876 = vpack.c.b16 %v812, %v812
  %v877 = vpack.c.b16 %v813, %v813
  %v878 = vpack.c.b16 %v814, %v814
  %v879 = vpack.c.b16 %v815, %v815
  %v880 = vpack.c.b16 %v816, %v816
  %v881 = vpack.c.b16 %v817, %v817
  %v882 = vpack.c.b16 %v818, %v818
  %v883 = vpack.c.b16 %v819, %v819
  %v884 = vpack.c.b16 %v820, %v820
  %v885 = vpack.c.b16 %v821, %v821
  %v886 = vpack.c.b16 %v822, %v822
  %v887 = vpack.c.b16 %v823, %v823
  %v888 = vpack.c.b16 %v824, %v824
  %v889 = vpack.c.b16 %v825, %v825
  %v890 = vpack.c.b16 %v826, %v826
  %v891 = vpack.c.b16 %v827, %v827
  %v892 = vpack.c.b16 %v828, %v828
  %v893 = vpack.c.b16 %v829, %v829
  %v894 = vpack.c.b16 %v830, %v830
  %v895 = vpack.c.b16 %v831, %v831
  %v896 = vpack.c.b16 %v832, %v832
  %v897 = vpack.c.b16 %v833, %v833
  %v898 = vpack.c.b16 %v834, %v834
  %v899 = vpack.c.b16 %v835, %v835
  %v900 = vpack.c.b16 %v836, %v836
  %v901 = vpack.c.b16 %v837, %v837
  %v902 = vpack.c.b16 %v838, %v838
  %v903 = vpack.c.b16 %v839, %v839
  %v904 = vpack.c.b16 %v840, %v840
  %v905 = vpack.c.b16 %v841, %v841
  %v906 = vpack.c.b16 %v842, %v842
  %v907 = vpack.c.b16 %v843, %v843
  %v908 = vpack.c.b16 %v844, %v844
  %v909 = vpack.c.b16 %v845, %v845
  %v910 = vpack.c.b16 %v846, %v846
  %v911 = vpack.c.b16 %v847, %v847
  %v912 = vpack.c.b16 %v848, %v848
  %v913 = vpack.c.b16 %v849, %v849
  %v914 = vpack.c.b16 %v850, %v850
  %v915 = vpack.c.b16 %v851, %v851
  %v916 = vpack.c.b16 %v852, %v852
  %v917 = vpack.c.b16 %v853, %v853
  %v918 = vpack.c.b16 %v854, %v854
  %v919 = vpack.c.b16 %v855, %v855
  %vm984 = vcmask 257024
  %985 = vst.msk [vmem:[%s3] sm:$0xf] %vm984, %v856
  %986 = vst.msk [vmem:[%s3 + $0x4] sm:$0xf] %vm984, %v857
  %987 = vst.msk [vmem:[%s3 + $0x8] sm:$0xf] %vm984, %v858
  %988 = vst.msk [vmem:[%s3 + $0xc] sm:$0xf] %vm984, %v859
  %989 = vst.msk [vmem:[%s3 + $0x10] sm:$0xf] %vm984, %v860
  %990 = vst.msk [vmem:[%s3 + $0x14] sm:$0xf] %vm984, %v861
  %991 = vst.msk [vmem:[%s3 + $0x18] sm:$0xf] %vm984, %v862
  %992 = vst.msk [vmem:[%s3 + $0x1c] sm:$0xf] %vm984, %v863
  %993 = vst.msk [vmem:[%s3 + $0x20] sm:$0xf] %vm984, %v864
  %994 = vst.msk [vmem:[%s3 + $0x24] sm:$0xf] %vm984, %v865
  %995 = vst.msk [vmem:[%s3 + $0x28] sm:$0xf] %vm984, %v866
  %996 = vst.msk [vmem:[%s3 + $0x2c] sm:$0xf] %vm984, %v867
  %997 = vst.msk [vmem:[%s3 + $0x30] sm:$0xf] %vm984, %v868
  %998 = vst.msk [vmem:[%s3 + $0x34] sm:$0xf] %vm984, %v869
  %999 = vst.msk [vmem:[%s3 + $0x38] sm:$0xf] %vm984, %v870
  %1000 = vst.msk [vmem:[%s3 + $0x3c] sm:$0xf] %vm984, %v871
  %1001 = vst.msk [vmem:[%s3 + $0x40] sm:$0xf] %vm984, %v872
  %1002 = vst.msk [vmem:[%s3 + $0x44] sm:$0xf] %vm984, %v873
  %1003 = vst.msk [vmem:[%s3 + $0x48] sm:$0xf] %vm984, %v874
  %1004 = vst.msk [vmem:[%s3 + $0x4c] sm:$0xf] %vm984, %v875
  %1005 = vst.msk [vmem:[%s3 + $0x50] sm:$0xf] %vm984, %v876
  %1006 = vst.msk [vmem:[%s3 + $0x54] sm:$0xf] %vm984, %v877
  %1007 = vst.msk [vmem:[%s3 + $0x58] sm:$0xf] %vm984, %v878
  %1008 = vst.msk [vmem:[%s3 + $0x5c] sm:$0xf] %vm984, %v879
  %1009 = vst.msk [vmem:[%s3 + $0x60] sm:$0xf] %vm984, %v880
  %1010 = vst.msk [vmem:[%s3 + $0x64] sm:$0xf] %vm984, %v881
  %1011 = vst.msk [vmem:[%s3 + $0x68] sm:$0xf] %vm984, %v882
  %1012 = vst.msk [vmem:[%s3 + $0x6c] sm:$0xf] %vm984, %v883
  %1013 = vst.msk [vmem:[%s3 + $0x70] sm:$0xf] %vm984, %v884
  %1014 = vst.msk [vmem:[%s3 + $0x74] sm:$0xf] %vm984, %v885
  %1015 = vst.msk [vmem:[%s3 + $0x78] sm:$0xf] %vm984, %v886
  %1016 = vst.msk [vmem:[%s3 + $0x7c] sm:$0xf] %vm984, %v887
  %1017 = vst.msk [vmem:[%s3 + $0x80] sm:$0xf] %vm984, %v888
  %1018 = vst.msk [vmem:[%s3 + $0x84] sm:$0xf] %vm984, %v889
  %1019 = vst.msk [vmem:[%s3 + $0x88] sm:$0xf] %vm984, %v890
  %1020 = vst.msk [vmem:[%s3 + $0x8c] sm:$0xf] %vm984, %v891
  %1021 = vst.msk [vmem:[%s3 + $0x90] sm:$0xf] %vm984, %v892
  %1022 = vst.msk [vmem:[%s3 + $0x94] sm:$0xf] %vm984, %v893
  %1023 = vst.msk [vmem:[%s3 + $0x98] sm:$0xf] %vm984, %v894
  %1024 = vst.msk [vmem:[%s3 + $0x9c] sm:$0xf] %vm984, %v895
  %1025 = vst.msk [vmem:[%s3 + $0xa0] sm:$0xf] %vm984, %v896
  %1026 = vst.msk [vmem:[%s3 + $0xa4] sm:$0xf] %vm984, %v897
  %1027 = vst.msk [vmem:[%s3 + $0xa8] sm:$0xf] %vm984, %v898
  %1028 = vst.msk [vmem:[%s3 + $0xac] sm:$0xf] %vm984, %v899
  %1029 = vst.msk [vmem:[%s3 + $0xb0] sm:$0xf] %vm984, %v900
  %1030 = vst.msk [vmem:[%s3 + $0xb4] sm:$0xf] %vm984, %v901
  %1031 = vst.msk [vmem:[%s3 + $0xb8] sm:$0xf] %vm984, %v902
  %1032 = vst.msk [vmem:[%s3 + $0xbc] sm:$0xf] %vm984, %v903
  %1033 = vst.msk [vmem:[%s3 + $0xc0] sm:$0xf] %vm984, %v904
  %1034 = vst.msk [vmem:[%s3 + $0xc4] sm:$0xf] %vm984, %v905
  %1035 = vst.msk [vmem:[%s3 + $0xc8] sm:$0xf] %vm984, %v906
  %1036 = vst.msk [vmem:[%s3 + $0xcc] sm:$0xf] %vm984, %v907
  %1037 = vst.msk [vmem:[%s3 + $0xd0] sm:$0xf] %vm984, %v908
  %1038 = vst.msk [vmem:[%s3 + $0xd4] sm:$0xf] %vm984, %v909
  %1039 = vst.msk [vmem:[%s3 + $0xd8] sm:$0xf] %vm984, %v910
  %1040 = vst.msk [vmem:[%s3 + $0xdc] sm:$0xf] %vm984, %v911
  %1041 = vst.msk [vmem:[%s3 + $0xe0] sm:$0xf] %vm984, %v912
  %1042 = vst.msk [vmem:[%s3 + $0xe4] sm:$0xf] %vm984, %v913
  %1043 = vst.msk [vmem:[%s3 + $0xe8] sm:$0xf] %vm984, %v914
  %1044 = vst.msk [vmem:[%s3 + $0xec] sm:$0xf] %vm984, %v915
  %1045 = vst.msk [vmem:[%s3 + $0xf0] sm:$0xf] %vm984, %v916
  %1046 = vst.msk [vmem:[%s3 + $0xf4] sm:$0xf] %vm984, %v917
  %1047 = vst.msk [vmem:[%s3 + $0xf8] sm:$0xf] %vm984, %v918
  %1048 = vst.msk [vmem:[%s3 + $0xfc] sm:$0xf] %vm984, %v919
  // Predicated region
  $region14: #{bottleneck_forward.2} parent=0 // pred_check
    _
  $region15: #{bottleneck_forward.2} parent=0 // pred_check_branch
    %1050 = sbr.rel (0) target = $region17
  $region16: #{bottleneck_forward.2} parent=0 // pred_region
    _
  $region17: #{bottleneck_forward.2} parent=0 // pred_fallthru
    _
  // Predicated region
  $region18: #{bottleneck_forward.2} parent=0 // pred_check
    _
  $region19: #{bottleneck_forward.2} parent=0 // pred_check_branch
    %1052 = sbr.rel (0) target = $region21
  $region20: #{bottleneck_forward.2} parent=0 // pred_region
    _
  $region21: #{bottleneck_forward.2} parent=0 // pred_fallthru
    _

// kernel: bottleneck_forward.3
$region0: #{bottleneck_forward.3}
  #allocation0 [shape = 'u32[]', space=smem, size = 0x4, offset = 0x4, fixed_abs, tag = 'smem constant byte address 0x4 - core index']
  #allocation1 [shape = 'u32[144,128]{1,0:T(1,128)}', space=vmem, size = 0x12000, scoped, tag = 'internal scratch']
  %s0 = inlined_call_operand.vmem [shape: bf16[2,160,32], index: 0, kind: input, shape index: {}]
  %s1 = inlined_call_operand.vmem [shape: bf16[2,160,32], index: 1, kind: input, shape index: {}]
  %s2 = inlined_call_operand.vmem [shape: bf16[2,160,32], index: 2, kind: input, shape index: {}]
  %s3 = inlined_call_operand.vmem [shape: bf16[2,160,32], index: 3, kind: input, shape index: {}]
  %s4 = inlined_call_operand.vmem [shape: bf16[9,32,32], index: 4, kind: input, shape index: {}]
  %s5 = inlined_call_operand.vmem [shape: f32[1,32], index: 5, kind: input, shape index: {}]
  %s6 = inlined_call_operand.vmem [shape: bf16[32,128], index: 6, kind: input, shape index: {}]
  %s7 = inlined_call_operand.vmem [shape: f32[1,128], index: 7, kind: input, shape index: {}]
  %s8 = inlined_call_operand.vmem [shape: bf16[2,128,64], index: 8, kind: input, shape index: {}]
  %s9 = inlined_call_operand.vmem [shape: bf16[64,128], index: 9, kind: input, shape index: {}]
  %s10 = inlined_call_operand.vmem [shape: bf16[2,128,128], index: 10, kind: output, shape index: {}]
  %s11 = sld [smem:[#allocation0]]
  $region73: #{bottleneck_forward.3} parent=0
    _
  %s13 = ssub.s32 1, %s11
  %s14 = scalar_select 0, %s13, %s11
  loop: start=0, step=1, limit=4
  $region2: #{bottleneck_forward.3} parent=0 // loop_pre_header
    _
  $region3: #{bottleneck_forward.3} parent=0 // loop_header
    %s16 = sphi 0, %s20
    %p17 = scmp.ge.s32.totalorder %s16, 4
    %s26 = sphi 0, %s28
    %s29 = sphi 0, %s26
    %s30 = sphi 0, %s29
    %s46 = sphi 0, %s30
    %s52 = sphi 0, %s54
    %s55 = sphi 0, %s52
    %s56 = sphi 0, %s55
    %s72 = sphi 0, %s56
    %s78 = sphi 0, %s80
    %s81 = sphi 0, %s78
    %s82 = sphi 0, %s81
    %s98 = sphi 0, %s82
    %s104 = sphi 0, %s106
    %s107 = sphi 0, %s104
    %s108 = sphi 0, %s107
    %s124 = sphi 0, %s108
    %s128 = sphi 0, %s128
    %s130 = sphi 0, %s128
    %s131 = sphi 0, %s130
    %s145 = sphi 0, %s131
    %s149 = sphi 0, %s149
    %s151 = sphi 0, %s149
    %s152 = sphi 0, %s151
    %s166 = sphi 0, %s152
    %s170 = sphi 0, %s170
    %s172 = sphi 0, %s170
    %s173 = sphi 0, %s172
    %s187 = sphi 0, %s173
    %s191 = sphi 0, %s191
    %s193 = sphi 0, %s191
    %s194 = sphi 0, %s193
    %s208 = sphi 0, %s194
    %s214 = sphi 0, %s216
    %s217 = sphi 0, %s214
    %s218 = sphi 0, %s217
    %s234 = sphi 0, %s218
    %s238 = sphi 0, %s238
    %s240 = sphi 0, %s238
    %s241 = sphi 0, %s240
    %s255 = sphi 0, %s241
    %s261 = sphi 0, %s263
    %s264 = sphi 0, %s261
    %s265 = sphi 0, %s264
    %s281 = sphi 0, %s265
  $region4: #{bottleneck_forward.3} parent=0 // loop_header_branch
    %19 = sbr.rel (%p17) target = $region8
  $region5: #{bottleneck_forward.3} parent=0 // loop_body
    %s21 = ssub.s32 %s16, 1
    %s22 = ssub.s32 %s16, 2
    %s23 = sadd.s32 %s16, 1
    %s24 = ssub.s32 %s16, %s23
    %p25 = scmp.eq.s32.totalorder %s24, 0
    %s27 = sadd.s32 %s26, 1
    %s28 = scalar_select %p25, %s26, %s27
    %p31 = pneg %p25
    %p32 = scmp.eq.s32.totalorder %s16, 1
    %p33 = por %p31, %p32
    %p34 = scmp.ne.s32.totalorder %s26, %s29
    %p35 = scmp.eq.s32.totalorder %s16, 0
    %p36 = por %p34, %p35
    %p37 = scmp.ne.s32.totalorder %s26, %s29
    %p38 = scmp.eq.s32.totalorder %s21, 1
    %p39 = por %p37, %p38
    %p40 = scmp.ne.s32.totalorder %s29, %s30
    %p41 = scmp.eq.s32.totalorder %s21, 0
    %p42 = por %p40, %p41
    %p43 = scmp.ne.s32.totalorder %s29, %s30
    %p44 = scmp.eq.s32.totalorder %s22, 1
    %p45 = por %p43, %p44
    %p47 = scmp.ne.s32.totalorder %s30, %s46
    %p48 = scmp.eq.s32.totalorder %s22, 0
    %p49 = por %p47, %p48
    %s50 = ssub.s32 %s16, %s23
    %p51 = scmp.eq.s32.totalorder %s50, 0
    %s53 = sadd.s32 %s52, 1
    %s54 = scalar_select %p51, %s52, %s53
    %p57 = pneg %p51
    %p58 = scmp.eq.s32.totalorder %s16, 1
    %p59 = por %p57, %p58
    %p60 = scmp.ne.s32.totalorder %s52, %s55
    %p61 = scmp.eq.s32.totalorder %s16, 0
    %p62 = por %p60, %p61
    %p63 = scmp.ne.s32.totalorder %s52, %s55
    %p64 = scmp.eq.s32.totalorder %s21, 1
    %p65 = por %p63, %p64
    %p66 = scmp.ne.s32.totalorder %s55, %s56
    %p67 = scmp.eq.s32.totalorder %s21, 0
    %p68 = por %p66, %p67
    %p69 = scmp.ne.s32.totalorder %s55, %s56
    %p70 = scmp.eq.s32.totalorder %s22, 1
    %p71 = por %p69, %p70
    %p73 = scmp.ne.s32.totalorder %s56, %s72
    %p74 = scmp.eq.s32.totalorder %s22, 0
    %p75 = por %p73, %p74
    %s76 = ssub.s32 %s16, %s23
    %p77 = scmp.eq.s32.totalorder %s76, 0
    %s79 = sadd.s32 %s78, 1
    %s80 = scalar_select %p77, %s78, %s79
    %p83 = pneg %p77
    %p84 = scmp.eq.s32.totalorder %s16, 1
    %p85 = por %p83, %p84
    %p86 = scmp.ne.s32.totalorder %s78, %s81
    %p87 = scmp.eq.s32.totalorder %s16, 0
    %p88 = por %p86, %p87
    %p89 = scmp.ne.s32.totalorder %s78, %s81
    %p90 = scmp.eq.s32.totalorder %s21, 1
    %p91 = por %p89, %p90
    %p92 = scmp.ne.s32.totalorder %s81, %s82
    %p93 = scmp.eq.s32.totalorder %s21, 0
    %p94 = por %p92, %p93
    %p95 = scmp.ne.s32.totalorder %s81, %s82
    %p96 = scmp.eq.s32.totalorder %s22, 1
    %p97 = por %p95, %p96
    %p99 = scmp.ne.s32.totalorder %s82, %s98
    %p100 = scmp.eq.s32.totalorder %s22, 0
    %p101 = por %p99, %p100
    %s102 = ssub.s32 %s16, %s23
    %p103 = scmp.eq.s32.totalorder %s102, 0
    %s105 = sadd.s32 %s104, 1
    %s106 = scalar_select %p103, %s104, %s105
    %p109 = pneg %p103
    %p110 = scmp.eq.s32.totalorder %s16, 1
    %p111 = por %p109, %p110
    %p112 = scmp.ne.s32.totalorder %s104, %s107
    %p113 = scmp.eq.s32.totalorder %s16, 0
    %p114 = por %p112, %p113
    %p115 = scmp.ne.s32.totalorder %s104, %s107
    %p116 = scmp.eq.s32.totalorder %s21, 1
    %p117 = por %p115, %p116
    %p118 = scmp.ne.s32.totalorder %s107, %s108
    %p119 = scmp.eq.s32.totalorder %s21, 0
    %p120 = por %p118, %p119
    %p121 = scmp.ne.s32.totalorder %s107, %s108
    %p122 = scmp.eq.s32.totalorder %s22, 1
    %p123 = por %p121, %p122
    %p125 = scmp.ne.s32.totalorder %s108, %s124
    %p126 = scmp.eq.s32.totalorder %s22, 0
    %p127 = por %p125, %p126
    %s129 = sadd.s32 %s128, 1
    %p132 = scmp.eq.s32.totalorder %s16, 1
    %p133 = scmp.ne.s32.totalorder %s128, %s130
    %p134 = scmp.eq.s32.totalorder %s16, 0
    %p135 = por %p133, %p134
    %p136 = scmp.ne.s32.totalorder %s128, %s130
    %p137 = scmp.eq.s32.totalorder %s21, 1
    %p138 = por %p136, %p137
    %p139 = scmp.ne.s32.totalorder %s130, %s131
    %p140 = scmp.eq.s32.totalorder %s21, 0
    %p141 = por %p139, %p140
    %p142 = scmp.ne.s32.totalorder %s130, %s131
    %p143 = scmp.eq.s32.totalorder %s22, 1
    %p144 = por %p142, %p143
    %p146 = scmp.ne.s32.totalorder %s131, %s145
    %p147 = scmp.eq.s32.totalorder %s22, 0
    %p148 = por %p146, %p147
    %s150 = sadd.s32 %s149, 1
    %p153 = scmp.eq.s32.totalorder %s16, 1
    %p154 = scmp.ne.s32.totalorder %s149, %s151
    %p155 = scmp.eq.s32.totalorder %s16, 0
    %p156 = por %p154, %p155
    %p157 = scmp.ne.s32.totalorder %s149, %s151
    %p158 = scmp.eq.s32.totalorder %s21, 1
    %p159 = por %p157, %p158
    %p160 = scmp.ne.s32.totalorder %s151, %s152
    %p161 = scmp.eq.s32.totalorder %s21, 0
    %p162 = por %p160, %p161
    %p163 = scmp.ne.s32.totalorder %s151, %s152
    %p164 = scmp.eq.s32.totalorder %s22, 1
    %p165 = por %p163, %p164
    %p167 = scmp.ne.s32.totalorder %s152, %s166
    %p168 = scmp.eq.s32.totalorder %s22, 0
    %p169 = por %p167, %p168
    %s171 = sadd.s32 %s170, 1
    %p174 = scmp.eq.s32.totalorder %s16, 1
    %p175 = scmp.ne.s32.totalorder %s170, %s172
    %p176 = scmp.eq.s32.totalorder %s16, 0
    %p177 = por %p175, %p176
    %p178 = scmp.ne.s32.totalorder %s170, %s172
    %p179 = scmp.eq.s32.totalorder %s21, 1
    %p180 = por %p178, %p179
    %p181 = scmp.ne.s32.totalorder %s172, %s173
    %p182 = scmp.eq.s32.totalorder %s21, 0
    %p183 = por %p181, %p182
    %p184 = scmp.ne.s32.totalorder %s172, %s173
    %p185 = scmp.eq.s32.totalorder %s22, 1
    %p186 = por %p184, %p185
    %p188 = scmp.ne.s32.totalorder %s173, %s187
    %p189 = scmp.eq.s32.totalorder %s22, 0
    %p190 = por %p188, %p189
    %s192 = sadd.s32 %s191, 1
    %p195 = scmp.eq.s32.totalorder %s16, 1
    %p196 = scmp.ne.s32.totalorder %s191, %s193
    %p197 = scmp.eq.s32.totalorder %s16, 0
    %p198 = por %p196, %p197
    %p199 = scmp.ne.s32.totalorder %s191, %s193
    %p200 = scmp.eq.s32.totalorder %s21, 1
    %p201 = por %p199, %p200
    %p202 = scmp.ne.s32.totalorder %s193, %s194
    %p203 = scmp.eq.s32.totalorder %s21, 0
    %p204 = por %p202, %p203
    %p205 = scmp.ne.s32.totalorder %s193, %s194
    %p206 = scmp.eq.s32.totalorder %s22, 1
    %p207 = por %p205, %p206
    %p209 = scmp.ne.s32.totalorder %s194, %s208
    %p210 = scmp.eq.s32.totalorder %s22, 0
    %p211 = por %p209, %p210
    %s212 = ssub.s32 %s16, %s23
    %p213 = scmp.eq.s32.totalorder %s212, 0
    %s215 = sadd.s32 %s214, 1
    %s216 = scalar_select %p213, %s214, %s215
    %p219 = pneg %p213
    %p220 = scmp.eq.s32.totalorder %s16, 1
    %p221 = por %p219, %p220
    %p222 = scmp.ne.s32.totalorder %s214, %s217
    %p223 = scmp.eq.s32.totalorder %s16, 0
    %p224 = por %p222, %p223
    %p225 = scmp.ne.s32.totalorder %s214, %s217
    %p226 = scmp.eq.s32.totalorder %s21, 1
    %p227 = por %p225, %p226
    %p228 = scmp.ne.s32.totalorder %s217, %s218
    %p229 = scmp.eq.s32.totalorder %s21, 0
    %p230 = por %p228, %p229
    %p231 = scmp.ne.s32.totalorder %s217, %s218
    %p232 = scmp.eq.s32.totalorder %s22, 1
    %p233 = por %p231, %p232
    %p235 = scmp.ne.s32.totalorder %s218, %s234
    %p236 = scmp.eq.s32.totalorder %s22, 0
    %p237 = por %p235, %p236
    %s239 = sadd.s32 %s238, 1
    %p242 = scmp.eq.s32.totalorder %s16, 1
    %p243 = scmp.ne.s32.totalorder %s238, %s240
    %p244 = scmp.eq.s32.totalorder %s16, 0
    %p245 = por %p243, %p244
    %p246 = scmp.ne.s32.totalorder %s238, %s240
    %p247 = scmp.eq.s32.totalorder %s21, 1
    %p248 = por %p246, %p247
    %p249 = scmp.ne.s32.totalorder %s240, %s241
    %p250 = scmp.eq.s32.totalorder %s21, 0
    %p251 = por %p249, %p250
    %p252 = scmp.ne.s32.totalorder %s240, %s241
    %p253 = scmp.eq.s32.totalorder %s22, 1
    %p254 = por %p252, %p253
    %p256 = scmp.ne.s32.totalorder %s241, %s255
    %p257 = scmp.eq.s32.totalorder %s22, 0
    %p258 = por %p256, %p257
    %s259 = ssub.s32 %s16, %s23
    %p260 = scmp.eq.s32.totalorder %s259, 0
    %s262 = sadd.s32 %s261, 1
    %s263 = scalar_select %p260, %s261, %s262
    %p266 = pneg %p260
    %p267 = scmp.eq.s32.totalorder %s16, 1
    %p268 = por %p266, %p267
    %p269 = scmp.ne.s32.totalorder %s261, %s264
    %p270 = scmp.eq.s32.totalorder %s16, 0
    %p271 = por %p269, %p270
    %p272 = scmp.ne.s32.totalorder %s261, %s264
    %p273 = scmp.eq.s32.totalorder %s21, 1
    %p274 = por %p272, %p273
    %p275 = scmp.ne.s32.totalorder %s264, %s265
    %p276 = scmp.eq.s32.totalorder %s21, 0
    %p277 = por %p275, %p276
    %p278 = scmp.ne.s32.totalorder %s264, %s265
    %p279 = scmp.eq.s32.totalorder %s22, 1
    %p280 = por %p278, %p279
    %p282 = scmp.ne.s32.totalorder %s265, %s281
    %p283 = scmp.eq.s32.totalorder %s22, 0
    %p284 = por %p282, %p283
    %p285 = scmp.le.s32.totalorder 1, %s16
    %p286 = scmp.lt.s32.totalorder %s16, 3
    %p287 = pnand %p285, %p286
    %p288 = pneg %p287
    // Predicated region
    $region9: #{bottleneck_forward.3} parent=5 // pred_check
      _
    $region10: #{bottleneck_forward.3} parent=5 // pred_check_branch
      %290 = sbr.rel (%p287) target = $region12
    $region11: #{bottleneck_forward.3} parent=5 // pred_region
      %s291 = ssub.s32 %s16, 1
      // Predicated region
      $region13: #{bottleneck_forward.3} parent=11 // pred_check
        %p292 = pneg %p141
      $region14: #{bottleneck_forward.3} parent=11 // pred_check_branch
        %294 = sbr.rel (%p292) target = $region16
      $region15: #{bottleneck_forward.3} parent=11 // pred_region
        _
      $region16: #{bottleneck_forward.3} parent=11 // pred_fallthru
        _
      // Predicated region
      $region17: #{bottleneck_forward.3} parent=11 // pred_check
        %p295 = pneg %p162
      $region18: #{bottleneck_forward.3} parent=11 // pred_check_branch
        %297 = sbr.rel (%p295) target = $region20
      $region19: #{bottleneck_forward.3} parent=11 // pred_region
        _
      $region20: #{bottleneck_forward.3} parent=11 // pred_fallthru
        _
      // Predicated region
      $region21: #{bottleneck_forward.3} parent=11 // pred_check
        %p298 = pneg %p183
      $region22: #{bottleneck_forward.3} parent=11 // pred_check_branch
        %300 = sbr.rel (%p298) target = $region24
      $region23: #{bottleneck_forward.3} parent=11 // pred_region
        _
      $region24: #{bottleneck_forward.3} parent=11 // pred_fallthru
        _
      // Predicated region
      $region25: #{bottleneck_forward.3} parent=11 // pred_check
        %p301 = pneg %p204
      $region26: #{bottleneck_forward.3} parent=11 // pred_check_branch
        %303 = sbr.rel (%p301) target = $region28
      $region27: #{bottleneck_forward.3} parent=11 // pred_region
        _
      $region28: #{bottleneck_forward.3} parent=11 // pred_fallthru
        _
      // Predicated region
      $region29: #{bottleneck_forward.3} parent=11 // pred_check
        %p304 = pneg %p251
      $region30: #{bottleneck_forward.3} parent=11 // pred_check_branch
        %306 = sbr.rel (%p304) target = $region32
      $region31: #{bottleneck_forward.3} parent=11 // pred_region
        _
      $region32: #{bottleneck_forward.3} parent=11 // pred_fallthru
        _
    $region12: #{bottleneck_forward.3} parent=5 // pred_fallthru
      _
    %p307 = scmp.lt.s32.totalorder %s16, 2
    // Predicated region
    $region33: #{bottleneck_forward.3} parent=5 // pred_check
      %p308 = pneg %p307
    $region34: #{bottleneck_forward.3} parent=5 // pred_check_branch
      %310 = sbr.rel (%p308) target = $region36
    $region35: #{bottleneck_forward.3} parent=5 // pred_region
      // Predicated region
      $region37: #{bottleneck_forward.3} parent=35 // pred_check
        %p311 = pneg %p36
      $region38: #{bottleneck_forward.3} parent=35 // pred_check_branch
        %313 = sbr.rel (%p311) target = $region40
      $region39: #{bottleneck_forward.3} parent=35 // pred_region
        %p314 = scmp.lt.s32.totalorder %s16, 1
        %s315 = scalar_select %p314, %s16, 1
        %s316 = smul.addr %s315, 20
        %s317 = smul.addr %s316, 4
        %s318 = scalar_lea.vmem %s0, %s317
      $region40: #{bottleneck_forward.3} parent=35 // pred_fallthru
        _
      // Predicated region
      $region41: #{bottleneck_forward.3} parent=35 // pred_check
        %p319 = pneg %p62
      $region42: #{bottleneck_forward.3} parent=35 // pred_check_branch
        %321 = sbr.rel (%p319) target = $region44
      $region43: #{bottleneck_forward.3} parent=35 // pred_region
        %p322 = scmp.lt.s32.totalorder %s16, 1
        %s323 = scalar_select %p322, %s16, 1
        %s324 = smul.addr %s323, 20
        %s325 = smul.addr %s324, 4
        %s326 = scalar_lea.vmem %s1, %s325
      $region44: #{bottleneck_forward.3} parent=35 // pred_fallthru
        _
      // Predicated region
      $region45: #{bottleneck_forward.3} parent=35 // pred_check
        %p327 = pneg %p88
      $region46: #{bottleneck_forward.3} parent=35 // pred_check_branch
        %329 = sbr.rel (%p327) target = $region48
      $region47: #{bottleneck_forward.3} parent=35 // pred_region
        %p330 = scmp.lt.s32.totalorder %s16, 1
        %s331 = scalar_select %p330, %s16, 1
        %s332 = smul.addr %s331, 20
        %s333 = smul.addr %s332, 4
        %s334 = scalar_lea.vmem %s2, %s333
      $region48: #{bottleneck_forward.3} parent=35 // pred_fallthru
        _
      // Predicated region
      $region49: #{bottleneck_forward.3} parent=35 // pred_check
        %p335 = pneg %p114
      $region50: #{bottleneck_forward.3} parent=35 // pred_check_branch
        %337 = sbr.rel (%p335) target = $region52
      $region51: #{bottleneck_forward.3} parent=35 // pred_region
        %p338 = scmp.lt.s32.totalorder %s16, 1
        %s339 = scalar_select %p338, %s16, 1
        %s340 = smul.addr %s339, 20
        %s341 = smul.addr %s340, 4
        %s342 = scalar_lea.vmem %s3, %s341
      $region52: #{bottleneck_forward.3} parent=35 // pred_fallthru
        _
      // Predicated region
      $region53: #{bottleneck_forward.3} parent=35 // pred_check
        %p343 = pneg %p224
      $region54: #{bottleneck_forward.3} parent=35 // pred_check_branch
        %345 = sbr.rel (%p343) target = $region56
      $region55: #{bottleneck_forward.3} parent=35 // pred_region
        %p346 = scmp.lt.s32.totalorder %s16, 1
        %s347 = scalar_select %p346, %s16, 1
        %s348 = smul.addr %s347, 16
        %s349 = smul.addr %s348, 4
        %s350 = scalar_lea.vmem %s8, %s349
      $region56: #{bottleneck_forward.3} parent=35 // pred_fallthru
        _
    $region36: #{bottleneck_forward.3} parent=5 // pred_fallthru
      _
    %p351 = scmp.le.s32.totalorder 1, %s16
    %p352 = scmp.lt.s32.totalorder %s16, 3
    %p353 = pnand %p351, %p352
    %p354 = pneg %p353
    // Predicated region
    $region57: #{bottleneck_forward.3} parent=5 // pred_check
      _
    $region58: #{bottleneck_forward.3} parent=5 // pred_check_branch
      %356 = sbr.rel (%p353) target = $region60
    $region59: #{bottleneck_forward.3} parent=5 // pred_region
      %s357 = ssub.s32 %s16, 1
      %p358 = scmp.lt.s32.totalorder %s21, 1
      %s359 = scalar_select %p358, %s21, 1
      %s360 = smul.addr %s359, 20
      %s361 = smul.addr %s360, 4
      %s362 = scalar_lea.vmem %s0, %s361
      %p363 = pneg %p42
      %p364 = pneg %p39
      %p365 = scmp.lt.s32.totalorder %s21, 1
      %s366 = scalar_select %p365, %s21, 1
      %s367 = smul.addr %s366, 20
      %s368 = smul.addr %s367, 4
      %s369 = scalar_lea.vmem %s1, %s368
      %p370 = pneg %p68
      %p371 = pneg %p65
      %p372 = scmp.lt.s32.totalorder %s21, 1
      %s373 = scalar_select %p372, %s21, 1
      %s374 = smul.addr %s373, 20
      %s375 = smul.addr %s374, 4
      %s376 = scalar_lea.vmem %s2, %s375
      %p377 = pneg %p94
      %p378 = pneg %p91
      %p379 = scmp.lt.s32.totalorder %s21, 1
      %s380 = scalar_select %p379, %s21, 1
      %s381 = smul.addr %s380, 20
      %s382 = smul.addr %s381, 4
      %s383 = scalar_lea.vmem %s3, %s382
      %p384 = pneg %p120
      %p385 = pneg %p117
      %p386 = pneg %p141
      %p387 = pneg %p138
      %p388 = pneg %p162
      %p389 = pneg %p159
      %p390 = pneg %p183
      %p391 = pneg %p180
      %p392 = pneg %p204
      %p393 = pneg %p201
      %p394 = scmp.lt.s32.totalorder %s21, 1
      %s395 = scalar_select %p394, %s21, 1
      %s396 = smul.addr %s395, 16
      %s397 = smul.addr %s396, 4
      %s398 = scalar_lea.vmem %s8, %s397
      %p399 = pneg %p230
      %p400 = pneg %p227
      %p401 = pneg %p251
      %p402 = pneg %p248
      %p403 = pneg %p277
      %p404 = pneg %p274
      %p405 = scmp.lt.s32.totalorder %s21, 1
      %s406 = scalar_select %p405, %s21, 1
      %s407 = smul.addr %s406, 16
      %s408 = smul.addr %s407, 4
      %s409 = scalar_lea.vmem %s10, %s408
      %p410 = scmp.lt.s32.totalorder %s21, 1
      %s411 = scalar_select %p410, %s21, 1
      %s412 = smul.addr %s411, 20
      %s413 = smul.addr %s412, 4
      %s414 = scalar_lea.vmem %s0, %s413
      %p415 = scmp.lt.s32.totalorder %s21, 1
      %s416 = scalar_select %p415, %s21, 1
      %s417 = smul.addr %s416, 20
      %s418 = smul.addr %s417, 4
      %s419 = scalar_lea.vmem %s1, %s418
      %p420 = scmp.lt.s32.totalorder %s21, 1
      %s421 = scalar_select %p420, %s21, 1
      %s422 = smul.addr %s421, 20
      %s423 = smul.addr %s422, 4
      %s424 = scalar_lea.vmem %s2, %s423
      %p425 = scmp.lt.s32.totalorder %s21, 1
      %s426 = scalar_select %p425, %s21, 1
      %s427 = smul.addr %s426, 20
      %s428 = smul.addr %s427, 4
      %s429 = scalar_lea.vmem %s3, %s428
      %p430 = scmp.lt.s32.totalorder %s21, 1
      %s431 = scalar_select %p430, %s21, 1
      %s432 = smul.addr %s431, 16
      %s433 = smul.addr %s432, 4
      %s434 = scalar_lea.vmem %s8, %s433
      %p435 = scmp.lt.s32.totalorder %s21, 1
      %s436 = scalar_select %p435, %s21, 1
      %s437 = smul.addr %s436, 16
      %s438 = smul.addr %s437, 4
      %s439 = scalar_lea.vmem %s10, %s438
      %v441 = vld [vmem:[%s414] sm:$0xf]
      %v442 = vld [vmem:[%s414 + $0x4] sm:$0xf]
      %v443 = vld [vmem:[%s414 + $0x8] sm:$0xf]
      %v444 = vld [vmem:[%s414 + $0xc] sm:$0xf]
      %v445 = vld [vmem:[%s414 + $0x10] sm:$0xf]
      %v446 = vld [vmem:[%s414 + $0x14] sm:$0xf]
      %v447 = vld [vmem:[%s414 + $0x18] sm:$0xf]
      %v448 = vld [vmem:[%s414 + $0x1c] sm:$0xf]
      %v449 = vld [vmem:[%s414 + $0x20] sm:$0xf]
      %v450 = vld [vmem:[%s414 + $0x24] sm:$0xf]
      %v451 = vld [vmem:[%s414 + $0x28] sm:$0xf]
      %v452 = vld [vmem:[%s414 + $0x2c] sm:$0xf]
      %v453 = vld [vmem:[%s414 + $0x30] sm:$0xf]
      %v454 = vld [vmem:[%s414 + $0x34] sm:$0xf]
      %v455 = vld [vmem:[%s414 + $0x38] sm:$0xf]
      %v456 = vld [vmem:[%s414 + $0x3c] sm:$0xf]
      %v457 = vld [vmem:[%s4] sm:$0xf]
      %v458 = vld [vmem:[%s4 + $0x4] sm:$0xf]
      %v459 = vld [vmem:[%s4 + $0x8] sm:$0xf]
      %v460 = vld [vmem:[%s4 + $0xc] sm:$0xf]
      %v461 = vld [vmem:[%s419] sm:$0xf]
      %v462 = vld [vmem:[%s419 + $0x4] sm:$0xf]
      %v463 = vld [vmem:[%s419 + $0x8] sm:$0xf]
      %v464 = vld [vmem:[%s419 + $0xc] sm:$0xf]
      %v465 = vld [vmem:[%s419 + $0x10] sm:$0xf]
      %v466 = vld [vmem:[%s419 + $0x14] sm:$0xf]
      %v467 = vld [vmem:[%s419 + $0x18] sm:$0xf]
      %v468 = vld [vmem:[%s419 + $0x1c] sm:$0xf]
      %v469 = vld [vmem:[%s419 + $0x20] sm:$0xf]
      %v470 = vld [vmem:[%s419 + $0x24] sm:$0xf]
      %v471 = vld [vmem:[%s419 + $0x28] sm:$0xf]
      %v472 = vld [vmem:[%s419 + $0x2c] sm:$0xf]
      %v473 = vld [vmem:[%s419 + $0x30] sm:$0xf]
      %v474 = vld [vmem:[%s419 + $0x34] sm:$0xf]
      %v475 = vld [vmem:[%s419 + $0x38] sm:$0xf]
      %v476 = vld [vmem:[%s419 + $0x3c] sm:$0xf]
      %s477 = scalar_lea.vmem %s4, 16
      %v478 = vld [vmem:[%s477] sm:$0xf]
      %v479 = vld [vmem:[%s477 + $0x4] sm:$0xf]
      %v480 = vld [vmem:[%s477 + $0x8] sm:$0xf]
      %v481 = vld [vmem:[%s477 + $0xc] sm:$0xf]
      %v498 = vunpack.c.l.b16 %v461
      %v499 = vunpack.c.l.b16 %v462
      %v500 = vunpack.c.l.b16 %v463
      %v501 = vunpack.c.l.b16 %v464
      %v502 = vunpack.c.l.b16 %v465
      %v503 = vunpack.c.l.b16 %v466
      %v504 = vunpack.c.l.b16 %v467
      %v505 = vunpack.c.l.b16 %v468
      %v506 = vunpack.c.l.b16 %v469
      %v507 = vunpack.c.l.b16 %v470
      %v508 = vunpack.c.l.b16 %v471
      %v509 = vunpack.c.l.b16 %v472
      %v510 = vunpack.c.l.b16 %v473
      %v511 = vunpack.c.l.b16 %v474
      %v512 = vunpack.c.l.b16 %v475
      %v513 = vunpack.c.l.b16 %v476
      %v514 = vpack.c.b16 %v499, %v498
      %v515 = vpack.c.b16 %v501, %v500
      %v516 = vpack.c.b16 %v503, %v502
      %v517 = vpack.c.b16 %v505, %v504
      %v518 = vpack.c.b16 %v507, %v506
      %v519 = vpack.c.b16 %v509, %v508
      %v520 = vpack.c.b16 %v511, %v510
      %v521 = vpack.c.b16 %v513, %v512
      %v526 = vunpack.c.l.b16 %v478
      %v527 = vunpack.c.l.b16 %v479
      %v528 = vunpack.c.l.b16 %v480
      %v529 = vunpack.c.l.b16 %v481
      %v530 = vpack.c.b16 %v527, %v526
      %v531 = vpack.c.b16 %v529, %v528
      %vm534 = vcmask 261120
      %v536 = vsel %vm534, %v514, 0
      %v539 = vsel %vm534, %v515, 0
      %v542 = vsel %vm534, %v516, 0
      %v545 = vsel %vm534, %v517, 0
      %v548 = vsel %vm534, %v518, 0
      %v551 = vsel %vm534, %v519, 0
      %v554 = vsel %vm534, %v520, 0
      %v557 = vsel %vm534, %v521, 0
      %559 = vmatprep.subr.bf16.mxu0 0
      %560 = vmatpush1.bf16.msra.mxu0 %v530
      %561 = vmatprep.subr.bf16.mxu0 0
      %562 = vmatpush1.bf16.msra.mxu0 %v531
      %563 = vmatprep.subr.bf16.mxu0 0
      %564 = vmatpush1.bf16.msra.mxu0 0
      %565 = vmatprep.subr.bf16.mxu0 0
      %566 = vmatpush1.bf16.msra.mxu0 0
      %567 = vmatprep.subr.bf16.mxu0 0
      %568 = vmatpush1.bf16.msra.mxu0 0
      %569 = vmatprep.subr.bf16.mxu0 0
      %570 = vmatpush1.bf16.msra.mxu0 0
      %571 = vmatprep.subr.bf16.mxu0 0
      %572 = vmatpush1.bf16.msra.mxu0 0
      %573 = vmatprep.subr.bf16.mxu0 0
      %574 = vmatpush1.bf16.msra.mxu0 0
      %575 = vmatprep.subr.bf16.mxu0 0
      %576 = vmatpush1.bf16.msra.mxu0 0
      %577 = vmatprep.subr.bf16.mxu0 0
      %578 = vmatpush1.bf16.msra.mxu0 0
      %579 = vmatprep.subr.bf16.mxu0 0
      %580 = vmatpush1.bf16.msra.mxu0 0
      %581 = vmatprep.subr.bf16.mxu0 0
      %582 = vmatpush1.bf16.msra.mxu0 0
      %583 = vmatprep.subr.bf16.mxu0 0
      %584 = vmatpush1.bf16.msra.mxu0 0
      %585 = vmatprep.subr.bf16.mxu0 0
      %586 = vmatpush1.bf16.msra.mxu0 0
      %587 = vmatprep.subr.bf16.mxu0 0
      %588 = vmatpush1.bf16.msra.mxu0 0
      %589 = vmatprep.subr.bf16.mxu0 0
      %590 = vmatpush1.bf16.msra.mxu0 0
      %591 = vmatprep.mubr.bf16.mxu0 0
      %592 = vmatmul.mubr.bf16.gmra.mrb[0].mxu0 %v536
      %v593 = vpop.f32.mrb[0].mxu0
      %v594 = vadd.f32 0.0, %v593
      %v595 = vpop.f32.mrb[0].mxu0
      %v596 = vpop.f32.mrb[0].mxu0
      %v597 = vadd.f32 0.0, %v596
      %v598 = vpop.f32.mrb[0].mxu0
      %599 = vmatprep.mubr.bf16.mxu0 0
      %600 = vmatmul.mubr.bf16.gmra.mrb[0].mxu0 %v539
      %v601 = vpop.f32.mrb[0].mxu0
      %v602 = vadd.f32 0.0, %v601
      %v603 = vpop.f32.mrb[0].mxu0
      %v604 = vpop.f32.mrb[0].mxu0
      %v605 = vadd.f32 0.0, %v604
      %v606 = vpop.f32.mrb[0].mxu0
      %607 = vmatprep.mubr.bf16.mxu0 0
      %608 = vmatmul.mubr.bf16.gmra.mrb[0].mxu0 %v542
      %v609 = vpop.f32.mrb[0].mxu0
      %v610 = vadd.f32 0.0, %v609
      %v611 = vpop.f32.mrb[0].mxu0
      %v612 = vpop.f32.mrb[0].mxu0
      %v613 = vadd.f32 0.0, %v612
      %v614 = vpop.f32.mrb[0].mxu0
      %615 = vmatprep.mubr.bf16.mxu0 0
      %616 = vmatmul.mubr.bf16.gmra.mrb[0].mxu0 %v545
      %v617 = vpop.f32.mrb[0].mxu0
      %v618 = vadd.f32 0.0, %v617
      %v619 = vpop.f32.mrb[0].mxu0
      %v620 = vpop.f32.mrb[0].mxu0
      %v621 = vadd.f32 0.0, %v620
      %v622 = vpop.f32.mrb[0].mxu0
      %623 = vmatprep.mubr.bf16.mxu0 0
      %624 = vmatmul.mubr.bf16.gmra.mrb[0].mxu0 %v548
      %v625 = vpop.f32.mrb[0].mxu0
      %v626 = vadd.f32 0.0, %v625
      %v627 = vpop.f32.mrb[0].mxu0
      %v628 = vpop.f32.mrb[0].mxu0
      %v629 = vadd.f32 0.0, %v628
      %v630 = vpop.f32.mrb[0].mxu0
      %631 = vmatprep.mubr.bf16.mxu0 0
      %632 = vmatmul.mubr.bf16.gmra.mrb[0].mxu0 %v551
      %v633 = vpop.f32.mrb[0].mxu0
      %v634 = vadd.f32 0.0, %v633
      %v635 = vpop.f32.mrb[0].mxu0
      %v636 = vpop.f32.mrb[0].mxu0
      %v637 = vadd.f32 0.0, %v636
      %v638 = vpop.f32.mrb[0].mxu0
      %639 = vmatprep.mubr.bf16.mxu0 0
      %640 = vmatmul.mubr.bf16.gmra.mrb[0].mxu0 %v554
      %v641 = vpop.f32.mrb[0].mxu0
      %v642 = vadd.f32 0.0, %v641
      %v643 = vpop.f32.mrb[0].mxu0
      %v644 = vpop.f32.mrb[0].mxu0
      %v645 = vadd.f32 0.0, %v644
      %v646 = vpop.f32.mrb[0].mxu0
      %647 = vmatprep.mubr.bf16.mxu0 0
      %648 = vmatmul.mubr.bf16.gmra.mrb[0].mxu0 %v557
      %v649 = vpop.f32.mrb[0].mxu0
      %v650 = vadd.f32 0.0, %v649
      %v651 = vpop.f32.mrb[0].mxu0
      %v652 = vpop.f32.mrb[0].mxu0
      %v653 = vadd.f32 0.0, %v652
      %v654 = vpop.f32.mrb[0].mxu0
      %655 = vdwg.mxu0
      %v672 = vunpack.c.l.b16 %v441
      %v673 = vunpack.c.l.b16 %v442
      %v674 = vunpack.c.l.b16 %v443
      %v675 = vunpack.c.l.b16 %v444
      %v676 = vunpack.c.l.b16 %v445
      %v677 = vunpack.c.l.b16 %v446
      %v678 = vunpack.c.l.b16 %v447
      %v679 = vunpack.c.l.b16 %v448
      %v680 = vunpack.c.l.b16 %v449
      %v681 = vunpack.c.l.b16 %v450
      %v682 = vunpack.c.l.b16 %v451
      %v683 = vunpack.c.l.b16 %v452
      %v684 = vunpack.c.l.b16 %v453
      %v685 = vunpack.c.l.b16 %v454
      %v686 = vunpack.c.l.b16 %v455
      %v687 = vunpack.c.l.b16 %v456
      %v688 = vpack.c.b16 %v673, %v672
      %v689 = vpack.c.b16 %v675, %v674
      %v690 = vpack.c.b16 %v677, %v676
      %v691 = vpack.c.b16 %v679, %v678
      %v692 = vpack.c.b16 %v681, %v680
      %v693 = vpack.c.b16 %v683, %v682
      %v694 = vpack.c.b16 %v685, %v684
      %v695 = vpack.c.b16 %v687, %v686
      %v700 = vunpack.c.l.b16 %v457
      %v701 = vunpack.c.l.b16 %v458
      %v702 = vunpack.c.l.b16 %v459
      %v703 = vunpack.c.l.b16 %v460
      %v704 = vpack.c.b16 %v701, %v700
      %v705 = vpack.c.b16 %v703, %v702
      %v709 = vsel %vm534, %v688, 0
      %v712 = vsel %vm534, %v689, 0
      %v715 = vsel %vm534, %v690, 0
      %v718 = vsel %vm534, %v691, 0
      %v721 = vsel %vm534, %v692, 0
      %v724 = vsel %vm534, %v693, 0
      %v727 = vsel %vm534, %v694, 0
      %v730 = vsel %vm534, %v695, 0
      %732 = vmatprep.subr.bf16.mxu0 0
      %733 = vmatpush1.bf16.msra.mxu0 %v704
      %734 = vmatprep.subr.bf16.mxu0 0
      %735 = vmatpush1.bf16.msra.mxu0 %v705
      %736 = vmatprep.subr.bf16.mxu0 0
      %737 = vmatpush1.bf16.msra.mxu0 0
      %738 = vmatprep.subr.bf16.mxu0 0
      %739 = vmatpush1.bf16.msra.mxu0 0
      %740 = vmatprep.subr.bf16.mxu0 0
      %741 = vmatpush1.bf16.msra.mxu0 0
      %742 = vmatprep.subr.bf16.mxu0 0
      %743 = vmatpush1.bf16.msra.mxu0 0
      %744 = vmatprep.subr.bf16.mxu0 0
      %745 = vmatpush1.bf16.msra.mxu0 0
      %746 = vmatprep.subr.bf16.mxu0 0
      %747 = vmatpush1.bf16.msra.mxu0 0
      %748 = vmatprep.subr.bf16.mxu0 0
      %749 = vmatpush1.bf16.msra.mxu0 0
      %750 = vmatprep.subr.bf16.mxu0 0
      %751 = vmatpush1.bf16.msra.mxu0 0
      %752 = vmatprep.subr.bf16.mxu0 0
      %753 = vmatpush1.bf16.msra.mxu0 0
      %754 = vmatprep.subr.bf16.mxu0 0
      %755 = vmatpush1.bf16.msra.mxu0 0
      %756 = vmatprep.subr.bf16.mxu0 0
      %757 = vmatpush1.bf16.msra.mxu0 0
      %758 = vmatprep.subr.bf16.mxu0 0
      %759 = vmatpush1.bf16.msra.mxu0 0
      %760 = vmatprep.subr.bf16.mxu0 0
      %761 = vmatpush1.bf16.msra.mxu0 0
      %762 = vmatprep.subr.bf16.mxu0 0
      %763 = vmatpush1.bf16.msra.mxu0 0
      %764 = vmatprep.mubr.bf16.mxu0 0
      %765 = vmatmul.mubr.bf16.gmra.mrb[0].mxu0 %v709
      %v766 = vpop.f32.mrb[0].mxu0
      %v767 = vadd.f32 %v594, %v766
      %v768 = vpop.f32.mrb[0].mxu0
      %v769 = vpop.f32.mrb[0].mxu0
      %v770 = vadd.f32 %v597, %v769
      %v771 = vpop.f32.mrb[0].mxu0
      %772 = vmatprep.mubr.bf16.mxu0 0
      %773 = vmatmul.mubr.bf16.gmra.mrb[0].mxu0 %v712
      %v774 = vpop.f32.mrb[0].mxu0
      %v775 = vadd.f32 %v602, %v774
      %v776 = vpop.f32.mrb[0].mxu0
      %v777 = vpop.f32.mrb[0].mxu0
      %v778 = vadd.f32 %v605, %v777
      %v779 = vpop.f32.mrb[0].mxu0
      %780 = vmatprep.mubr.bf16.mxu0 0
      %781 = vmatmul.mubr.bf16.gmra.mrb[0].mxu0 %v715
      %v782 = vpop.f32.mrb[0].mxu0
      %v783 = vadd.f32 %v610, %v782
      %v784 = vpop.f32.mrb[0].mxu0
      %v785 = vpop.f32.mrb[0].mxu0
      %v786 = vadd.f32 %v613, %v785
      %v787 = vpop.f32.mrb[0].mxu0
      %788 = vmatprep.mubr.bf16.mxu0 0
      %789 = vmatmul.mubr.bf16.gmra.mrb[0].mxu0 %v718
      %v790 = vpop.f32.mrb[0].mxu0
      %v791 = vadd.f32 %v618, %v790
      %v792 = vpop.f32.mrb[0].mxu0
      %v793 = vpop.f32.mrb[0].mxu0
      %v794 = vadd.f32 %v621, %v793
      %v795 = vpop.f32.mrb[0].mxu0
      %796 = vmatprep.mubr.bf16.mxu0 0
      %797 = vmatmul.mubr.bf16.gmra.mrb[0].mxu0 %v721
      %v798 = vpop.f32.mrb[0].mxu0
      %v799 = vadd.f32 %v626, %v798
      %v800 = vpop.f32.mrb[0].mxu0
      %v801 = vpop.f32.mrb[0].mxu0
      %v802 = vadd.f32 %v629, %v801
      %v803 = vpop.f32.mrb[0].mxu0
      %804 = vmatprep.mubr.bf16.mxu0 0
      %805 = vmatmul.mubr.bf16.gmra.mrb[0].mxu0 %v724
      %v806 = vpop.f32.mrb[0].mxu0
      %v807 = vadd.f32 %v634, %v806
      %v808 = vpop.f32.mrb[0].mxu0
      %v809 = vpop.f32.mrb[0].mxu0
      %v810 = vadd.f32 %v637, %v809
      %v811 = vpop.f32.mrb[0].mxu0
      %812 = vmatprep.mubr.bf16.mxu0 0
      %813 = vmatmul.mubr.bf16.gmra.mrb[0].mxu0 %v727
      %v814 = vpop.f32.mrb[0].mxu0
      %v815 = vadd.f32 %v642, %v814
      %v816 = vpop.f32.mrb[0].mxu0
      %v817 = vpop.f32.mrb[0].mxu0
      %v818 = vadd.f32 %v645, %v817
      %v819 = vpop.f32.mrb[0].mxu0
      %820 = vmatprep.mubr.bf16.mxu0 0
      %821 = vmatmul.mubr.bf16.gmra.mrb[0].mxu0 %v730
      %v822 = vpop.f32.mrb[0].mxu0
      %v823 = vadd.f32 %v650, %v822
      %v824 = vpop.f32.mrb[0].mxu0
      %v825 = vpop.f32.mrb[0].mxu0
      %v826 = vadd.f32 %v653, %v825
      %v827 = vpop.f32.mrb[0].mxu0
      %828 = vdwg.mxu0
      %v829 = vld [vmem:[%s414] sm:$0xf]
      %v830 = vld [vmem:[%s414 + $0x4] sm:$0xf]
      %v831 = vld [vmem:[%s414 + $0x8] sm:$0xf]
      %v832 = vld [vmem:[%s414 + $0xc] sm:$0xf]
      %v833 = vld [vmem:[%s414 + $0x10] sm:$0xf]
      %v834 = vld [vmem:[%s414 + $0x14] sm:$0xf]
      %v835 = vld [vmem:[%s414 + $0x18] sm:$0xf]
      %v836 = vld [vmem:[%s414 + $0x1c] sm:$0xf]
      %v837 = vld [vmem:[%s414 + $0x20] sm:$0xf]
      %v838 = vld [vmem:[%s414 + $0x24] sm:$0xf]
      %v839 = vld [vmem:[%s414 + $0x28] sm:$0xf]
      %v840 = vld [vmem:[%s414 + $0x2c] sm:$0xf]
      %v841 = vld [vmem:[%s414 + $0x30] sm:$0xf]
      %v842 = vld [vmem:[%s414 + $0x34] sm:$0xf]
      %v843 = vld [vmem:[%s414 + $0x38] sm:$0xf]
      %v844 = vld [vmem:[%s414 + $0x3c] sm:$0xf]
      %v845 = vld [vmem:[%s414 + $0x40] sm:$0x1]
      %s846 = scalar_lea.vmem %s4, 32
      %v847 = vld [vmem:[%s846] sm:$0xf]
      %v848 = vld [vmem:[%s846 + $0x4] sm:$0xf]
      %v849 = vld [vmem:[%s846 + $0x8] sm:$0xf]
      %v850 = vld [vmem:[%s846 + $0xc] sm:$0xf]
      %v868 = vunpack.c.l.b16 %v829
      %v869 = vunpack.c.l.b16 %v830
      %v870 = vunpack.c.l.b16 %v831
      %v871 = vunpack.c.l.b16 %v832
      %v872 = vunpack.c.l.b16 %v833
      %v873 = vunpack.c.l.b16 %v834
      %v874 = vunpack.c.l.b16 %v835
      %v875 = vunpack.c.l.b16 %v836
      %v876 = vunpack.c.l.b16 %v837
      %v877 = vunpack.c.l.b16 %v838
      %v878 = vunpack.c.l.b16 %v839
      %v879 = vunpack.c.l.b16 %v840
      %v880 = vunpack.c.l.b16 %v841
      %v881 = vunpack.c.l.b16 %v842
      %v882 = vunpack.c.l.b16 %v843
      %v883 = vunpack.c.l.b16 %v844
      %v884 = vunpack.c.l.b16 %v845
      %v885 = vpack.c.b16 %v869, %v868
      %v886 = vpack.c.b16 %v871, %v870
      %v887 = vpack.c.b16 %v873, %v872
      %v888 = vpack.c.b16 %v875, %v874
      %v889 = vpack.c.b16 %v877, %v876
      %v890 = vpack.c.b16 %v879, %v878
      %v891 = vpack.c.b16 %v881, %v880
      %v892 = vpack.c.b16 %v883, %v882
      %v893 = vpack.c.b16 %v884, %v884
      %vm894 = vsmask.f32 7424
      %v896 = vshrl.u32 %v885, 16
      %v898 = vshll.u32 %v885, 16
      %v900 = vrot.slane %v898, 1
      %v901 = vor.u32 %v896, %v900
      %v903 = vshll.u32 %v886, 16
      %v905 = vrot.slane %v903, 1
      %v906 = vsel %vm894, %v901, %v905
      %v907 = vshrl.u32 %v886, 16
      %v909 = vor.u32 %v907, %v905
      %v911 = vshll.u32 %v887, 16
      %v913 = vrot.slane %v911, 1
      %v914 = vsel %vm894, %v909, %v913
      %v915 = vshrl.u32 %v887, 16
      %v917 = vor.u32 %v915, %v913
      %v919 = vshll.u32 %v888, 16
      %v921 = vrot.slane %v919, 1
      %v922 = vsel %vm894, %v917, %v921
      %v923 = vshrl.u32 %v888, 16
      %v925 = vor.u32 %v923, %v921
      %v927 = vshll.u32 %v889, 16
      %v929 = vrot.slane %v927, 1
      %v930 = vsel %vm894, %v925, %v929
      %v931 = vshrl.u32 %v889, 16
      %v933 = vor.u32 %v931, %v929
      %v935 = vshll.u32 %v890, 16
      %v937 = vrot.slane %v935, 1
      %v938 = vsel %vm894, %v933, %v937
      %v939 = vshrl.u32 %v890, 16
      %v941 = vor.u32 %v939, %v937
      %v943 = vshll.u32 %v891, 16
      %v945 = vrot.slane %v943, 1
      %v946 = vsel %vm894, %v941, %v945
      %v947 = vshrl.u32 %v891, 16
      %v949 = vor.u32 %v947, %v945
      %v951 = vshll.u32 %v892, 16
      %v953 = vrot.slane %v951, 1
      %v954 = vsel %vm894, %v949, %v953
      %v955 = vshrl.u32 %v892, 16
      %v957 = vor.u32 %v955, %v953
      %v959 = vshll.u32 %v893, 16
      %v961 = vrot.slane %v959, 1
      %v962 = vsel %vm894, %v957, %v961
      %v967 = vunpack.c.l.b16 %v847
      %v968 = vunpack.c.l.b16 %v848
      %v969 = vunpack.c.l.b16 %v849
      %v970 = vunpack.c.l.b16 %v850
      %v971 = vpack.c.b16 %v968, %v967
      %v972 = vpack.c.b16 %v970, %v969
      %v976 = vsel %vm534, %v906, 0
      %v979 = vsel %vm534, %v914, 0
      %v982 = vsel %vm534, %v922, 0
      %v985 = vsel %vm534, %v930, 0
      %v988 = vsel %vm534, %v938, 0
      %v991 = vsel %vm534, %v946, 0
      %v994 = vsel %vm534, %v954, 0
      %v997 = vsel %vm534, %v962, 0
      %999 = vmatprep.subr.bf16.mxu0 0
      %1000 = vmatpush1.bf16.msra.mxu0 %v971
      %1001 = vmatprep.subr.bf16.mxu0 0
      %1002 = vmatpush1.bf16.msra.mxu0 %v972
      %1003 = vmatprep.subr.bf16.mxu0 0
      %1004 = vmatpush1.bf16.msra.mxu0 0
      %1005 = vmatprep.subr.bf16.mxu0 0
      %1006 = vmatpush1.bf16.msra.mxu0 0
      %1007 = vmatprep.subr.bf16.mxu0 0
      %1008 = vmatpush1.bf16.msra.mxu0 0
      %1009 = vmatprep.subr.bf16.mxu0 0
      %1010 = vmatpush1.bf16.msra.mxu0 0
      %1011 = vmatprep.subr.bf16.mxu0 0
      %1012 = vmatpush1.bf16.msra.mxu0 0
      %1013 = vmatprep.subr.bf16.mxu0 0
      %1014 = vmatpush1.bf16.msra.mxu0 0
      %1015 = vmatprep.subr.bf16.mxu0 0
      %1016 = vmatpush1.bf16.msra.mxu0 0
      %1017 = vmatprep.subr.bf16.mxu0 0
      %1018 = vmatpush1.bf16.msra.mxu0 0
      %1019 = vmatprep.subr.bf16.mxu0 0
      %1020 = vmatpush1.bf16.msra.mxu0 0
      %1021 = vmatprep.subr.bf16.mxu0 0
      %1022 = vmatpush1.bf16.msra.mxu0 0
      %1023 = vmatprep.subr.bf16.mxu0 0
      %1024 = vmatpush1.bf16.msra.mxu0 0
      %1025 = vmatprep.subr.bf16.mxu0 0
      %1026 = vmatpush1.bf16.msra.mxu0 0
      %1027 = vmatprep.subr.bf16.mxu0 0
      %1028 = vmatpush1.bf16.msra.mxu0 0
      %1029 = vmatprep.subr.bf16.mxu0 0
      %1030 = vmatpush1.bf16.msra.mxu0 0
      %1031 = vmatprep.mubr.bf16.mxu0 0
      %1032 = vmatmul.mubr.bf16.gmra.mrb[0].mxu0 %v976
      %v1033 = vpop.f32.mrb[0].mxu0
      %v1034 = vadd.f32 0.0, %v1033
      %v1035 = vpop.f32.mrb[0].mxu0
      %v1036 = vpop.f32.mrb[0].mxu0
      %v1037 = vadd.f32 0.0, %v1036
      %v1038 = vpop.f32.mrb[0].mxu0
      %1039 = vmatprep.mubr.bf16.mxu0 0
      %1040 = vmatmul.mubr.bf16.gmra.mrb[0].mxu0 %v979
      %v1041 = vpop.f32.mrb[0].mxu0
      %v1042 = vadd.f32 0.0, %v1041
      %v1043 = vpop.f32.mrb[0].mxu0
      %v1044 = vpop.f32.mrb[0].mxu0
      %v1045 = vadd.f32 0.0, %v1044
      %v1046 = vpop.f32.mrb[0].mxu0
      %1047 = vmatprep.mubr.bf16.mxu0 0
      %1048 = vmatmul.mubr.bf16.gmra.mrb[0].mxu0 %v982
      %v1049 = vpop.f32.mrb[0].mxu0
      %v1050 = vadd.f32 0.0, %v1049
      %v1051 = vpop.f32.mrb[0].mxu0
      %v1052 = vpop.f32.mrb[0].mxu0
      %v1053 = vadd.f32 0.0, %v1052
      %v1054 = vpop.f32.mrb[0].mxu0
      %1055 = vmatprep.mubr.bf16.mxu0 0
      %1056 = vmatmul.mubr.bf16.gmra.mrb[0].mxu0 %v985
      %v1057 = vpop.f32.mrb[0].mxu0
      %v1058 = vadd.f32 0.0, %v1057
      %v1059 = vpop.f32.mrb[0].mxu0
      %v1060 = vpop.f32.mrb[0].mxu0
      %v1061 = vadd.f32 0.0, %v1060
      %v1062 = vpop.f32.mrb[0].mxu0
      %1063 = vmatprep.mubr.bf16.mxu0 0
      %1064 = vmatmul.mubr.bf16.gmra.mrb[0].mxu0 %v988
      %v1065 = vpop.f32.mrb[0].mxu0
      %v1066 = vadd.f32 0.0, %v1065
      %v1067 = vpop.f32.mrb[0].mxu0
      %v1068 = vpop.f32.mrb[0].mxu0
      %v1069 = vadd.f32 0.0, %v1068
      %v1070 = vpop.f32.mrb[0].mxu0
      %1071 = vmatprep.mubr.bf16.mxu0 0
      %1072 = vmatmul.mubr.bf16.gmra.mrb[0].mxu0 %v991
      %v1073 = vpop.f32.mrb[0].mxu0
      %v1074 = vadd.f32 0.0, %v1073
      %v1075 = vpop.f32.mrb[0].mxu0
      %v1076 = vpop.f32.mrb[0].mxu0
      %v1077 = vadd.f32 0.0, %v1076
      %v1078 = vpop.f32.mrb[0].mxu0
      %1079 = vmatprep.mubr.bf16.mxu0 0
      %1080 = vmatmul.mubr.bf16.gmra.mrb[0].mxu0 %v994
      %v1081 = vpop.f32.mrb[0].mxu0
      %v1082 = vadd.f32 0.0, %v1081
      %v1083 = vpop.f32.mrb[0].mxu0
      %v1084 = vpop.f32.mrb[0].mxu0
      %v1085 = vadd.f32 0.0, %v1084
      %v1086 = vpop.f32.mrb[0].mxu0
      %1087 = vmatprep.mubr.bf16.mxu0 0
      %1088 = vmatmul.mubr.bf16.gmra.mrb[0].mxu0 %v997
      %v1089 = vpop.f32.mrb[0].mxu0
      %v1090 = vadd.f32 0.0, %v1089
      %v1091 = vpop.f32.mrb[0].mxu0
      %v1092 = vpop.f32.mrb[0].mxu0
      %v1093 = vadd.f32 0.0, %v1092
      %v1094 = vpop.f32.mrb[0].mxu0
      %1095 = vdwg.mxu0
      %v1096 = vadd.f32 %v767, %v1034
      %v1097 = vadd.f32 %v770, %v1037
      %v1098 = vadd.f32 %v775, %v1042
      %v1099 = vadd.f32 %v778, %v1045
      %v1100 = vadd.f32 %v783, %v1050
      %v1101 = vadd.f32 %v786, %v1053
      %v1102 = vadd.f32 %v791, %v1058
      %v1103 = vadd.f32 %v794, %v1061
      %v1104 = vadd.f32 %v799, %v1066
      %v1105 = vadd.f32 %v802, %v1069
      %v1106 = vadd.f32 %v807, %v1074
      %v1107 = vadd.f32 %v810, %v1077
      %v1108 = vadd.f32 %v815, %v1082
      %v1109 = vadd.f32 %v818, %v1085
      %v1110 = vadd.f32 %v823, %v1090
      %v1111 = vadd.f32 %v826, %v1093
      %v1112 = vld [vmem:[%s424] sm:$0xf]
      %v1113 = vld [vmem:[%s424 + $0x4] sm:$0xf]
      %v1114 = vld [vmem:[%s424 + $0x8] sm:$0xf]
      %v1115 = vld [vmem:[%s424 + $0xc] sm:$0xf]
      %v1116 = vld [vmem:[%s424 + $0x10] sm:$0xf]
      %v1117 = vld [vmem:[%s424 + $0x14] sm:$0xf]
      %v1118 = vld [vmem:[%s424 + $0x18] sm:$0xf]
      %v1119 = vld [vmem:[%s424 + $0x1c] sm:$0xf]
      %v1120 = vld [vmem:[%s424 + $0x20] sm:$0xf]
      %v1121 = vld [vmem:[%s424 + $0x24] sm:$0xf]
      %v1122 = vld [vmem:[%s424 + $0x28] sm:$0xf]
      %v1123 = vld [vmem:[%s424 + $0x2c] sm:$0xf]
      %v1124 = vld [vmem:[%s424 + $0x30] sm:$0xf]
      %v1125 = vld [vmem:[%s424 + $0x34] sm:$0xf]
      %v1126 = vld [vmem:[%s424 + $0x38] sm:$0xf]
      %v1127 = vld [vmem:[%s424 + $0x3c] sm:$0xf]
      %s1128 = scalar_lea.vmem %s4, 48
      %v1129 = vld [vmem:[%s1128] sm:$0xf]
      %v1130 = vld [vmem:[%s1128 + $0x4] sm:$0xf]
      %v1131 = vld [vmem:[%s1128 + $0x8] sm:$0xf]
      %v1132 = vld [vmem:[%s1128 + $0xc] sm:$0xf]
      %v1149 = vunpack.c.l.b16 %v1112
      %v1150 = vunpack.c.l.b16 %v1113
      %v1151 = vunpack.c.l.b16 %v1114
      %v1152 = vunpack.c.l.b16 %v1115
      %v1153 = vunpack.c.l.b16 %v1116
      %v1154 = vunpack.c.l.b16 %v1117
      %v1155 = vunpack.c.l.b16 %v1118
      %v1156 = vunpack.c.l.b16 %v1119
      %v1157 = vunpack.c.l.b16 %v1120
      %v1158 = vunpack.c.l.b16 %v1121
      %v1159 = vunpack.c.l.b16 %v1122
      %v1160 = vunpack.c.l.b16 %v1123
      %v1161 = vunpack.c.l.b16 %v1124
      %v1162 = vunpack.c.l.b16 %v1125
      %v1163 = vunpack.c.l.b16 %v1126
      %v1164 = vunpack.c.l.b16 %v1127
      %v1165 = vpack.c.b16 %v1150, %v1149
      %v1166 = vpack.c.b16 %v1152, %v1151
      %v1167 = vpack.c.b16 %v1154, %v1153
      %v1168 = vpack.c.b16 %v1156, %v1155
      %v1169 = vpack.c.b16 %v1158, %v1157
      %v1170 = vpack.c.b16 %v1160, %v1159
      %v1171 = vpack.c.b16 %v1162, %v1161
      %v1172 = vpack.c.b16 %v1164, %v1163
      %v1177 = vunpack.c.l.b16 %v1129
      %v1178 = vunpack.c.l.b16 %v1130
      %v1179 = vunpack.c.l.b16 %v1131
      %v1180 = vunpack.c.l.b16 %v1132
      %v1181 = vpack.c.b16 %v1178, %v1177
      %v1182 = vpack.c.b16 %v1180, %v1179
      %v1186 = vsel %vm534, %v1165, 0
      %v1189 = vsel %vm534, %v1166, 0
      %v1192 = vsel %vm534, %v1167, 0
      %v1195 = vsel %vm534, %v1168, 0
      %v1198 = vsel %vm534, %v1169, 0
      %v1201 = vsel %vm534, %v1170, 0
      %v1204 = vsel %vm534, %v1171, 0
      %v1207 = vsel %vm534, %v1172, 0
      %1209 = vmatprep.subr.bf16.mxu0 0
      %1210 = vmatpush1.bf16.msra.mxu0 %v1181
      %1211 = vmatprep.subr.bf16.mxu0 0
      %1212 = vmatpush1.bf16.msra.mxu0 %v1182
      %1213 = vmatprep.subr.bf16.mxu0 0
      %1214 = vmatpush1.bf16.msra.mxu0 0
      %1215 = vmatprep.subr.bf16.mxu0 0
      %1216 = vmatpush1.bf16.msra.mxu0 0
      %1217 = vmatprep.subr.bf16.mxu0 0
      %1218 = vmatpush1.bf16.msra.mxu0 0
      %1219 = vmatprep.subr.bf16.mxu0 0
      %1220 = vmatpush1.bf16.msra.mxu0 0
      %1221 = vmatprep.subr.bf16.mxu0 0
      %1222 = vmatpush1.bf16.msra.mxu0 0
      %1223 = vmatprep.subr.bf16.mxu0 0
      %1224 = vmatpush1.bf16.msra.mxu0 0
      %1225 = vmatprep.subr.bf16.mxu0 0
      %1226 = vmatpush1.bf16.msra.mxu0 0
      %1227 = vmatprep.subr.bf16.mxu0 0
      %1228 = vmatpush1.bf16.msra.mxu0 0
      %1229 = vmatprep.subr.bf16.mxu0 0
      %1230 = vmatpush1.bf16.msra.mxu0 0
      %1231 = vmatprep.subr.bf16.mxu0 0
      %1232 = vmatpush1.bf16.msra.mxu0 0
      %1233 = vmatprep.subr.bf16.mxu0 0
      %1234 = vmatpush1.bf16.msra.mxu0 0
      %1235 = vmatprep.subr.bf16.mxu0 0
      %1236 = vmatpush1.bf16.msra.mxu0 0
      %1237 = vmatprep.subr.bf16.mxu0 0
      %1238 = vmatpush1.bf16.msra.mxu0 0
      %1239 = vmatprep.subr.bf16.mxu0 0
      %1240 = vmatpush1.bf16.msra.mxu0 0
      %1241 = vmatprep.mubr.bf16.mxu0 0
      %1242 = vmatmul.mubr.bf16.gmra.mrb[0].mxu0 %v1186
      %v1243 = vpop.f32.mrb[0].mxu0
      %v1244 = vadd.f32 0.0, %v1243
      %v1245 = vpop.f32.mrb[0].mxu0
      %v1246 = vpop.f32.mrb[0].mxu0
      %v1247 = vadd.f32 0.0, %v1246
      %v1248 = vpop.f32.mrb[0].mxu0
      %1249 = vmatprep.mubr.bf16.mxu0 0
      %1250 = vmatmul.mubr.bf16.gmra.mrb[0].mxu0 %v1189
      %v1251 = vpop.f32.mrb[0].mxu0
      %v1252 = vadd.f32 0.0, %v1251
      %v1253 = vpop.f32.mrb[0].mxu0
      %v1254 = vpop.f32.mrb[0].mxu0
      %v1255 = vadd.f32 0.0, %v1254
      %v1256 = vpop.f32.mrb[0].mxu0
      %1257 = vmatprep.mubr.bf16.mxu0 0
      %1258 = vmatmul.mubr.bf16.gmra.mrb[0].mxu0 %v1192
      %v1259 = vpop.f32.mrb[0].mxu0
      %v1260 = vadd.f32 0.0, %v1259
      %v1261 = vpop.f32.mrb[0].mxu0
      %v1262 = vpop.f32.mrb[0].mxu0
      %v1263 = vadd.f32 0.0, %v1262
      %v1264 = vpop.f32.mrb[0].mxu0
      %1265 = vmatprep.mubr.bf16.mxu0 0
      %1266 = vmatmul.mubr.bf16.gmra.mrb[0].mxu0 %v1195
      %v1267 = vpop.f32.mrb[0].mxu0
      %v1268 = vadd.f32 0.0, %v1267
      %v1269 = vpop.f32.mrb[0].mxu0
      %v1270 = vpop.f32.mrb[0].mxu0
      %v1271 = vadd.f32 0.0, %v1270
      %v1272 = vpop.f32.mrb[0].mxu0
      %1273 = vmatprep.mubr.bf16.mxu0 0
      %1274 = vmatmul.mubr.bf16.gmra.mrb[0].mxu0 %v1198
      %v1275 = vpop.f32.mrb[0].mxu0
      %v1276 = vadd.f32 0.0, %v1275
      %v1277 = vpop.f32.mrb[0].mxu0
      %v1278 = vpop.f32.mrb[0].mxu0
      %v1279 = vadd.f32 0.0, %v1278
      %v1280 = vpop.f32.mrb[0].mxu0
      %1281 = vmatprep.mubr.bf16.mxu0 0
      %1282 = vmatmul.mubr.bf16.gmra.mrb[0].mxu0 %v1201
      %v1283 = vpop.f32.mrb[0].mxu0
      %v1284 = vadd.f32 0.0, %v1283
      %v1285 = vpop.f32.mrb[0].mxu0
      %v1286 = vpop.f32.mrb[0].mxu0
      %v1287 = vadd.f32 0.0, %v1286
      %v1288 = vpop.f32.mrb[0].mxu0
      %1289 = vmatprep.mubr.bf16.mxu0 0
      %1290 = vmatmul.mubr.bf16.gmra.mrb[0].mxu0 %v1204
      %v1291 = vpop.f32.mrb[0].mxu0
      %v1292 = vadd.f32 0.0, %v1291
      %v1293 = vpop.f32.mrb[0].mxu0
      %v1294 = vpop.f32.mrb[0].mxu0
      %v1295 = vadd.f32 0.0, %v1294
      %v1296 = vpop.f32.mrb[0].mxu0
      %1297 = vmatprep.mubr.bf16.mxu0 0
      %1298 = vmatmul.mubr.bf16.gmra.mrb[0].mxu0 %v1207
      %v1299 = vpop.f32.mrb[0].mxu0
      %v1300 = vadd.f32 0.0, %v1299
      %v1301 = vpop.f32.mrb[0].mxu0
      %v1302 = vpop.f32.mrb[0].mxu0
      %v1303 = vadd.f32 0.0, %v1302
      %v1304 = vpop.f32.mrb[0].mxu0
      %1305 = vdwg.mxu0
      %v1306 = vadd.f32 %v1096, %v1244
      %v1307 = vadd.f32 %v1097, %v1247
      %v1308 = vadd.f32 %v1098, %v1252
      %v1309 = vadd.f32 %v1099, %v1255
      %v1310 = vadd.f32 %v1100, %v1260
      %v1311 = vadd.f32 %v1101, %v1263
      %v1312 = vadd.f32 %v1102, %v1268
      %v1313 = vadd.f32 %v1103, %v1271
      %v1314 = vadd.f32 %v1104, %v1276
      %v1315 = vadd.f32 %v1105, %v1279
      %v1316 = vadd.f32 %v1106, %v1284
      %v1317 = vadd.f32 %v1107, %v1287
      %v1318 = vadd.f32 %v1108, %v1292
      %v1319 = vadd.f32 %v1109, %v1295
      %v1320 = vadd.f32 %v1110, %v1300
      %v1321 = vadd.f32 %v1111, %v1303
      %v1322 = vld [vmem:[%s429] sm:$0xf]
      %v1323 = vld [vmem:[%s429 + $0x4] sm:$0xf]
      %v1324 = vld [vmem:[%s429 + $0x8] sm:$0xf]
      %v1325 = vld [vmem:[%s429 + $0xc] sm:$0xf]
      %v1326 = vld [vmem:[%s429 + $0x10] sm:$0xf]
      %v1327 = vld [vmem:[%s429 + $0x14] sm:$0xf]
      %v1328 = vld [vmem:[%s429 + $0x18] sm:$0xf]
      %v1329 = vld [vmem:[%s429 + $0x1c] sm:$0xf]
      %v1330 = vld [vmem:[%s429 + $0x20] sm:$0xf]
      %v1331 = vld [vmem:[%s429 + $0x24] sm:$0xf]
      %v1332 = vld [vmem:[%s429 + $0x28] sm:$0xf]
      %v1333 = vld [vmem:[%s429 + $0x2c] sm:$0xf]
      %v1334 = vld [vmem:[%s429 + $0x30] sm:$0xf]
      %v1335 = vld [vmem:[%s429 + $0x34] sm:$0xf]
      %v1336 = vld [vmem:[%s429 + $0x38] sm:$0xf]
      %v1337 = vld [vmem:[%s429 + $0x3c] sm:$0xf]
      %s1338 = scalar_lea.vmem %s4, 64
      %v1339 = vld [vmem:[%s1338] sm:$0xf]
      %v1340 = vld [vmem:[%s1338 + $0x4] sm:$0xf]
      %v1341 = vld [vmem:[%s1338 + $0x8] sm:$0xf]
      %v1342 = vld [vmem:[%s1338 + $0xc] sm:$0xf]
      %v1359 = vunpack.c.l.b16 %v1322
      %v1360 = vunpack.c.l.b16 %v1323
      %v1361 = vunpack.c.l.b16 %v1324
      %v1362 = vunpack.c.l.b16 %v1325
      %v1363 = vunpack.c.l.b16 %v1326
      %v1364 = vunpack.c.l.b16 %v1327
      %v1365 = vunpack.c.l.b16 %v1328
      %v1366 = vunpack.c.l.b16 %v1329
      %v1367 = vunpack.c.l.b16 %v1330
      %v1368 = vunpack.c.l.b16 %v1331
      %v1369 = vunpack.c.l.b16 %v1332
      %v1370 = vunpack.c.l.b16 %v1333
      %v1371 = vunpack.c.l.b16 %v1334
      %v1372 = vunpack.c.l.b16 %v1335
      %v1373 = vunpack.c.l.b16 %v1336
      %v1374 = vunpack.c.l.b16 %v1337
      %v1375 = vpack.c.b16 %v1360, %v1359
      %v1376 = vpack.c.b16 %v1362, %v1361
      %v1377 = vpack.c.b16 %v1364, %v1363
      %v1378 = vpack.c.b16 %v1366, %v1365
      %v1379 = vpack.c.b16 %v1368, %v1367
      %v1380 = vpack.c.b16 %v1370, %v1369
      %v1381 = vpack.c.b16 %v1372, %v1371
      %v1382 = vpack.c.b16 %v1374, %v1373
      %v1387 = vunpack.c.l.b16 %v1339
      %v1388 = vunpack.c.l.b16 %v1340
      %v1389 = vunpack.c.l.b16 %v1341
      %v1390 = vunpack.c.l.b16 %v1342
      %v1391 = vpack.c.b16 %v1388, %v1387
      %v1392 = vpack.c.b16 %v1390, %v1389
      %v1396 = vsel %vm534, %v1375, 0
      %v1399 = vsel %vm534, %v1376, 0
      %v1402 = vsel %vm534, %v1377, 0
      %v1405 = vsel %vm534, %v1378, 0
      %v1408 = vsel %vm534, %v1379, 0
      %v1411 = vsel %vm534, %v1380, 0
      %v1414 = vsel %vm534, %v1381, 0
      %v1417 = vsel %vm534, %v1382, 0
      %1419 = vmatprep.subr.bf16.mxu0 0
      %1420 = vmatpush1.bf16.msra.mxu0 %v1391
      %1421 = vmatprep.subr.bf16.mxu0 0
      %1422 = vmatpush1.bf16.msra.mxu0 %v1392
      %1423 = vmatprep.subr.bf16.mxu0 0
      %1424 = vmatpush1.bf16.msra.mxu0 0
      %1425 = vmatprep.subr.bf16.mxu0 0
      %1426 = vmatpush1.bf16.msra.mxu0 0
      %1427 = vmatprep.subr.bf16.mxu0 0
      %1428 = vmatpush1.bf16.msra.mxu0 0
      %1429 = vmatprep.subr.bf16.mxu0 0
      %1430 = vmatpush1.bf16.msra.mxu0 0
      %1431 = vmatprep.subr.bf16.mxu0 0
      %1432 = vmatpush1.bf16.msra.mxu0 0
      %1433 = vmatprep.subr.bf16.mxu0 0
      %1434 = vmatpush1.bf16.msra.mxu0 0
      %1435 = vmatprep.subr.bf16.mxu0 0
      %1436 = vmatpush1.bf16.msra.mxu0 0
      %1437 = vmatprep.subr.bf16.mxu0 0
      %1438 = vmatpush1.bf16.msra.mxu0 0
      %1439 = vmatprep.subr.bf16.mxu0 0
      %1440 = vmatpush1.bf16.msra.mxu0 0
      %1441 = vmatprep.subr.bf16.mxu0 0
      %1442 = vmatpush1.bf16.msra.mxu0 0
      %1443 = vmatprep.subr.bf16.mxu0 0
      %1444 = vmatpush1.bf16.msra.mxu0 0
      %1445 = vmatprep.subr.bf16.mxu0 0
      %1446 = vmatpush1.bf16.msra.mxu0 0
      %1447 = vmatprep.subr.bf16.mxu0 0
      %1448 = vmatpush1.bf16.msra.mxu0 0
      %1449 = vmatprep.subr.bf16.mxu0 0
      %1450 = vmatpush1.bf16.msra.mxu0 0
      %1451 = vmatprep.mubr.bf16.mxu0 0
      %1452 = vmatmul.mubr.bf16.gmra.mrb[0].mxu0 %v1396
      %v1453 = vpop.f32.mrb[0].mxu0
      %v1454 = vadd.f32 0.0, %v1453
      %v1455 = vpop.f32.mrb[0].mxu0
      %v1456 = vpop.f32.mrb[0].mxu0
      %v1457 = vadd.f32 0.0, %v1456
      %v1458 = vpop.f32.mrb[0].mxu0
      %1459 = vmatprep.mubr.bf16.mxu0 0
      %1460 = vmatmul.mubr.bf16.gmra.mrb[0].mxu0 %v1399
      %v1461 = vpop.f32.mrb[0].mxu0
      %v1462 = vadd.f32 0.0, %v1461
      %v1463 = vpop.f32.mrb[0].mxu0
      %v1464 = vpop.f32.mrb[0].mxu0
      %v1465 = vadd.f32 0.0, %v1464
      %v1466 = vpop.f32.mrb[0].mxu0
      %1467 = vmatprep.mubr.bf16.mxu0 0
      %1468 = vmatmul.mubr.bf16.gmra.mrb[0].mxu0 %v1402
      %v1469 = vpop.f32.mrb[0].mxu0
      %v1470 = vadd.f32 0.0, %v1469
      %v1471 = vpop.f32.mrb[0].mxu0
      %v1472 = vpop.f32.mrb[0].mxu0
      %v1473 = vadd.f32 0.0, %v1472
      %v1474 = vpop.f32.mrb[0].mxu0
      %1475 = vmatprep.mubr.bf16.mxu0 0
      %1476 = vmatmul.mubr.bf16.gmra.mrb[0].mxu0 %v1405
      %v1477 = vpop.f32.mrb[0].mxu0
      %v1478 = vadd.f32 0.0, %v1477
      %v1479 = vpop.f32.mrb[0].mxu0
      %v1480 = vpop.f32.mrb[0].mxu0
      %v1481 = vadd.f32 0.0, %v1480
      %v1482 = vpop.f32.mrb[0].mxu0
      %1483 = vmatprep.mubr.bf16.mxu0 0
      %1484 = vmatmul.mubr.bf16.gmra.mrb[0].mxu0 %v1408
      %v1485 = vpop.f32.mrb[0].mxu0
      %v1486 = vadd.f32 0.0, %v1485
      %v1487 = vpop.f32.mrb[0].mxu0
      %v1488 = vpop.f32.mrb[0].mxu0
      %v1489 = vadd.f32 0.0, %v1488
      %v1490 = vpop.f32.mrb[0].mxu0
      %1491 = vmatprep.mubr.bf16.mxu0 0
      %1492 = vmatmul.mubr.bf16.gmra.mrb[0].mxu0 %v1411
      %v1493 = vpop.f32.mrb[0].mxu0
      %v1494 = vadd.f32 0.0, %v1493
      %v1495 = vpop.f32.mrb[0].mxu0
      %v1496 = vpop.f32.mrb[0].mxu0
      %v1497 = vadd.f32 0.0, %v1496
      %v1498 = vpop.f32.mrb[0].mxu0
      %1499 = vmatprep.mubr.bf16.mxu0 0
      %1500 = vmatmul.mubr.bf16.gmra.mrb[0].mxu0 %v1414
      %v1501 = vpop.f32.mrb[0].mxu0
      %v1502 = vadd.f32 0.0, %v1501
      %v1503 = vpop.f32.mrb[0].mxu0
      %v1504 = vpop.f32.mrb[0].mxu0
      %v1505 = vadd.f32 0.0, %v1504
      %v1506 = vpop.f32.mrb[0].mxu0
      %1507 = vmatprep.mubr.bf16.mxu0 0
      %1508 = vmatmul.mubr.bf16.gmra.mrb[0].mxu0 %v1417
      %v1509 = vpop.f32.mrb[0].mxu0
      %v1510 = vadd.f32 0.0, %v1509
      %v1511 = vpop.f32.mrb[0].mxu0
      %v1512 = vpop.f32.mrb[0].mxu0
      %v1513 = vadd.f32 0.0, %v1512
      %v1514 = vpop.f32.mrb[0].mxu0
      %1515 = vdwg.mxu0
      %v1516 = vadd.f32 %v1306, %v1454
      %v1517 = vadd.f32 %v1307, %v1457
      %v1518 = vadd.f32 %v1308, %v1462
      %v1519 = vadd.f32 %v1309, %v1465
      %v1520 = vadd.f32 %v1310, %v1470
      %v1521 = vadd.f32 %v1311, %v1473
      %v1522 = vadd.f32 %v1312, %v1478
      %v1523 = vadd.f32 %v1313, %v1481
      %v1524 = vadd.f32 %v1314, %v1486
      %v1525 = vadd.f32 %v1315, %v1489
      %v1526 = vadd.f32 %v1316, %v1494
      %v1527 = vadd.f32 %v1317, %v1497
      %v1528 = vadd.f32 %v1318, %v1502
      %v1529 = vadd.f32 %v1319, %v1505
      %v1530 = vadd.f32 %v1320, %v1510
      %v1531 = vadd.f32 %v1321, %v1513
      %v1532 = vld [vmem:[%s424] sm:$0xf]
      %v1533 = vld [vmem:[%s424 + $0x4] sm:$0xf]
      %v1534 = vld [vmem:[%s424 + $0x8] sm:$0xf]
      %v1535 = vld [vmem:[%s424 + $0xc] sm:$0xf]
      %v1536 = vld [vmem:[%s424 + $0x10] sm:$0xf]
      %v1537 = vld [vmem:[%s424 + $0x14] sm:$0xf]
      %v1538 = vld [vmem:[%s424 + $0x18] sm:$0xf]
      %v1539 = vld [vmem:[%s424 + $0x1c] sm:$0xf]
      %v1540 = vld [vmem:[%s424 + $0x20] sm:$0xf]
      %v1541 = vld [vmem:[%s424 + $0x24] sm:$0xf]
      %v1542 = vld [vmem:[%s424 + $0x28] sm:$0xf]
      %v1543 = vld [vmem:[%s424 + $0x2c] sm:$0xf]
      %v1544 = vld [vmem:[%s424 + $0x30] sm:$0xf]
      %v1545 = vld [vmem:[%s424 + $0x34] sm:$0xf]
      %v1546 = vld [vmem:[%s424 + $0x38] sm:$0xf]
      %v1547 = vld [vmem:[%s424 + $0x3c] sm:$0xf]
      %v1548 = vld [vmem:[%s424 + $0x40] sm:$0x1]
      %s1549 = scalar_lea.vmem %s4, 80
      %v1550 = vld [vmem:[%s1549] sm:$0xf]
      %v1551 = vld [vmem:[%s1549 + $0x4] sm:$0xf]
      %v1552 = vld [vmem:[%s1549 + $0x8] sm:$0xf]
      %v1553 = vld [vmem:[%s1549 + $0xc] sm:$0xf]
      %v1571 = vunpack.c.l.b16 %v1532
      %v1572 = vunpack.c.l.b16 %v1533
      %v1573 = vunpack.c.l.b16 %v1534
      %v1574 = vunpack.c.l.b16 %v1535
      %v1575 = vunpack.c.l.b16 %v1536
      %v1576 = vunpack.c.l.b16 %v1537
      %v1577 = vunpack.c.l.b16 %v1538
      %v1578 = vunpack.c.l.b16 %v1539
      %v1579 = vunpack.c.l.b16 %v1540
      %v1580 = vunpack.c.l.b16 %v1541
      %v1581 = vunpack.c.l.b16 %v1542
      %v1582 = vunpack.c.l.b16 %v1543
      %v1583 = vunpack.c.l.b16 %v1544
      %v1584 = vunpack.c.l.b16 %v1545
      %v1585 = vunpack.c.l.b16 %v1546
      %v1586 = vunpack.c.l.b16 %v1547
      %v1587 = vunpack.c.l.b16 %v1548
      %v1588 = vpack.c.b16 %v1572, %v1571
      %v1589 = vpack.c.b16 %v1574, %v1573
      %v1590 = vpack.c.b16 %v1576, %v1575
      %v1591 = vpack.c.b16 %v1578, %v1577
      %v1592 = vpack.c.b16 %v1580, %v1579
      %v1593 = vpack.c.b16 %v1582, %v1581
      %v1594 = vpack.c.b16 %v1584, %v1583
      %v1595 = vpack.c.b16 %v1586, %v1585
      %v1596 = vpack.c.b16 %v1587, %v1587
      %v1598 = vshrl.u32 %v1588, 16
      %v1600 = vshll.u32 %v1588, 16
      %v1602 = vrot.slane %v1600, 1
      %v1603 = vor.u32 %v1598, %v1602
      %v1605 = vshll.u32 %v1589, 16
      %v1607 = vrot.slane %v1605, 1
      %v1608 = vsel %vm894, %v1603, %v1607
      %v1609 = vshrl.u32 %v1589, 16
      %v1611 = vor.u32 %v1609, %v1607
      %v1613 = vshll.u32 %v1590, 16
      %v1615 = vrot.slane %v1613, 1
      %v1616 = vsel %vm894, %v1611, %v1615
      %v1617 = vshrl.u32 %v1590, 16
      %v1619 = vor.u32 %v1617, %v1615
      %v1621 = vshll.u32 %v1591, 16
      %v1623 = vrot.slane %v1621, 1
      %v1624 = vsel %vm894, %v1619, %v1623
      %v1625 = vshrl.u32 %v1591, 16
      %v1627 = vor.u32 %v1625, %v1623
      %v1629 = vshll.u32 %v1592, 16
      %v1631 = vrot.slane %v1629, 1
      %v1632 = vsel %vm894, %v1627, %v1631
      %v1633 = vshrl.u32 %v1592, 16
      %v1635 = vor.u32 %v1633, %v1631
      %v1637 = vshll.u32 %v1593, 16
      %v1639 = vrot.slane %v1637, 1
      %v1640 = vsel %vm894, %v1635, %v1639
      %v1641 = vshrl.u32 %v1593, 16
      %v1643 = vor.u32 %v1641, %v1639
      %v1645 = vshll.u32 %v1594, 16
      %v1647 = vrot.slane %v1645, 1
      %v1648 = vsel %vm894, %v1643, %v1647
      %v1649 = vshrl.u32 %v1594, 16
      %v1651 = vor.u32 %v1649, %v1647
      %v1653 = vshll.u32 %v1595, 16
      %v1655 = vrot.slane %v1653, 1
      %v1656 = vsel %vm894, %v1651, %v1655
      %v1657 = vshrl.u32 %v1595, 16
      %v1659 = vor.u32 %v1657, %v1655
      %v1661 = vshll.u32 %v1596, 16
      %v1663 = vrot.slane %v1661, 1
      %v1664 = vsel %vm894, %v1659, %v1663
      %v1669 = vunpack.c.l.b16 %v1550
      %v1670 = vunpack.c.l.b16 %v1551
      %v1671 = vunpack.c.l.b16 %v1552
      %v1672 = vunpack.c.l.b16 %v1553
      %v1673 = vpack.c.b16 %v1670, %v1669
      %v1674 = vpack.c.b16 %v1672, %v1671
      %v1678 = vsel %vm534, %v1608, 0
      %v1681 = vsel %vm534, %v1616, 0
      %v1684 = vsel %vm534, %v1624, 0
      %v1687 = vsel %vm534, %v1632, 0
      %v1690 = vsel %vm534, %v1640, 0
      %v1693 = vsel %vm534, %v1648, 0
      %v1696 = vsel %vm534, %v1656, 0
      %v1699 = vsel %vm534, %v1664, 0
      %1701 = vmatprep.subr.bf16.mxu0 0
      %1702 = vmatpush1.bf16.msra.mxu0 %v1673
      %1703 = vmatprep.subr.bf16.mxu0 0
      %1704 = vmatpush1.bf16.msra.mxu0 %v1674
      %1705 = vmatprep.subr.bf16.mxu0 0
      %1706 = vmatpush1.bf16.msra.mxu0 0
      %1707 = vmatprep.subr.bf16.mxu0 0
      %1708 = vmatpush1.bf16.msra.mxu0 0
      %1709 = vmatprep.subr.bf16.mxu0 0
      %1710 = vmatpush1.bf16.msra.mxu0 0
      %1711 = vmatprep.subr.bf16.mxu0 0
      %1712 = vmatpush1.bf16.msra.mxu0 0
      %1713 = vmatprep.subr.bf16.mxu0 0
      %1714 = vmatpush1.bf16.msra.mxu0 0
      %1715 = vmatprep.subr.bf16.mxu0 0
      %1716 = vmatpush1.bf16.msra.mxu0 0
      %1717 = vmatprep.subr.bf16.mxu0 0
      %1718 = vmatpush1.bf16.msra.mxu0 0
      %1719 = vmatprep.subr.bf16.mxu0 0
      %1720 = vmatpush1.bf16.msra.mxu0 0
      %1721 = vmatprep.subr.bf16.mxu0 0
      %1722 = vmatpush1.bf16.msra.mxu0 0
      %1723 = vmatprep.subr.bf16.mxu0 0
      %1724 = vmatpush1.bf16.msra.mxu0 0
      %1725 = vmatprep.subr.bf16.mxu0 0
      %1726 = vmatpush1.bf16.msra.mxu0 0
      %1727 = vmatprep.subr.bf16.mxu0 0
      %1728 = vmatpush1.bf16.msra.mxu0 0
      %1729 = vmatprep.subr.bf16.mxu0 0
      %1730 = vmatpush1.bf16.msra.mxu0 0
      %1731 = vmatprep.subr.bf16.mxu0 0
      %1732 = vmatpush1.bf16.msra.mxu0 0
      %1733 = vmatprep.mubr.bf16.mxu0 0
      %1734 = vmatmul.mubr.bf16.gmra.mrb[0].mxu0 %v1678
      %v1735 = vpop.f32.mrb[0].mxu0
      %v1736 = vadd.f32 0.0, %v1735
      %v1737 = vpop.f32.mrb[0].mxu0
      %v1738 = vpop.f32.mrb[0].mxu0
      %v1739 = vadd.f32 0.0, %v1738
      %v1740 = vpop.f32.mrb[0].mxu0
      %1741 = vmatprep.mubr.bf16.mxu0 0
      %1742 = vmatmul.mubr.bf16.gmra.mrb[0].mxu0 %v1681
      %v1743 = vpop.f32.mrb[0].mxu0
      %v1744 = vadd.f32 0.0, %v1743
      %v1745 = vpop.f32.mrb[0].mxu0
      %v1746 = vpop.f32.mrb[0].mxu0
      %v1747 = vadd.f32 0.0, %v1746
      %v1748 = vpop.f32.mrb[0].mxu0
      %1749 = vmatprep.mubr.bf16.mxu0 0
      %1750 = vmatmul.mubr.bf16.gmra.mrb[0].mxu0 %v1684
      %v1751 = vpop.f32.mrb[0].mxu0
      %v1752 = vadd.f32 0.0, %v1751
      %v1753 = vpop.f32.mrb[0].mxu0
      %v1754 = vpop.f32.mrb[0].mxu0
      %v1755 = vadd.f32 0.0, %v1754
      %v1756 = vpop.f32.mrb[0].mxu0
      %1757 = vmatprep.mubr.bf16.mxu0 0
      %1758 = vmatmul.mubr.bf16.gmra.mrb[0].mxu0 %v1687
      %v1759 = vpop.f32.mrb[0].mxu0
      %v1760 = vadd.f32 0.0, %v1759
      %v1761 = vpop.f32.mrb[0].mxu0
      %v1762 = vpop.f32.mrb[0].mxu0
      %v1763 = vadd.f32 0.0, %v1762
      %v1764 = vpop.f32.mrb[0].mxu0
      %1765 = vmatprep.mubr.bf16.mxu0 0
      %1766 = vmatmul.mubr.bf16.gmra.mrb[0].mxu0 %v1690
      %v1767 = vpop.f32.mrb[0].mxu0
      %v1768 = vadd.f32 0.0, %v1767
      %v1769 = vpop.f32.mrb[0].mxu0
      %v1770 = vpop.f32.mrb[0].mxu0
      %v1771 = vadd.f32 0.0, %v1770
      %v1772 = vpop.f32.mrb[0].mxu0
      %1773 = vmatprep.mubr.bf16.mxu0 0
      %1774 = vmatmul.mubr.bf16.gmra.mrb[0].mxu0 %v1693
      %v1775 = vpop.f32.mrb[0].mxu0
      %v1776 = vadd.f32 0.0, %v1775
      %v1777 = vpop.f32.mrb[0].mxu0
      %v1778 = vpop.f32.mrb[0].mxu0
      %v1779 = vadd.f32 0.0, %v1778
      %v1780 = vpop.f32.mrb[0].mxu0
      %1781 = vmatprep.mubr.bf16.mxu0 0
      %1782 = vmatmul.mubr.bf16.gmra.mrb[0].mxu0 %v1696
      %v1783 = vpop.f32.mrb[0].mxu0
      %v1784 = vadd.f32 0.0, %v1783
      %v1785 = vpop.f32.mrb[0].mxu0
      %v1786 = vpop.f32.mrb[0].mxu0
      %v1787 = vadd.f32 0.0, %v1786
      %v1788 = vpop.f32.mrb[0].mxu0
      %1789 = vmatprep.mubr.bf16.mxu0 0
      %1790 = vmatmul.mubr.bf16.gmra.mrb[0].mxu0 %v1699
      %v1791 = vpop.f32.mrb[0].mxu0
      %v1792 = vadd.f32 0.0, %v1791
      %v1793 = vpop.f32.mrb[0].mxu0
      %v1794 = vpop.f32.mrb[0].mxu0
      %v1795 = vadd.f32 0.0, %v1794
      %v1796 = vpop.f32.mrb[0].mxu0
      %1797 = vdwg.mxu0
      %v1798 = vadd.f32 %v1516, %v1736
      %v1799 = vadd.f32 %v1517, %v1739
      %v1800 = vadd.f32 %v1518, %v1744
      %v1801 = vadd.f32 %v1519, %v1747
      %v1802 = vadd.f32 %v1520, %v1752
      %v1803 = vadd.f32 %v1521, %v1755
      %v1804 = vadd.f32 %v1522, %v1760
      %v1805 = vadd.f32 %v1523, %v1763
      %v1806 = vadd.f32 %v1524, %v1768
      %v1807 = vadd.f32 %v1525, %v1771
      %v1808 = vadd.f32 %v1526, %v1776
      %v1809 = vadd.f32 %v1527, %v1779
      %v1810 = vadd.f32 %v1528, %v1784
      %v1811 = vadd.f32 %v1529, %v1787
      %v1812 = vadd.f32 %v1530, %v1792
      %v1813 = vadd.f32 %v1531, %v1795
      %v1814 = vld [vmem:[%s414 + $0x8] sm:$0xf]
      %v1815 = vld [vmem:[%s414 + $0xc] sm:$0xf]
      %v1816 = vld [vmem:[%s414 + $0x10] sm:$0xf]
      %v1817 = vld [vmem:[%s414 + $0x14] sm:$0xf]
      %v1818 = vld [vmem:[%s414 + $0x18] sm:$0xf]
      %v1819 = vld [vmem:[%s414 + $0x1c] sm:$0xf]
      %v1820 = vld [vmem:[%s414 + $0x20] sm:$0xf]
      %v1821 = vld [vmem:[%s414 + $0x24] sm:$0xf]
      %v1822 = vld [vmem:[%s414 + $0x28] sm:$0xf]
      %v1823 = vld [vmem:[%s414 + $0x2c] sm:$0xf]
      %v1824 = vld [vmem:[%s414 + $0x30] sm:$0xf]
      %v1825 = vld [vmem:[%s414 + $0x34] sm:$0xf]
      %v1826 = vld [vmem:[%s414 + $0x38] sm:$0xf]
      %v1827 = vld [vmem:[%s414 + $0x3c] sm:$0xf]
      %v1828 = vld [vmem:[%s414 + $0x40] sm:$0xf]
      %v1829 = vld [vmem:[%s414 + $0x44] sm:$0xf]
      %s1830 = scalar_lea.vmem %s4, 96
      %v1831 = vld [vmem:[%s1830] sm:$0xf]
      %v1832 = vld [vmem:[%s1830 + $0x4] sm:$0xf]
      %v1833 = vld [vmem:[%s1830 + $0x8] sm:$0xf]
      %v1834 = vld [vmem:[%s1830 + $0xc] sm:$0xf]
      %v1851 = vunpack.c.l.b16 %v1814
      %v1852 = vunpack.c.l.b16 %v1815
      %v1853 = vunpack.c.l.b16 %v1816
      %v1854 = vunpack.c.l.b16 %v1817
      %v1855 = vunpack.c.l.b16 %v1818
      %v1856 = vunpack.c.l.b16 %v1819
      %v1857 = vunpack.c.l.b16 %v1820
      %v1858 = vunpack.c.l.b16 %v1821
      %v1859 = vunpack.c.l.b16 %v1822
      %v1860 = vunpack.c.l.b16 %v1823
      %v1861 = vunpack.c.l.b16 %v1824
      %v1862 = vunpack.c.l.b16 %v1825
      %v1863 = vunpack.c.l.b16 %v1826
      %v1864 = vunpack.c.l.b16 %v1827
      %v1865 = vunpack.c.l.b16 %v1828
      %v1866 = vunpack.c.l.b16 %v1829
      %v1867 = vpack.c.b16 %v1852, %v1851
      %v1868 = vpack.c.b16 %v1854, %v1853
      %v1869 = vpack.c.b16 %v1856, %v1855
      %v1870 = vpack.c.b16 %v1858, %v1857
      %v1871 = vpack.c.b16 %v1860, %v1859
      %v1872 = vpack.c.b16 %v1862, %v1861
      %v1873 = vpack.c.b16 %v1864, %v1863
      %v1874 = vpack.c.b16 %v1866, %v1865
      %v1879 = vunpack.c.l.b16 %v1831
      %v1880 = vunpack.c.l.b16 %v1832
      %v1881 = vunpack.c.l.b16 %v1833
      %v1882 = vunpack.c.l.b16 %v1834
      %v1883 = vpack.c.b16 %v1880, %v1879
      %v1884 = vpack.c.b16 %v1882, %v1881
      %v1888 = vsel %vm534, %v1867, 0
      %v1891 = vsel %vm534, %v1868, 0
      %v1894 = vsel %vm534, %v1869, 0
      %v1897 = vsel %vm534, %v1870, 0
      %v1900 = vsel %vm534, %v1871, 0
      %v1903 = vsel %vm534, %v1872, 0
      %v1906 = vsel %vm534, %v1873, 0
      %v1909 = vsel %vm534, %v1874, 0
      %1911 = vmatprep.subr.bf16.mxu0 0
      %1912 = vmatpush1.bf16.msra.mxu0 %v1883
      %1913 = vmatprep.subr.bf16.mxu0 0
      %1914 = vmatpush1.bf16.msra.mxu0 %v1884
      %1915 = vmatprep.subr.bf16.mxu0 0
      %1916 = vmatpush1.bf16.msra.mxu0 0
      %1917 = vmatprep.subr.bf16.mxu0 0
      %1918 = vmatpush1.bf16.msra.mxu0 0
      %1919 = vmatprep.subr.bf16.mxu0 0
      %1920 = vmatpush1.bf16.msra.mxu0 0
      %1921 = vmatprep.subr.bf16.mxu0 0
      %1922 = vmatpush1.bf16.msra.mxu0 0
      %1923 = vmatprep.subr.bf16.mxu0 0
      %1924 = vmatpush1.bf16.msra.mxu0 0
      %1925 = vmatprep.subr.bf16.mxu0 0
      %1926 = vmatpush1.bf16.msra.mxu0 0
      %1927 = vmatprep.subr.bf16.mxu0 0
      %1928 = vmatpush1.bf16.msra.mxu0 0
      %1929 = vmatprep.subr.bf16.mxu0 0
      %1930 = vmatpush1.bf16.msra.mxu0 0
      %1931 = vmatprep.subr.bf16.mxu0 0
      %1932 = vmatpush1.bf16.msra.mxu0 0
      %1933 = vmatprep.subr.bf16.mxu0 0
      %1934 = vmatpush1.bf16.msra.mxu0 0
      %1935 = vmatprep.subr.bf16.mxu0 0
      %1936 = vmatpush1.bf16.msra.mxu0 0
      %1937 = vmatprep.subr.bf16.mxu0 0
      %1938 = vmatpush1.bf16.msra.mxu0 0
      %1939 = vmatprep.subr.bf16.mxu0 0
      %1940 = vmatpush1.bf16.msra.mxu0 0
      %1941 = vmatprep.subr.bf16.mxu0 0
      %1942 = vmatpush1.bf16.msra.mxu0 0
      %1943 = vmatprep.mubr.bf16.mxu0 0
      %1944 = vmatmul.mubr.bf16.gmra.mrb[0].mxu0 %v1888
      %v1945 = vpop.f32.mrb[0].mxu0
      %v1946 = vadd.f32 0.0, %v1945
      %v1947 = vpop.f32.mrb[0].mxu0
      %v1948 = vpop.f32.mrb[0].mxu0
      %v1949 = vadd.f32 0.0, %v1948
      %v1950 = vpop.f32.mrb[0].mxu0
      %1951 = vmatprep.mubr.bf16.mxu0 0
      %1952 = vmatmul.mubr.bf16.gmra.mrb[0].mxu0 %v1891
      %v1953 = vpop.f32.mrb[0].mxu0
      %v1954 = vadd.f32 0.0, %v1953
      %v1955 = vpop.f32.mrb[0].mxu0
      %v1956 = vpop.f32.mrb[0].mxu0
      %v1957 = vadd.f32 0.0, %v1956
      %v1958 = vpop.f32.mrb[0].mxu0
      %1959 = vmatprep.mubr.bf16.mxu0 0
      %1960 = vmatmul.mubr.bf16.gmra.mrb[0].mxu0 %v1894
      %v1961 = vpop.f32.mrb[0].mxu0
      %v1962 = vadd.f32 0.0, %v1961
      %v1963 = vpop.f32.mrb[0].mxu0
      %v1964 = vpop.f32.mrb[0].mxu0
      %v1965 = vadd.f32 0.0, %v1964
      %v1966 = vpop.f32.mrb[0].mxu0
      %1967 = vmatprep.mubr.bf16.mxu0 0
      %1968 = vmatmul.mubr.bf16.gmra.mrb[0].mxu0 %v1897
      %v1969 = vpop.f32.mrb[0].mxu0
      %v1970 = vadd.f32 0.0, %v1969
      %v1971 = vpop.f32.mrb[0].mxu0
      %v1972 = vpop.f32.mrb[0].mxu0
      %v1973 = vadd.f32 0.0, %v1972
      %v1974 = vpop.f32.mrb[0].mxu0
      %1975 = vmatprep.mubr.bf16.mxu0 0
      %1976 = vmatmul.mubr.bf16.gmra.mrb[0].mxu0 %v1900
      %v1977 = vpop.f32.mrb[0].mxu0
      %v1978 = vadd.f32 0.0, %v1977
      %v1979 = vpop.f32.mrb[0].mxu0
      %v1980 = vpop.f32.mrb[0].mxu0
      %v1981 = vadd.f32 0.0, %v1980
      %v1982 = vpop.f32.mrb[0].mxu0
      %1983 = vmatprep.mubr.bf16.mxu0 0
      %1984 = vmatmul.mubr.bf16.gmra.mrb[0].mxu0 %v1903
      %v1985 = vpop.f32.mrb[0].mxu0
      %v1986 = vadd.f32 0.0, %v1985
      %v1987 = vpop.f32.mrb[0].mxu0
      %v1988 = vpop.f32.mrb[0].mxu0
      %v1989 = vadd.f32 0.0, %v1988
      %v1990 = vpop.f32.mrb[0].mxu0
      %1991 = vmatprep.mubr.bf16.mxu0 0
      %1992 = vmatmul.mubr.bf16.gmra.mrb[0].mxu0 %v1906
      %v1993 = vpop.f32.mrb[0].mxu0
      %v1994 = vadd.f32 0.0, %v1993
      %v1995 = vpop.f32.mrb[0].mxu0
      %v1996 = vpop.f32.mrb[0].mxu0
      %v1997 = vadd.f32 0.0, %v1996
      %v1998 = vpop.f32.mrb[0].mxu0
      %1999 = vmatprep.mubr.bf16.mxu0 0
      %2000 = vmatmul.mubr.bf16.gmra.mrb[0].mxu0 %v1909
      %v2001 = vpop.f32.mrb[0].mxu0
      %v2002 = vadd.f32 0.0, %v2001
      %v2003 = vpop.f32.mrb[0].mxu0
      %v2004 = vpop.f32.mrb[0].mxu0
      %v2005 = vadd.f32 0.0, %v2004
      %v2006 = vpop.f32.mrb[0].mxu0
      %2007 = vdwg.mxu0
      %v2008 = vadd.f32 %v1798, %v1946
      %v2009 = vadd.f32 %v1799, %v1949
      %v2010 = vadd.f32 %v1800, %v1954
      %v2011 = vadd.f32 %v1801, %v1957
      %v2012 = vadd.f32 %v1802, %v1962
      %v2013 = vadd.f32 %v1803, %v1965
      %v2014 = vadd.f32 %v1804, %v1970
      %v2015 = vadd.f32 %v1805, %v1973
      %v2016 = vadd.f32 %v1806, %v1978
      %v2017 = vadd.f32 %v1807, %v1981
      %v2018 = vadd.f32 %v1808, %v1986
      %v2019 = vadd.f32 %v1809, %v1989
      %v2020 = vadd.f32 %v1810, %v1994
      %v2021 = vadd.f32 %v1811, %v1997
      %v2022 = vadd.f32 %v1812, %v2002
      %v2023 = vadd.f32 %v1813, %v2005
      %v2024 = vld [vmem:[%s419 + $0x8] sm:$0xf]
      %v2025 = vld [vmem:[%s419 + $0xc] sm:$0xf]
      %v2026 = vld [vmem:[%s419 + $0x10] sm:$0xf]
      %v2027 = vld [vmem:[%s419 + $0x14] sm:$0xf]
      %v2028 = vld [vmem:[%s419 + $0x18] sm:$0xf]
      %v2029 = vld [vmem:[%s419 + $0x1c] sm:$0xf]
      %v2030 = vld [vmem:[%s419 + $0x20] sm:$0xf]
      %v2031 = vld [vmem:[%s419 + $0x24] sm:$0xf]
      %v2032 = vld [vmem:[%s419 + $0x28] sm:$0xf]
      %v2033 = vld [vmem:[%s419 + $0x2c] sm:$0xf]
      %v2034 = vld [vmem:[%s419 + $0x30] sm:$0xf]
      %v2035 = vld [vmem:[%s419 + $0x34] sm:$0xf]
      %v2036 = vld [vmem:[%s419 + $0x38] sm:$0xf]
      %v2037 = vld [vmem:[%s419 + $0x3c] sm:$0xf]
      %v2038 = vld [vmem:[%s419 + $0x40] sm:$0xf]
      %v2039 = vld [vmem:[%s419 + $0x44] sm:$0xf]
      %s2040 = scalar_lea.vmem %s4, 112
      %v2041 = vld [vmem:[%s2040] sm:$0xf]
      %v2042 = vld [vmem:[%s2040 + $0x4] sm:$0xf]
      %v2043 = vld [vmem:[%s2040 + $0x8] sm:$0xf]
      %v2044 = vld [vmem:[%s2040 + $0xc] sm:$0xf]
      %v2061 = vunpack.c.l.b16 %v2024
      %v2062 = vunpack.c.l.b16 %v2025
      %v2063 = vunpack.c.l.b16 %v2026
      %v2064 = vunpack.c.l.b16 %v2027
      %v2065 = vunpack.c.l.b16 %v2028
      %v2066 = vunpack.c.l.b16 %v2029
      %v2067 = vunpack.c.l.b16 %v2030
      %v2068 = vunpack.c.l.b16 %v2031
      %v2069 = vunpack.c.l.b16 %v2032
      %v2070 = vunpack.c.l.b16 %v2033
      %v2071 = vunpack.c.l.b16 %v2034
      %v2072 = vunpack.c.l.b16 %v2035
      %v2073 = vunpack.c.l.b16 %v2036
      %v2074 = vunpack.c.l.b16 %v2037
      %v2075 = vunpack.c.l.b16 %v2038
      %v2076 = vunpack.c.l.b16 %v2039
      %v2077 = vpack.c.b16 %v2062, %v2061
      %v2078 = vpack.c.b16 %v2064, %v2063
      %v2079 = vpack.c.b16 %v2066, %v2065
      %v2080 = vpack.c.b16 %v2068, %v2067
      %v2081 = vpack.c.b16 %v2070, %v2069
      %v2082 = vpack.c.b16 %v2072, %v2071
      %v2083 = vpack.c.b16 %v2074, %v2073
      %v2084 = vpack.c.b16 %v2076, %v2075
      %v2089 = vunpack.c.l.b16 %v2041
      %v2090 = vunpack.c.l.b16 %v2042
      %v2091 = vunpack.c.l.b16 %v2043
      %v2092 = vunpack.c.l.b16 %v2044
      %v2093 = vpack.c.b16 %v2090, %v2089
      %v2094 = vpack.c.b16 %v2092, %v2091
      %v2098 = vsel %vm534, %v2077, 0
      %v2101 = vsel %vm534, %v2078, 0
      %v2104 = vsel %vm534, %v2079, 0
      %v2107 = vsel %vm534, %v2080, 0
      %v2110 = vsel %vm534, %v2081, 0
      %v2113 = vsel %vm534, %v2082, 0
      %v2116 = vsel %vm534, %v2083, 0
      %v2119 = vsel %vm534, %v2084, 0
      %2121 = vmatprep.subr.bf16.mxu0 0
      %2122 = vmatpush1.bf16.msra.mxu0 %v2093
      %2123 = vmatprep.subr.bf16.mxu0 0
      %2124 = vmatpush1.bf16.msra.mxu0 %v2094
      %2125 = vmatprep.subr.bf16.mxu0 0
      %2126 = vmatpush1.bf16.msra.mxu0 0
      %2127 = vmatprep.subr.bf16.mxu0 0
      %2128 = vmatpush1.bf16.msra.mxu0 0
      %2129 = vmatprep.subr.bf16.mxu0 0
      %2130 = vmatpush1.bf16.msra.mxu0 0
      %2131 = vmatprep.subr.bf16.mxu0 0
      %2132 = vmatpush1.bf16.msra.mxu0 0
      %2133 = vmatprep.subr.bf16.mxu0 0
      %2134 = vmatpush1.bf16.msra.mxu0 0
      %2135 = vmatprep.subr.bf16.mxu0 0
      %2136 = vmatpush1.bf16.msra.mxu0 0
      %2137 = vmatprep.subr.bf16.mxu0 0
      %2138 = vmatpush1.bf16.msra.mxu0 0
      %2139 = vmatprep.subr.bf16.mxu0 0
      %2140 = vmatpush1.bf16.msra.mxu0 0
      %2141 = vmatprep.subr.bf16.mxu0 0
      %2142 = vmatpush1.bf16.msra.mxu0 0
      %2143 = vmatprep.subr.bf16.mxu0 0
      %2144 = vmatpush1.bf16.msra.mxu0 0
      %2145 = vmatprep.subr.bf16.mxu0 0
      %2146 = vmatpush1.bf16.msra.mxu0 0
      %2147 = vmatprep.subr.bf16.mxu0 0
      %2148 = vmatpush1.bf16.msra.mxu0 0
      %2149 = vmatprep.subr.bf16.mxu0 0
      %2150 = vmatpush1.bf16.msra.mxu0 0
      %2151 = vmatprep.subr.bf16.mxu0 0
      %2152 = vmatpush1.bf16.msra.mxu0 0
      %2153 = vmatprep.mubr.bf16.mxu0 0
      %2154 = vmatmul.mubr.bf16.gmra.mrb[0].mxu0 %v2098
      %v2155 = vpop.f32.mrb[0].mxu0
      %v2156 = vadd.f32 0.0, %v2155
      %v2157 = vpop.f32.mrb[0].mxu0
      %v2158 = vpop.f32.mrb[0].mxu0
      %v2159 = vadd.f32 0.0, %v2158
      %v2160 = vpop.f32.mrb[0].mxu0
      %2161 = vmatprep.mubr.bf16.mxu0 0
      %2162 = vmatmul.mubr.bf16.gmra.mrb[0].mxu0 %v2101
      %v2163 = vpop.f32.mrb[0].mxu0
      %v2164 = vadd.f32 0.0, %v2163
      %v2165 = vpop.f32.mrb[0].mxu0
      %v2166 = vpop.f32.mrb[0].mxu0
      %v2167 = vadd.f32 0.0, %v2166
      %v2168 = vpop.f32.mrb[0].mxu0
      %2169 = vmatprep.mubr.bf16.mxu0 0
      %2170 = vmatmul.mubr.bf16.gmra.mrb[0].mxu0 %v2104
      %v2171 = vpop.f32.mrb[0].mxu0
      %v2172 = vadd.f32 0.0, %v2171
      %v2173 = vpop.f32.mrb[0].mxu0
      %v2174 = vpop.f32.mrb[0].mxu0
      %v2175 = vadd.f32 0.0, %v2174
      %v2176 = vpop.f32.mrb[0].mxu0
      %2177 = vmatprep.mubr.bf16.mxu0 0
      %2178 = vmatmul.mubr.bf16.gmra.mrb[0].mxu0 %v2107
      %v2179 = vpop.f32.mrb[0].mxu0
      %v2180 = vadd.f32 0.0, %v2179
      %v2181 = vpop.f32.mrb[0].mxu0
      %v2182 = vpop.f32.mrb[0].mxu0
      %v2183 = vadd.f32 0.0, %v2182
      %v2184 = vpop.f32.mrb[0].mxu0
      %2185 = vmatprep.mubr.bf16.mxu0 0
      %2186 = vmatmul.mubr.bf16.gmra.mrb[0].mxu0 %v2110
      %v2187 = vpop.f32.mrb[0].mxu0
      %v2188 = vadd.f32 0.0, %v2187
      %v2189 = vpop.f32.mrb[0].mxu0
      %v2190 = vpop.f32.mrb[0].mxu0
      %v2191 = vadd.f32 0.0, %v2190
      %v2192 = vpop.f32.mrb[0].mxu0
      %2193 = vmatprep.mubr.bf16.mxu0 0
      %2194 = vmatmul.mubr.bf16.gmra.mrb[0].mxu0 %v2113
      %v2195 = vpop.f32.mrb[0].mxu0
      %v2196 = vadd.f32 0.0, %v2195
      %v2197 = vpop.f32.mrb[0].mxu0
      %v2198 = vpop.f32.mrb[0].mxu0
      %v2199 = vadd.f32 0.0, %v2198
      %v2200 = vpop.f32.mrb[0].mxu0
      %2201 = vmatprep.mubr.bf16.mxu0 0
      %2202 = vmatmul.mubr.bf16.gmra.mrb[0].mxu0 %v2116
      %v2203 = vpop.f32.mrb[0].mxu0
      %v2204 = vadd.f32 0.0, %v2203
      %v2205 = vpop.f32.mrb[0].mxu0
      %v2206 = vpop.f32.mrb[0].mxu0
      %v2207 = vadd.f32 0.0, %v2206
      %v2208 = vpop.f32.mrb[0].mxu0
      %2209 = vmatprep.mubr.bf16.mxu0 0
      %2210 = vmatmul.mubr.bf16.gmra.mrb[0].mxu0 %v2119
      %v2211 = vpop.f32.mrb[0].mxu0
      %v2212 = vadd.f32 0.0, %v2211
      %v2213 = vpop.f32.mrb[0].mxu0
      %v2214 = vpop.f32.mrb[0].mxu0
      %v2215 = vadd.f32 0.0, %v2214
      %v2216 = vpop.f32.mrb[0].mxu0
      %2217 = vdwg.mxu0
      %v2218 = vadd.f32 %v2008, %v2156
      %v2219 = vadd.f32 %v2009, %v2159
      %v2220 = vadd.f32 %v2010, %v2164
      %v2221 = vadd.f32 %v2011, %v2167
      %v2222 = vadd.f32 %v2012, %v2172
      %v2223 = vadd.f32 %v2013, %v2175
      %v2224 = vadd.f32 %v2014, %v2180
      %v2225 = vadd.f32 %v2015, %v2183
      %v2226 = vadd.f32 %v2016, %v2188
      %v2227 = vadd.f32 %v2017, %v2191
      %v2228 = vadd.f32 %v2018, %v2196
      %v2229 = vadd.f32 %v2019, %v2199
      %v2230 = vadd.f32 %v2020, %v2204
      %v2231 = vadd.f32 %v2021, %v2207
      %v2232 = vadd.f32 %v2022, %v2212
      %v2233 = vadd.f32 %v2023, %v2215
      %v2234 = vld [vmem:[%s414 + $0x8] sm:$0xf]
      %v2235 = vld [vmem:[%s414 + $0xc] sm:$0xf]
      %v2236 = vld [vmem:[%s414 + $0x10] sm:$0xf]
      %v2237 = vld [vmem:[%s414 + $0x14] sm:$0xf]
      %v2238 = vld [vmem:[%s414 + $0x18] sm:$0xf]
      %v2239 = vld [vmem:[%s414 + $0x1c] sm:$0xf]
      %v2240 = vld [vmem:[%s414 + $0x20] sm:$0xf]
      %v2241 = vld [vmem:[%s414 + $0x24] sm:$0xf]
      %v2242 = vld [vmem:[%s414 + $0x28] sm:$0xf]
      %v2243 = vld [vmem:[%s414 + $0x2c] sm:$0xf]
      %v2244 = vld [vmem:[%s414 + $0x30] sm:$0xf]
      %v2245 = vld [vmem:[%s414 + $0x34] sm:$0xf]
      %v2246 = vld [vmem:[%s414 + $0x38] sm:$0xf]
      %v2247 = vld [vmem:[%s414 + $0x3c] sm:$0xf]
      %v2248 = vld [vmem:[%s414 + $0x40] sm:$0xf]
      %v2249 = vld [vmem:[%s414 + $0x44] sm:$0xf]
      %v2250 = vld [vmem:[%s414 + $0x48] sm:$0x1]
      %s2251 = scalar_lea.vmem %s4, 128
      %v2252 = vld [vmem:[%s2251] sm:$0xf]
      %v2253 = vld [vmem:[%s2251 + $0x4] sm:$0xf]
      %v2254 = vld [vmem:[%s2251 + $0x8] sm:$0xf]
      %v2255 = vld [vmem:[%s2251 + $0xc] sm:$0xf]
      %v2273 = vunpack.c.l.b16 %v2234
      %v2274 = vunpack.c.l.b16 %v2235
      %v2275 = vunpack.c.l.b16 %v2236
      %v2276 = vunpack.c.l.b16 %v2237
      %v2277 = vunpack.c.l.b16 %v2238
      %v2278 = vunpack.c.l.b16 %v2239
      %v2279 = vunpack.c.l.b16 %v2240
      %v2280 = vunpack.c.l.b16 %v2241
      %v2281 = vunpack.c.l.b16 %v2242
      %v2282 = vunpack.c.l.b16 %v2243
      %v2283 = vunpack.c.l.b16 %v2244
      %v2284 = vunpack.c.l.b16 %v2245
      %v2285 = vunpack.c.l.b16 %v2246
      %v2286 = vunpack.c.l.b16 %v2247
      %v2287 = vunpack.c.l.b16 %v2248
      %v2288 = vunpack.c.l.b16 %v2249
      %v2289 = vunpack.c.l.b16 %v2250
      %v2290 = vpack.c.b16 %v2274, %v2273
      %v2291 = vpack.c.b16 %v2276, %v2275
      %v2292 = vpack.c.b16 %v2278, %v2277
      %v2293 = vpack.c.b16 %v2280, %v2279
      %v2294 = vpack.c.b16 %v2282, %v2281
      %v2295 = vpack.c.b16 %v2284, %v2283
      %v2296 = vpack.c.b16 %v2286, %v2285
      %v2297 = vpack.c.b16 %v2288, %v2287
      %v2298 = vpack.c.b16 %v2289, %v2289
      %v2300 = vshrl.u32 %v2290, 16
      %v2302 = vshll.u32 %v2290, 16
      %v2304 = vrot.slane %v2302, 1
      %v2305 = vor.u32 %v2300, %v2304
      %v2307 = vshll.u32 %v2291, 16
      %v2309 = vrot.slane %v2307, 1
      %v2310 = vsel %vm894, %v2305, %v2309
      %v2311 = vshrl.u32 %v2291, 16
      %v2313 = vor.u32 %v2311, %v2309
      %v2315 = vshll.u32 %v2292, 16
      %v2317 = vrot.slane %v2315, 1
      %v2318 = vsel %vm894, %v2313, %v2317
      %v2319 = vshrl.u32 %v2292, 16
      %v2321 = vor.u32 %v2319, %v2317
      %v2323 = vshll.u32 %v2293, 16
      %v2325 = vrot.slane %v2323, 1
      %v2326 = vsel %vm894, %v2321, %v2325
      %v2327 = vshrl.u32 %v2293, 16
      %v2329 = vor.u32 %v2327, %v2325
      %v2331 = vshll.u32 %v2294, 16
      %v2333 = vrot.slane %v2331, 1
      %v2334 = vsel %vm894, %v2329, %v2333
      %v2335 = vshrl.u32 %v2294, 16
      %v2337 = vor.u32 %v2335, %v2333
      %v2339 = vshll.u32 %v2295, 16
      %v2341 = vrot.slane %v2339, 1
      %v2342 = vsel %vm894, %v2337, %v2341
      %v2343 = vshrl.u32 %v2295, 16
      %v2345 = vor.u32 %v2343, %v2341
      %v2347 = vshll.u32 %v2296, 16
      %v2349 = vrot.slane %v2347, 1
      %v2350 = vsel %vm894, %v2345, %v2349
      %v2351 = vshrl.u32 %v2296, 16
      %v2353 = vor.u32 %v2351, %v2349
      %v2355 = vshll.u32 %v2297, 16
      %v2357 = vrot.slane %v2355, 1
      %v2358 = vsel %vm894, %v2353, %v2357
      %v2359 = vshrl.u32 %v2297, 16
      %v2361 = vor.u32 %v2359, %v2357
      %v2363 = vshll.u32 %v2298, 16
      %v2365 = vrot.slane %v2363, 1
      %v2366 = vsel %vm894, %v2361, %v2365
      %v2371 = vunpack.c.l.b16 %v2252
      %v2372 = vunpack.c.l.b16 %v2253
      %v2373 = vunpack.c.l.b16 %v2254
      %v2374 = vunpack.c.l.b16 %v2255
      %v2375 = vpack.c.b16 %v2372, %v2371
      %v2376 = vpack.c.b16 %v2374, %v2373
      %v2380 = vsel %vm534, %v2310, 0
      %v2383 = vsel %vm534, %v2318, 0
      %v2386 = vsel %vm534, %v2326, 0
      %v2389 = vsel %vm534, %v2334, 0
      %v2392 = vsel %vm534, %v2342, 0
      %v2395 = vsel %vm534, %v2350, 0
      %v2398 = vsel %vm534, %v2358, 0
      %v2401 = vsel %vm534, %v2366, 0
      %2403 = vmatprep.subr.bf16.mxu0 0
      %2404 = vmatpush1.bf16.msra.mxu0 %v2375
      %2405 = vmatprep.subr.bf16.mxu0 0
      %2406 = vmatpush1.bf16.msra.mxu0 %v2376
      %2407 = vmatprep.subr.bf16.mxu0 0
      %2408 = vmatpush1.bf16.msra.mxu0 0
      %2409 = vmatprep.subr.bf16.mxu0 0
      %2410 = vmatpush1.bf16.msra.mxu0 0
      %2411 = vmatprep.subr.bf16.mxu0 0
      %2412 = vmatpush1.bf16.msra.mxu0 0
      %2413 = vmatprep.subr.bf16.mxu0 0
      %2414 = vmatpush1.bf16.msra.mxu0 0
      %2415 = vmatprep.subr.bf16.mxu0 0
      %2416 = vmatpush1.bf16.msra.mxu0 0
      %2417 = vmatprep.subr.bf16.mxu0 0
      %2418 = vmatpush1.bf16.msra.mxu0 0
      %2419 = vmatprep.subr.bf16.mxu0 0
      %2420 = vmatpush1.bf16.msra.mxu0 0
      %2421 = vmatprep.subr.bf16.mxu0 0
      %2422 = vmatpush1.bf16.msra.mxu0 0
      %2423 = vmatprep.subr.bf16.mxu0 0
      %2424 = vmatpush1.bf16.msra.mxu0 0
      %2425 = vmatprep.subr.bf16.mxu0 0
      %2426 = vmatpush1.bf16.msra.mxu0 0
      %2427 = vmatprep.subr.bf16.mxu0 0
      %2428 = vmatpush1.bf16.msra.mxu0 0
      %2429 = vmatprep.subr.bf16.mxu0 0
      %2430 = vmatpush1.bf16.msra.mxu0 0
      %2431 = vmatprep.subr.bf16.mxu0 0
      %2432 = vmatpush1.bf16.msra.mxu0 0
      %2433 = vmatprep.subr.bf16.mxu0 0
      %2434 = vmatpush1.bf16.msra.mxu0 0
      %2435 = vmatprep.mubr.bf16.mxu0 0
      %2436 = vmatmul.mubr.bf16.gmra.mrb[0].mxu0 %v2380
      %v2437 = vpop.f32.mrb[0].mxu0
      %v2438 = vadd.f32 0.0, %v2437
      %v2439 = vpop.f32.mrb[0].mxu0
      %v2440 = vpop.f32.mrb[0].mxu0
      %v2441 = vadd.f32 0.0, %v2440
      %v2442 = vpop.f32.mrb[0].mxu0
      %2443 = vmatprep.mubr.bf16.mxu0 0
      %2444 = vmatmul.mubr.bf16.gmra.mrb[0].mxu0 %v2383
      %v2445 = vpop.f32.mrb[0].mxu0
      %v2446 = vadd.f32 0.0, %v2445
      %v2447 = vpop.f32.mrb[0].mxu0
      %v2448 = vpop.f32.mrb[0].mxu0
      %v2449 = vadd.f32 0.0, %v2448
      %v2450 = vpop.f32.mrb[0].mxu0
      %2451 = vmatprep.mubr.bf16.mxu0 0
      %2452 = vmatmul.mubr.bf16.gmra.mrb[0].mxu0 %v2386
      %v2453 = vpop.f32.mrb[0].mxu0
      %v2454 = vadd.f32 0.0, %v2453
      %v2455 = vpop.f32.mrb[0].mxu0
      %v2456 = vpop.f32.mrb[0].mxu0
      %v2457 = vadd.f32 0.0, %v2456
      %v2458 = vpop.f32.mrb[0].mxu0
      %2459 = vmatprep.mubr.bf16.mxu0 0
      %2460 = vmatmul.mubr.bf16.gmra.mrb[0].mxu0 %v2389
      %v2461 = vpop.f32.mrb[0].mxu0
      %v2462 = vadd.f32 0.0, %v2461
      %v2463 = vpop.f32.mrb[0].mxu0
      %v2464 = vpop.f32.mrb[0].mxu0
      %v2465 = vadd.f32 0.0, %v2464
      %v2466 = vpop.f32.mrb[0].mxu0
      %2467 = vmatprep.mubr.bf16.mxu0 0
      %2468 = vmatmul.mubr.bf16.gmra.mrb[0].mxu0 %v2392
      %v2469 = vpop.f32.mrb[0].mxu0
      %v2470 = vadd.f32 0.0, %v2469
      %v2471 = vpop.f32.mrb[0].mxu0
      %v2472 = vpop.f32.mrb[0].mxu0
      %v2473 = vadd.f32 0.0, %v2472
      %v2474 = vpop.f32.mrb[0].mxu0
      %2475 = vmatprep.mubr.bf16.mxu0 0
      %2476 = vmatmul.mubr.bf16.gmra.mrb[0].mxu0 %v2395
      %v2477 = vpop.f32.mrb[0].mxu0
      %v2478 = vadd.f32 0.0, %v2477
      %v2479 = vpop.f32.mrb[0].mxu0
      %v2480 = vpop.f32.mrb[0].mxu0
      %v2481 = vadd.f32 0.0, %v2480
      %v2482 = vpop.f32.mrb[0].mxu0
      %2483 = vmatprep.mubr.bf16.mxu0 0
      %2484 = vmatmul.mubr.bf16.gmra.mrb[0].mxu0 %v2398
      %v2485 = vpop.f32.mrb[0].mxu0
      %v2486 = vadd.f32 0.0, %v2485
      %v2487 = vpop.f32.mrb[0].mxu0
      %v2488 = vpop.f32.mrb[0].mxu0
      %v2489 = vadd.f32 0.0, %v2488
      %v2490 = vpop.f32.mrb[0].mxu0
      %2491 = vmatprep.mubr.bf16.mxu0 0
      %2492 = vmatmul.mubr.bf16.gmra.mrb[0].mxu0 %v2401
      %v2493 = vpop.f32.mrb[0].mxu0
      %v2494 = vadd.f32 0.0, %v2493
      %v2495 = vpop.f32.mrb[0].mxu0
      %v2496 = vpop.f32.mrb[0].mxu0
      %v2497 = vadd.f32 0.0, %v2496
      %v2498 = vpop.f32.mrb[0].mxu0
      %2499 = vdwg.mxu0
      %v2500 = vadd.f32 %v2218, %v2438
      %v2501 = vadd.f32 %v2219, %v2441
      %v2502 = vadd.f32 %v2220, %v2446
      %v2503 = vadd.f32 %v2221, %v2449
      %v2504 = vadd.f32 %v2222, %v2454
      %v2505 = vadd.f32 %v2223, %v2457
      %v2506 = vadd.f32 %v2224, %v2462
      %v2507 = vadd.f32 %v2225, %v2465
      %v2508 = vadd.f32 %v2226, %v2470
      %v2509 = vadd.f32 %v2227, %v2473
      %v2510 = vadd.f32 %v2228, %v2478
      %v2511 = vadd.f32 %v2229, %v2481
      %v2512 = vadd.f32 %v2230, %v2486
      %v2513 = vadd.f32 %v2231, %v2489
      %v2514 = vadd.f32 %v2232, %v2494
      %v2515 = vadd.f32 %v2233, %v2497
      %v2516 = vld [vmem:[%s5] sm:$0x1]
      %v2518 = vlaneseq
      %v2519 = vshrl.u32 %v2518, 7
      %v2520 = vsub.s32 0, %v2519
      %v2521 = vrot.slane %v2516, %v2520
      %v2523 = vadd.f32 %v2500, %v2521
      %v2524 = vadd.f32 %v2501, %v2521
      %v2525 = vadd.f32 %v2502, %v2521
      %v2526 = vadd.f32 %v2503, %v2521
      %v2527 = vadd.f32 %v2504, %v2521
      %v2528 = vadd.f32 %v2505, %v2521
      %v2529 = vadd.f32 %v2506, %v2521
      %v2530 = vadd.f32 %v2507, %v2521
      %v2531 = vadd.f32 %v2508, %v2521
      %v2532 = vadd.f32 %v2509, %v2521
      %v2533 = vadd.f32 %v2510, %v2521
      %v2534 = vadd.f32 %v2511, %v2521
      %v2535 = vadd.f32 %v2512, %v2521
      %v2536 = vadd.f32 %v2513, %v2521
      %v2537 = vadd.f32 %v2514, %v2521
      %v2538 = vadd.f32 %v2515, %v2521
      %v2539 = vmax.f32 %v2523, 0.0
      %v2540 = vmax.f32 %v2524, 0.0
      %v2541 = vmax.f32 %v2525, 0.0
      %v2542 = vmax.f32 %v2526, 0.0
      %v2543 = vmax.f32 %v2527, 0.0
      %v2544 = vmax.f32 %v2528, 0.0
      %v2545 = vmax.f32 %v2529, 0.0
      %v2546 = vmax.f32 %v2530, 0.0
      %v2547 = vmax.f32 %v2531, 0.0
      %v2548 = vmax.f32 %v2532, 0.0
      %v2549 = vmax.f32 %v2533, 0.0
      %v2550 = vmax.f32 %v2534, 0.0
      %v2551 = vmax.f32 %v2535, 0.0
      %v2552 = vmax.f32 %v2536, 0.0
      %v2553 = vmax.f32 %v2537, 0.0
      %v2554 = vmax.f32 %v2538, 0.0
      %v2555 = vpack.c.bf16 %v2540, %v2539
      %v2556 = vpack.c.bf16 %v2542, %v2541
      %v2557 = vpack.c.bf16 %v2544, %v2543
      %v2558 = vpack.c.bf16 %v2546, %v2545
      %v2559 = vpack.c.bf16 %v2548, %v2547
      %v2560 = vpack.c.bf16 %v2550, %v2549
      %v2561 = vpack.c.bf16 %v2552, %v2551
      %v2562 = vpack.c.bf16 %v2554, %v2553
      %v2563 = vld [vmem:[%s6] sm:$0xf]
      %v2564 = vld [vmem:[%s6 + $0x4] sm:$0xf]
      %v2565 = vld [vmem:[%s6 + $0x8] sm:$0xf]
      %v2566 = vld [vmem:[%s6 + $0xc] sm:$0xf]
      %v2567 = vld [vmem:[%s7] sm:$0x1]
      %v2569 = vlaneseq
      %v2570 = vshrl.u32 %v2569, 7
      %v2571 = vsub.s32 0, %v2570
      %v2572 = vrot.slane %v2567, %v2571
      %v2578 = vunpack.c.l.b16 %v2563
      %v2579 = vunpack.c.l.b16 %v2564
      %v2580 = vunpack.c.l.b16 %v2565
      %v2581 = vunpack.c.l.b16 %v2566
      %v2582 = vpack.c.b16 %v2579, %v2578
      %v2583 = vpack.c.b16 %v2581, %v2580
      %v2587 = vsel %vm534, %v2555, 0
      %v2590 = vsel %vm534, %v2556, 0
      %v2593 = vsel %vm534, %v2557, 0
      %v2596 = vsel %vm534, %v2558, 0
      %v2599 = vsel %vm534, %v2559, 0
      %v2602 = vsel %vm534, %v2560, 0
      %v2605 = vsel %vm534, %v2561, 0
      %v2608 = vsel %vm534, %v2562, 0
      %2610 = vmatprep.subr.bf16.mxu0 0
      %2611 = vmatpush1.bf16.msra.mxu0 %v2582
      %2612 = vmatprep.subr.bf16.mxu0 0
      %2613 = vmatpush1.bf16.msra.mxu0 %v2583
      %2614 = vmatprep.subr.bf16.mxu0 0
      %2615 = vmatpush1.bf16.msra.mxu0 0
      %2616 = vmatprep.subr.bf16.mxu0 0
      %2617 = vmatpush1.bf16.msra.mxu0 0
      %2618 = vmatprep.subr.bf16.mxu0 0
      %2619 = vmatpush1.bf16.msra.mxu0 0
      %2620 = vmatprep.subr.bf16.mxu0 0
      %2621 = vmatpush1.bf16.msra.mxu0 0
      %2622 = vmatprep.subr.bf16.mxu0 0
      %2623 = vmatpush1.bf16.msra.mxu0 0
      %2624 = vmatprep.subr.bf16.mxu0 0
      %2625 = vmatpush1.bf16.msra.mxu0 0
      %2626 = vmatprep.subr.bf16.mxu0 0
      %2627 = vmatpush1.bf16.msra.mxu0 0
      %2628 = vmatprep.subr.bf16.mxu0 0
      %2629 = vmatpush1.bf16.msra.mxu0 0
      %2630 = vmatprep.subr.bf16.mxu0 0
      %2631 = vmatpush1.bf16.msra.mxu0 0
      %2632 = vmatprep.subr.bf16.mxu0 0
      %2633 = vmatpush1.bf16.msra.mxu0 0
      %2634 = vmatprep.subr.bf16.mxu0 0
      %2635 = vmatpush1.bf16.msra.mxu0 0
      %2636 = vmatprep.subr.bf16.mxu0 0
      %2637 = vmatpush1.bf16.msra.mxu0 0
      %2638 = vmatprep.subr.bf16.mxu0 0
      %2639 = vmatpush1.bf16.msra.mxu0 0
      %2640 = vmatprep.subr.bf16.mxu0 0
      %2641 = vmatpush1.bf16.msra.mxu0 0
      %2642 = vmatprep.mubr.bf16.mxu0 0
      %2643 = vmatmul.mubr.bf16.gmra.mrb[0].mxu0 %v2587
      %v2644 = vpop.f32.mrb[0].mxu0
      %v2645 = vadd.f32 %v2572, %v2644
      %v2646 = vpop.f32.mrb[0].mxu0
      %v2647 = vpop.f32.mrb[0].mxu0
      %v2648 = vadd.f32 %v2572, %v2647
      %v2649 = vpop.f32.mrb[0].mxu0
      %2650 = vmatprep.mubr.bf16.mxu0 0
      %2651 = vmatmul.mubr.bf16.gmra.mrb[0].mxu0 %v2590
      %v2652 = vpop.f32.mrb[0].mxu0
      %v2653 = vadd.f32 %v2572, %v2652
      %v2654 = vpop.f32.mrb[0].mxu0
      %v2655 = vpop.f32.mrb[0].mxu0
      %v2656 = vadd.f32 %v2572, %v2655
      %v2657 = vpop.f32.mrb[0].mxu0
      %2658 = vmatprep.mubr.bf16.mxu0 0
      %2659 = vmatmul.mubr.bf16.gmra.mrb[0].mxu0 %v2593
      %v2660 = vpop.f32.mrb[0].mxu0
      %v2661 = vadd.f32 %v2572, %v2660
      %v2662 = vpop.f32.mrb[0].mxu0
      %v2663 = vpop.f32.mrb[0].mxu0
      %v2664 = vadd.f32 %v2572, %v2663
      %v2665 = vpop.f32.mrb[0].mxu0
      %2666 = vmatprep.mubr.bf16.mxu0 0
      %2667 = vmatmul.mubr.bf16.gmra.mrb[0].mxu0 %v2596
      %v2668 = vpop.f32.mrb[0].mxu0
      %v2669 = vadd.f32 %v2572, %v2668
      %v2670 = vpop.f32.mrb[0].mxu0
      %v2671 = vpop.f32.mrb[0].mxu0
      %v2672 = vadd.f32 %v2572, %v2671
      %v2673 = vpop.f32.mrb[0].mxu0
      %2674 = vmatprep.mubr.bf16.mxu0 0
      %2675 = vmatmul.mubr.bf16.gmra.mrb[0].mxu0 %v2599
      %v2676 = vpop.f32.mrb[0].mxu0
      %v2677 = vadd.f32 %v2572, %v2676
      %v2678 = vpop.f32.mrb[0].mxu0
      %v2679 = vpop.f32.mrb[0].mxu0
      %v2680 = vadd.f32 %v2572, %v2679
      %v2681 = vpop.f32.mrb[0].mxu0
      %2682 = vmatprep.mubr.bf16.mxu0 0
      %2683 = vmatmul.mubr.bf16.gmra.mrb[0].mxu0 %v2602
      %v2684 = vpop.f32.mrb[0].mxu0
      %v2685 = vadd.f32 %v2572, %v2684
      %v2686 = vpop.f32.mrb[0].mxu0
      %v2687 = vpop.f32.mrb[0].mxu0
      %v2688 = vadd.f32 %v2572, %v2687
      %v2689 = vpop.f32.mrb[0].mxu0
      %2690 = vmatprep.mubr.bf16.mxu0 0
      %2691 = vmatmul.mubr.bf16.gmra.mrb[0].mxu0 %v2605
      %v2692 = vpop.f32.mrb[0].mxu0
      %v2693 = vadd.f32 %v2572, %v2692
      %v2694 = vpop.f32.mrb[0].mxu0
      %v2695 = vpop.f32.mrb[0].mxu0
      %v2696 = vadd.f32 %v2572, %v2695
      %v2697 = vpop.f32.mrb[0].mxu0
      %2698 = vmatprep.mubr.bf16.mxu0 0
      %2699 = vmatmul.mubr.bf16.gmra.mrb[0].mxu0 %v2608
      %v2700 = vpop.f32.mrb[0].mxu0
      %v2701 = vadd.f32 %v2572, %v2700
      %v2702 = vpop.f32.mrb[0].mxu0
      %v2703 = vpop.f32.mrb[0].mxu0
      %v2704 = vadd.f32 %v2572, %v2703
      %v2705 = vpop.f32.mrb[0].mxu0
      %2706 = vdwg.mxu0
      %v2707 = vld [vmem:[%s434] sm:$0xf]
      %v2708 = vld [vmem:[%s434 + $0x4] sm:$0xf]
      %v2709 = vld [vmem:[%s434 + $0x8] sm:$0xf]
      %v2710 = vld [vmem:[%s434 + $0xc] sm:$0xf]
      %v2711 = vld [vmem:[%s434 + $0x10] sm:$0xf]
      %v2712 = vld [vmem:[%s434 + $0x14] sm:$0xf]
      %v2713 = vld [vmem:[%s434 + $0x18] sm:$0xf]
      %v2714 = vld [vmem:[%s434 + $0x1c] sm:$0xf]
      %v2715 = vld [vmem:[%s434 + $0x20] sm:$0xf]
      %v2716 = vld [vmem:[%s434 + $0x24] sm:$0xf]
      %v2717 = vld [vmem:[%s434 + $0x28] sm:$0xf]
      %v2718 = vld [vmem:[%s434 + $0x2c] sm:$0xf]
      %v2719 = vld [vmem:[%s434 + $0x30] sm:$0xf]
      %v2720 = vld [vmem:[%s434 + $0x34] sm:$0xf]
      %v2721 = vld [vmem:[%s434 + $0x38] sm:$0xf]
      %v2722 = vld [vmem:[%s434 + $0x3c] sm:$0xf]
      %v2723 = vld [vmem:[%s9] sm:$0xf]
      %v2724 = vld [vmem:[%s9 + $0x4] sm:$0xf]
      %v2725 = vld [vmem:[%s9 + $0x8] sm:$0xf]
      %v2726 = vld [vmem:[%s9 + $0xc] sm:$0xf]
      %v2727 = vld [vmem:[%s9 + $0x10] sm:$0xf]
      %v2728 = vld [vmem:[%s9 + $0x14] sm:$0xf]
      %v2729 = vld [vmem:[%s9 + $0x18] sm:$0xf]
      %v2730 = vld [vmem:[%s9 + $0x1c] sm:$0xf]
      %v2747 = vunpack.c.l.b16 %v2707
      %v2748 = vunpack.c.l.b16 %v2708
      %v2749 = vunpack.c.l.b16 %v2709
      %v2750 = vunpack.c.l.b16 %v2710
      %v2751 = vunpack.c.l.b16 %v2711
      %v2752 = vunpack.c.l.b16 %v2712
      %v2753 = vunpack.c.l.b16 %v2713
      %v2754 = vunpack.c.l.b16 %v2714
      %v2755 = vunpack.c.l.b16 %v2715
      %v2756 = vunpack.c.l.b16 %v2716
      %v2757 = vunpack.c.l.b16 %v2717
      %v2758 = vunpack.c.l.b16 %v2718
      %v2759 = vunpack.c.l.b16 %v2719
      %v2760 = vunpack.c.l.b16 %v2720
      %v2761 = vunpack.c.l.b16 %v2721
      %v2762 = vunpack.c.l.b16 %v2722
      %v2763 = vpack.c.b16 %v2748, %v2747
      %v2764 = vpack.c.b16 %v2750, %v2749
      %v2765 = vpack.c.b16 %v2752, %v2751
      %v2766 = vpack.c.b16 %v2754, %v2753
      %v2767 = vpack.c.b16 %v2756, %v2755
      %v2768 = vpack.c.b16 %v2758, %v2757
      %v2769 = vpack.c.b16 %v2760, %v2759
      %v2770 = vpack.c.b16 %v2762, %v2761
      %v2779 = vunpack.c.l.b16 %v2723
      %v2780 = vunpack.c.l.b16 %v2724
      %v2781 = vunpack.c.l.b16 %v2725
      %v2782 = vunpack.c.l.b16 %v2726
      %v2783 = vunpack.c.l.b16 %v2727
      %v2784 = vunpack.c.l.b16 %v2728
      %v2785 = vunpack.c.l.b16 %v2729
      %v2786 = vunpack.c.l.b16 %v2730
      %v2787 = vpack.c.b16 %v2780, %v2779
      %v2788 = vpack.c.b16 %v2782, %v2781
      %v2789 = vpack.c.b16 %v2784, %v2783
      %v2790 = vpack.c.b16 %v2786, %v2785
      %vm2795 = vcmask 523264
      %v2797 = vsel %vm2795, %v2763, 0
      %v2800 = vsel %vm2795, %v2764, 0
      %v2803 = vsel %vm2795, %v2765, 0
      %v2806 = vsel %vm2795, %v2766, 0
      %v2809 = vsel %vm2795, %v2767, 0
      %v2812 = vsel %vm2795, %v2768, 0
      %v2815 = vsel %vm2795, %v2769, 0
      %v2818 = vsel %vm2795, %v2770, 0
      %2820 = vmatprep.subr.bf16.mxu0 0
      %2821 = vmatpush1.bf16.msra.mxu0 %v2787
      %2822 = vmatprep.subr.bf16.mxu0 0
      %2823 = vmatpush1.bf16.msra.mxu0 %v2788
      %2824 = vmatprep.subr.bf16.mxu0 0
      %2825 = vmatpush1.bf16.msra.mxu0 %v2789
      %2826 = vmatprep.subr.bf16.mxu0 0
      %2827 = vmatpush1.bf16.msra.mxu0 %v2790
      %2828 = vmatprep.subr.bf16.mxu0 0
      %2829 = vmatpush1.bf16.msra.mxu0 0
      %2830 = vmatprep.subr.bf16.mxu0 0
      %2831 = vmatpush1.bf16.msra.mxu0 0
      %2832 = vmatprep.subr.bf16.mxu0 0
      %2833 = vmatpush1.bf16.msra.mxu0 0
      %2834 = vmatprep.subr.bf16.mxu0 0
      %2835 = vmatpush1.bf16.msra.mxu0 0
      %2836 = vmatprep.subr.bf16.mxu0 0
      %2837 = vmatpush1.bf16.msra.mxu0 0
      %2838 = vmatprep.subr.bf16.mxu0 0
      %2839 = vmatpush1.bf16.msra.mxu0 0
      %2840 = vmatprep.subr.bf16.mxu0 0
      %2841 = vmatpush1.bf16.msra.mxu0 0
      %2842 = vmatprep.subr.bf16.mxu0 0
      %2843 = vmatpush1.bf16.msra.mxu0 0
      %2844 = vmatprep.subr.bf16.mxu0 0
      %2845 = vmatpush1.bf16.msra.mxu0 0
      %2846 = vmatprep.subr.bf16.mxu0 0
      %2847 = vmatpush1.bf16.msra.mxu0 0
      %2848 = vmatprep.subr.bf16.mxu0 0
      %2849 = vmatpush1.bf16.msra.mxu0 0
      %2850 = vmatprep.subr.bf16.mxu0 0
      %2851 = vmatpush1.bf16.msra.mxu0 0
      %2852 = vmatprep.mubr.bf16.mxu0 0
      %2853 = vmatmul.mubr.bf16.gmra.mrb[0].mxu0 %v2797
      %v2854 = vpop.f32.mrb[0].mxu0
      %v2855 = vadd.f32 0.0, %v2854
      %v2856 = vpop.f32.mrb[0].mxu0
      %v2857 = vpop.f32.mrb[0].mxu0
      %v2858 = vadd.f32 0.0, %v2857
      %v2859 = vpop.f32.mrb[0].mxu0
      %2860 = vmatprep.mubr.bf16.mxu0 0
      %2861 = vmatmul.mubr.bf16.gmra.mrb[0].mxu0 %v2800
      %v2862 = vpop.f32.mrb[0].mxu0
      %v2863 = vadd.f32 0.0, %v2862
      %v2864 = vpop.f32.mrb[0].mxu0
      %v2865 = vpop.f32.mrb[0].mxu0
      %v2866 = vadd.f32 0.0, %v2865
      %v2867 = vpop.f32.mrb[0].mxu0
      %2868 = vmatprep.mubr.bf16.mxu0 0
      %2869 = vmatmul.mubr.bf16.gmra.mrb[0].mxu0 %v2803
      %v2870 = vpop.f32.mrb[0].mxu0
      %v2871 = vadd.f32 0.0, %v2870
      %v2872 = vpop.f32.mrb[0].mxu0
      %v2873 = vpop.f32.mrb[0].mxu0
      %v2874 = vadd.f32 0.0, %v2873
      %v2875 = vpop.f32.mrb[0].mxu0
      %2876 = vmatprep.mubr.bf16.mxu0 0
      %2877 = vmatmul.mubr.bf16.gmra.mrb[0].mxu0 %v2806
      %v2878 = vpop.f32.mrb[0].mxu0
      %v2879 = vadd.f32 0.0, %v2878
      %v2880 = vpop.f32.mrb[0].mxu0
      %v2881 = vpop.f32.mrb[0].mxu0
      %v2882 = vadd.f32 0.0, %v2881
      %v2883 = vpop.f32.mrb[0].mxu0
      %2884 = vmatprep.mubr.bf16.mxu0 0
      %2885 = vmatmul.mubr.bf16.gmra.mrb[0].mxu0 %v2809
      %v2886 = vpop.f32.mrb[0].mxu0
      %v2887 = vadd.f32 0.0, %v2886
      %v2888 = vpop.f32.mrb[0].mxu0
      %v2889 = vpop.f32.mrb[0].mxu0
      %v2890 = vadd.f32 0.0, %v2889
      %v2891 = vpop.f32.mrb[0].mxu0
      %2892 = vmatprep.mubr.bf16.mxu0 0
      %2893 = vmatmul.mubr.bf16.gmra.mrb[0].mxu0 %v2812
      %v2894 = vpop.f32.mrb[0].mxu0
      %v2895 = vadd.f32 0.0, %v2894
      %v2896 = vpop.f32.mrb[0].mxu0
      %v2897 = vpop.f32.mrb[0].mxu0
      %v2898 = vadd.f32 0.0, %v2897
      %v2899 = vpop.f32.mrb[0].mxu0
      %2900 = vmatprep.mubr.bf16.mxu0 0
      %2901 = vmatmul.mubr.bf16.gmra.mrb[0].mxu0 %v2815
      %v2902 = vpop.f32.mrb[0].mxu0
      %v2903 = vadd.f32 0.0, %v2902
      %v2904 = vpop.f32.mrb[0].mxu0
      %v2905 = vpop.f32.mrb[0].mxu0
      %v2906 = vadd.f32 0.0, %v2905
      %v2907 = vpop.f32.mrb[0].mxu0
      %2908 = vmatprep.mubr.bf16.mxu0 0
      %2909 = vmatmul.mubr.bf16.gmra.mrb[0].mxu0 %v2818
      %v2910 = vpop.f32.mrb[0].mxu0
      %v2911 = vadd.f32 0.0, %v2910
      %v2912 = vpop.f32.mrb[0].mxu0
      %v2913 = vpop.f32.mrb[0].mxu0
      %v2914 = vadd.f32 0.0, %v2913
      %v2915 = vpop.f32.mrb[0].mxu0
      %2916 = vdwg.mxu0
      %v2917 = vadd.f32 %v2645, %v2855
      %v2918 = vadd.f32 %v2648, %v2858
      %v2919 = vadd.f32 %v2653, %v2863
      %v2920 = vadd.f32 %v2656, %v2866
      %v2921 = vadd.f32 %v2661, %v2871
      %v2922 = vadd.f32 %v2664, %v2874
      %v2923 = vadd.f32 %v2669, %v2879
      %v2924 = vadd.f32 %v2672, %v2882
      %v2925 = vadd.f32 %v2677, %v2887
      %v2926 = vadd.f32 %v2680, %v2890
      %v2927 = vadd.f32 %v2685, %v2895
      %v2928 = vadd.f32 %v2688, %v2898
      %v2929 = vadd.f32 %v2693, %v2903
      %v2930 = vadd.f32 %v2696, %v2906
      %v2931 = vadd.f32 %v2701, %v2911
      %v2932 = vadd.f32 %v2704, %v2914
      %v2933 = vmax.f32 %v2917, 0.0
      %v2934 = vmax.f32 %v2918, 0.0
      %v2935 = vmax.f32 %v2919, 0.0
      %v2936 = vmax.f32 %v2920, 0.0
      %v2937 = vmax.f32 %v2921, 0.0
      %v2938 = vmax.f32 %v2922, 0.0
      %v2939 = vmax.f32 %v2923, 0.0
      %v2940 = vmax.f32 %v2924, 0.0
      %v2941 = vmax.f32 %v2925, 0.0
      %v2942 = vmax.f32 %v2926, 0.0
      %v2943 = vmax.f32 %v2927, 0.0
      %v2944 = vmax.f32 %v2928, 0.0
      %v2945 = vmax.f32 %v2929, 0.0
      %v2946 = vmax.f32 %v2930, 0.0
      %v2947 = vmax.f32 %v2931, 0.0
      %v2948 = vmax.f32 %v2932, 0.0
      %v2949 = vpack.c.bf16 %v2934, %v2933
      %v2950 = vpack.c.bf16 %v2936, %v2935
      %v2951 = vpack.c.bf16 %v2938, %v2937
      %v2952 = vpack.c.bf16 %v2940, %v2939
      %v2953 = vpack.c.bf16 %v2942, %v2941
      %v2954 = vpack.c.bf16 %v2944, %v2943
      %v2955 = vpack.c.bf16 %v2946, %v2945
      %v2956 = vpack.c.bf16 %v2948, %v2947
      %v2965 = vunpack.c.l.b16 %v2949
      %v2966 = vunpack.c.h.b16 %v2949
      %v2967 = vunpack.c.l.b16 %v2950
      %v2968 = vunpack.c.h.b16 %v2950
      %v2969 = vunpack.c.l.b16 %v2951
      %v2970 = vunpack.c.h.b16 %v2951
      %v2971 = vunpack.c.l.b16 %v2952
      %v2972 = vunpack.c.h.b16 %v2952
      %v2973 = vunpack.c.l.b16 %v2953
      %v2974 = vunpack.c.h.b16 %v2953
      %v2975 = vunpack.c.l.b16 %v2954
      %v2976 = vunpack.c.h.b16 %v2954
      %v2977 = vunpack.c.l.b16 %v2955
      %v2978 = vunpack.c.h.b16 %v2955
      %v2979 = vunpack.c.l.b16 %v2956
      %v2980 = vunpack.c.h.b16 %v2956
      %v2981 = vpack.c.b16 %v2965, %v2965
      %v2982 = vpack.c.b16 %v2966, %v2966
      %v2983 = vpack.c.b16 %v2967, %v2967
      %v2984 = vpack.c.b16 %v2968, %v2968
      %v2985 = vpack.c.b16 %v2969, %v2969
      %v2986 = vpack.c.b16 %v2970, %v2970
      %v2987 = vpack.c.b16 %v2971, %v2971
      %v2988 = vpack.c.b16 %v2972, %v2972
      %v2989 = vpack.c.b16 %v2973, %v2973
      %v2990 = vpack.c.b16 %v2974, %v2974
      %v2991 = vpack.c.b16 %v2975, %v2975
      %v2992 = vpack.c.b16 %v2976, %v2976
      %v2993 = vpack.c.b16 %v2977, %v2977
      %v2994 = vpack.c.b16 %v2978, %v2978
      %v2995 = vpack.c.b16 %v2979, %v2979
      %v2996 = vpack.c.b16 %v2980, %v2980
      %3013 = vst [vmem:[%s439] sm:$0xf] %v2981
      %3014 = vst [vmem:[%s439 + $0x4] sm:$0xf] %v2982
      %3015 = vst [vmem:[%s439 + $0x8] sm:$0xf] %v2983
      %3016 = vst [vmem:[%s439 + $0xc] sm:$0xf] %v2984
      %3017 = vst [vmem:[%s439 + $0x10] sm:$0xf] %v2985
      %3018 = vst [vmem:[%s439 + $0x14] sm:$0xf] %v2986
      %3019 = vst [vmem:[%s439 + $0x18] sm:$0xf] %v2987
      %3020 = vst [vmem:[%s439 + $0x1c] sm:$0xf] %v2988
      %3021 = vst [vmem:[%s439 + $0x20] sm:$0xf] %v2989
      %3022 = vst [vmem:[%s439 + $0x24] sm:$0xf] %v2990
      %3023 = vst [vmem:[%s439 + $0x28] sm:$0xf] %v2991
      %3024 = vst [vmem:[%s439 + $0x2c] sm:$0xf] %v2992
      %3025 = vst [vmem:[%s439 + $0x30] sm:$0xf] %v2993
      %3026 = vst [vmem:[%s439 + $0x34] sm:$0xf] %v2994
      %3027 = vst [vmem:[%s439 + $0x38] sm:$0xf] %v2995
      %3028 = vst [vmem:[%s439 + $0x3c] sm:$0xf] %v2996
      %p3029 = scmp.lt.s32.totalorder %s21, 1
      %s3030 = scalar_select %p3029, %s21, 1
      %s3031 = smul.addr %s3030, 16
      %s3032 = smul.addr %s3031, 4
      %s3033 = scalar_lea.vmem %s10, %s3032
      // Predicated region
      $region61: #{bottleneck_forward.3} parent=59 // pred_check
        %p3034 = pneg %p274
      $region62: #{bottleneck_forward.3} parent=59 // pred_check_branch
        %3036 = sbr.rel (%p3034) target = $region64
      $region63: #{bottleneck_forward.3} parent=59 // pred_region
        _
      $region64: #{bottleneck_forward.3} parent=59 // pred_fallthru
        _
    $region60: #{bottleneck_forward.3} parent=5 // pred_fallthru
      _
    %p3037 = scmp.le.s32.totalorder 2, %s16
    // Predicated region
    $region65: #{bottleneck_forward.3} parent=5 // pred_check
      %p3038 = pneg %p3037
    $region66: #{bottleneck_forward.3} parent=5 // pred_check_branch
      %3040 = sbr.rel (%p3038) target = $region68
    $region67: #{bottleneck_forward.3} parent=5 // pred_region
      %s3041 = ssub.s32 %s16, 2
      // Predicated region
      $region69: #{bottleneck_forward.3} parent=67 // pred_check
        %p3042 = pneg %p280
      $region70: #{bottleneck_forward.3} parent=67 // pred_check_branch
        %3044 = sbr.rel (%p3042) target = $region72
      $region71: #{bottleneck_forward.3} parent=67 // pred_region
        %p3045 = scmp.lt.s32.totalorder %s22, 1
        %s3046 = scalar_select %p3045, %s22, 1
        %s3047 = smul.addr %s3046, 16
        %s3048 = smul.addr %s3047, 4
        %s3049 = scalar_lea.vmem %s10, %s3048
      $region72: #{bottleneck_forward.3} parent=67 // pred_fallthru
        _
    $region68: #{bottleneck_forward.3} parent=5 // pred_fallthru
      _
  $region6: #{bottleneck_forward.3} parent=0 // loop_footer
    %s20 = sadd.s32 1, %s16
  $region7: #{bottleneck_forward.3} parent=0 // loop_footer_branch
    %15 = sbr.rel target = $region3
  $region8: #{bottleneck_forward.3} parent=0 // loop_exit
    _

</llo_original>
